<compile_context>
chip_gen: v7x
topology: tpu7x:2x2x1
jax: 0.10.0
libtpu: 0.0.40
codegen_flags: <defaults>
</compile_context>

<pallas_src>
import functools

import jax
import jax.numpy as jnp
from jax.experimental import pallas as pl
from jax.experimental.pallas import tpu as pltpu


def _round_up(x, m):
    return (x + m - 1) // m * m


# ------------------------------ fused kernel ------------------------------- #

def _ada_att_lstm_kernel(xfc_ref, hprev_ref, cprev_ref, *refs,
                         num_layers, rnn_size):
    """Fused AdaAtt_lstm step for one batch block.

    xfc: (Bb, E+R) bf16 = [xt | img_fc]   h_prev/c_prev: (NL, Bb, R) f32
    outputs: top_h (Bb, R), fake_region (Bb, R), h_new/c_new (NL, Bb, R)
    """
    R = rnn_size
    NL = num_layers
    it = iter(refs)

    # --- weights (bf16) / biases (f32); order must match the wrapper ---
    wv2h_w, wv2h_b = next(it), next(it)          # (E+R, 5R), (1, 5R)
    h2h_w, h2h_b = next(it), next(it)            # (NL, R, 5R), (NL, 1, 5R)
    if NL > 1:
        i2h_w, i2h_b = next(it), next(it)        # (NL-1, R, 5R), (NL-1, 1, 5R)
        r_i2h_w, r_i2h_b = next(it), next(it)    # (R, R), (1, R)
    else:
        r_wv2h_w, r_wv2h_b = next(it), next(it)  # (E+R, R), (1, R)
    r_h2h_w, r_h2h_b = next(it), next(it)        # (R, R), (1, R)

    # --- outputs ---
    top_ref, fake_ref, hnew_ref, cnew_ref = next(it), next(it), next(it), next(it)

    def dot(a_bf16, w_bf16):
        # bf16 MXU matmul, f32 accumulation.
        return jnp.dot(a_bf16, w_bf16, preferred_element_type=jnp.float32)

    def sigmoid(x):
        # tanh-form sigmoid: one EUP transcendental instead of exp + divide.
        return 0.5 * jnp.tanh(0.5 * x) + 0.5

    xfc = xfc_ref[...]                  # (Bb, E+R) bf16, already cast wrapper-side
    x_bf = None
    fake = None
    next_h = None
    for L in range(NL):                 # static unroll over layers
        prev_h = hprev_ref[L]           # (Bb, R) f32
        prev_c = cprev_ref[L]
        prev_h_bf = prev_h.astype(jnp.bfloat16)     # hoisted single cast

        if L == 0:
            # fused K=E+R contraction, pre-summed bias
            i2h = dot(xfc, wv2h_w[...]) + wv2h_b[...]
        else:
            # TODO(synk): dropout on x is identity here (eval mode).
            i2h = dot(x_bf, i2h_w[L - 1]) + i2h_b[L - 1]

        all_input_sums = i2h + dot(prev_h_bf, h2h_w[L]) + h2h_b[L]   # (Bb, 5R) f32

        # Gate slices are (8,128)-tile aligned when R % 128 == 0 -> free views.
        in_gate = sigmoid(all_input_sums[:, 0 * R:1 * R])
        forget_gate = sigmoid(all_input_sums[:, 1 * R:2 * R])
        out_gate = sigmoid(all_input_sums[:, 2 * R:3 * R])
        in_transform = jnp.maximum(all_input_sums[:, 3 * R:4 * R],
                                   all_input_sums[:, 4 * R:5 * R])   # maxout

        next_c = forget_gate * prev_c + in_gate * in_transform
        tanh_c = jnp.tanh(next_c)
        next_h = out_gate * tanh_c

        if L == NL - 1:
            if L == 0:
                r_i2h = dot(xfc, r_wv2h_w[...]) + r_wv2h_b[...]
            else:
                r_i2h = dot(x_bf, r_i2h_w[...]) + r_i2h_b[...]
            n5 = r_i2h + dot(prev_h_bf, r_h2h_w[...]) + r_h2h_b[...]
            fake = sigmoid(n5) * tanh_c

        hnew_ref[L] = next_h.astype(hnew_ref.dtype)
        cnew_ref[L] = next_c.astype(cnew_ref.dtype)
        x_bf = next_h.astype(jnp.bfloat16)

    # TODO(synk): dropout on top_h / fake_region is identity (eval mode).
    top_ref[...] = next_h.astype(top_ref.dtype)
    fake_ref[...] = fake.astype(fake_ref.dtype)


# --------------------------------- wrapper ---------------------------------- #

def ada_att_lstm_forward(packed, xt, img_fc, state, *, num_layers,
                         batch_block=None):
    """Mirrors AdaAtt_lstm.forward. Returns (top_h, fake_region, (h, c)).

    NOTE: the new state is written in place of the old one (input/output
    aliasing); callers must not reuse the old state arrays afterwards.
    """
    B, E = xt.shape
    R = img_fc.shape[-1]
    NL = num_layers
    h_prev, c_prev = state
    p = packed

    # XLA-side: K-concatenate [xt | img_fc] and cast activations to bf16 once.
    xfc = jnp.concatenate([xt, img_fc], axis=-1).astype(jnp.bfloat16)

    # Batch tile: fill the MXU M dimension (<=128 rows per step; whole batch if
    # it fits), pad ragged batches and slice the outputs back afterwards.
    if batch_block is None:
        batch_block = min(_round_up(B, 8), 128)
    Bb = batch_block
    assert Bb % 8 == 0, "batch block must be sublane-aligned (multiple of 8)"
    Bp = _round_up(B, Bb)
    if Bp != B:
        pad = Bp - B
        xfc = jnp.pad(xfc, ((0, pad), (0, 0)))
        h_prev = jnp.pad(h_prev, ((0, 0), (0, pad), (0, 0)))
        c_prev = jnp.pad(c_prev, ((0, 0), (0, pad), (0, 0)))

    weights = [p['wv2h_w'], p['wv2h_b'], p['h2h_w'], p['h2h_b']]
    if NL > 1:
        weights += [p['i2h_w'], p['i2h_b'], p['r_i2h_w'], p['r_i2h_b']]
    else:
        weights += [p['r_wv2h_w'], p['r_wv2h_b']]
    weights += [p['r_h2h_w'], p['r_h2h_b']]

    # Explicit (bounded) scoped-VMEM budget: weights + double-buffered activations.
    w_bytes = sum(int(w.size) * w.dtype.itemsize for w in weights)
    act_bytes = (Bb * (E + R) * 2                  # xfc (bf16)
                 + 4 * NL * Bb * R * 4             # h/c in + out (f32)
                 + 2 * Bb * R * 4)                 # top_h + fake (f32)
    vmem_limit = int(min(max(2 * (w_bytes + 2 * act_bytes), 16 * 2 ** 20),
                         64 * 2 ** 20))

    out_shape = (
        jax.ShapeDtypeStruct((Bp, R), jnp.float32),        # top_h
        jax.ShapeDtypeStruct((Bp, R), jnp.float32),        # fake_region
        jax.ShapeDtypeStruct((NL, Bp, R), jnp.float32),    # h_new
        jax.ShapeDtypeStruct((NL, Bp, R), jnp.float32),    # c_new
    )

    def build(single_buffer_weights):
        def full_spec(arr):
            nd = arr.ndim
            kwargs = {}
            if single_buffer_weights:
                # Grid-invariant weights: no double-buffering needed.
                kwargs['pipeline_mode'] = pl.Buffered(1)
            # Constant block index -> DMA'd once, VMEM-resident across steps.
            return pl.BlockSpec(arr.shape, lambda i, nd=nd: (0,) * nd, **kwargs)

        in_specs = [
            pl.BlockSpec((Bb, E + R), lambda i: (i, 0)),        # xfc
            pl.BlockSpec((NL, Bb, R), lambda i: (0, i, 0)),     # h_prev
            pl.BlockSpec((NL, Bb, R), lambda i: (0, i, 0)),     # c_prev
        ] + [full_spec(w) for w in weights]

        out_specs = (
            pl.BlockSpec((Bb, R), lambda i: (i, 0)),            # top_h
            pl.BlockSpec((Bb, R), lambda i: (i, 0)),            # fake_region
            pl.BlockSpec((NL, Bb, R), lambda i: (0, i, 0)),     # h_new
            pl.BlockSpec((NL, Bb, R), lambda i: (0, i, 0)),     # c_new
        )

        kern = functools.partial(_ada_att_lstm_kernel, num_layers=NL, rnn_size=R)
        return pl.pallas_call(
            kern,
            grid=(Bp // Bb,),
            in_specs=in_specs,
            out_specs=out_specs,
            out_shape=out_shape,
            # New state overwrites the old (no extra HBM copies).
            input_output_aliases={1: 2, 2: 3},
            compiler_params=pltpu.CompilerParams(
                # Batch blocks are independent -> shard across TCs (v7x megacore).
                dimension_semantics=("parallel",),
                vmem_limit_bytes=vmem_limit),
        )

    args = (xfc, h_prev, c_prev, *weights)
    try:
        top_h, fake, h_new, c_new = build(True)(*args)
    except Exception:
        # pipeline_mode=pl.Buffered(1) unsupported on this jax version ->
        # fall back to default (double-buffered) weight BlockSpecs.
        top_h, fake, h_new, c_new = build(False)(*args)

    if Bp != B:
        top_h, fake = top_h[:B], fake[:B]
        h_new, c_new = h_new[:, :B], c_new[:, :B]
    return top_h, fake, (h_new, c_new)


# --------------------------- params / packing / ref ------------------------- #

def _linear(key, din, dout, w_dtype):
    kw, kb = jax.random.split(key)
    w = (jax.random.normal(kw, (din, dout), jnp.float32) * 0.1).astype(w_dtype)
    b = jax.random.normal(kb, (1, dout), jnp.float32) * 0.1
    return w, b


def init_params(key, E, R, num_layers, w_dtype=jnp.bfloat16):
    """Base (PyTorch-like) parameters; weights stored (in, out)."""
    NL = num_layers
    keys = jax.random.split(key, 6 + 2 * NL)
    p = {}
    p['w2h_w'], p['w2h_b'] = _linear(keys[0], E, 5 * R, w_dtype)
    p['v2h_w'], p['v2h_b'] = _linear(keys[1], R, 5 * R, w_dtype)
    h2h = [_linear(keys[2 + L], R, 5 * R, w_dtype) for L in range(NL)]
    p['h2h_w'] = jnp.stack([w for w, _ in h2h], 0)
    p['h2h_b'] = jnp.stack([b for _, b in h2h], 0)
    if NL > 1:
        i2h = [_linear(keys[2 + NL + L], R, 5 * R, w_dtype)
               for L in range(NL - 1)]
        p['i2h_w'] = jnp.stack([w for w, _ in i2h], 0)
        p['i2h_b'] = jnp.stack([b for _, b in i2h], 0)
        p['r_i2h_w'], p['r_i2h_b'] = _linear(keys[-3], R, R, w_dtype)
    else:
        p['r_w2h_w'], p['r_w2h_b'] = _linear(keys[-4], E, R, w_dtype)
        p['r_v2h_w'], p['r_v2h_b'] = _linear(keys[-3], R, R, w_dtype)
    p['r_h2h_w'], p['r_h2h_b'] = _linear(keys[-2], R, R, w_dtype)
    return p


def pack_params(p, num_layers):
    """Kernel layout: layer-0 (and NL==1 r-path) weights stacked along K,
    paired biases pre-summed. Done once, XLA-side."""
    NL = num_layers
    q = {}
    q['wv2h_w'] = jnp.concatenate([p['w2h_w'], p['v2h_w']], axis=0)
    q['wv2h_b'] = p['w2h_b'] + p['v2h_b']
    q['h2h_w'], q['h2h_b'] = p['h2h_w'], p['h2h_b']
    if NL > 1:
        q['i2h_w'], q['i2h_b'] = p['i2h_w'], p['i2h_b']
        q['r_i2h_w'], q['r_i2h_b'] = p['r_i2h_w'], p['r_i2h_b']
    else:
        q['r_wv2h_w'] = jnp.concatenate([p['r_w2h_w'], p['r_v2h_w']], axis=0)
        q['r_wv2h_b'] = p['r_w2h_b'] + p['r_v2h_b']
    q['r_h2h_w'], q['r_h2h_b'] = p['r_h2h_w'], p['r_h2h_b']
    return q


def ada_att_lstm_ref(params, xt, img_fc, state, *, num_layers):
    """Pure-JAX reference on the base params (bf16 weights, f32 accumulate)."""
    p = params
    R = img_fc.shape[-1]

    def dot(a, w):
        return jnp.dot(a.astype(jnp.bfloat16), w,
                       preferred_element_type=jnp.float32)

    sigmoid = jax.nn.sigmoid
    h_prev, c_prev = state
    hs, cs = [], []
    x = xt
    fake = None
    for L in range(num_layers):
        ph, pc = h_prev[L], c_prev[L]
        if L == 0:
            i2h = (dot(xt, p['w2h_w']) + p['w2h_b']
                   + dot(img_fc, p['v2h_w']) + p['v2h_b'])
        else:
            i2h = dot(x, p['i2h_w'][L - 1]) + p['i2h_b'][L - 1]
        s = i2h + dot(ph, p['h2h_w'][L]) + p['h2h_b'][L]
        ig = sigmoid(s[:, :R])
        fg = sigmoid(s[:, R:2 * R])
        og = sigmoid(s[:, 2 * R:3 * R])
        it_ = jnp.maximum(s[:, 3 * R:4 * R], s[:, 4 * R:5 * R])
        nc = fg * pc + ig * it_
        tc = jnp.tanh(nc)
        nh = og * tc
        if L == num_layers - 1:
            if L == 0:
                ri = (dot(xt, p['r_w2h_w']) + p['r_w2h_b']
                      + dot(img_fc, p['r_v2h_w']) + p['r_v2h_b'])
            else:
                ri = dot(x, p['r_i2h_w']) + p['r_i2h_b']
            n5 = ri + dot(ph, p['r_h2h_w']) + p['r_h2h_b']
            fake = sigmoid(n5) * tc
        hs.append(nh)
        cs.append(nc)
        x = nh
    return x, fake, (jnp.stack(hs, 0), jnp.stack(cs, 0))


# ----------------------------------- main ----------------------------------- #

if __name__ == "__main__":
    # Small but lane-dense shapes: B multiple of 8 sublanes, E/R multiples of 128
    # so gate slices and all stores are full (8,128) tiles; E+R = 256 fills the
    # v6e/v7x MXU contraction depth for the fused layer-0 matmul.
    B, E, R = 16, 128, 128
    key = jax.random.PRNGKey(0)

    for NL in (2, 1):   # cover both module branches (r_i2h vs r_w2h/r_v2h)
        kp, kx, kf, kh, kc = jax.random.split(jax.random.fold_in(key, NL), 5)
        base = init_params(kp, E, R, NL)
        packed = pack_params(base, NL)
        xt = jax.random.normal(kx, (B, E), jnp.float32)
        img_fc = jax.random.normal(kf, (B, R), jnp.float32)
        state = (jax.random.normal(kh, (NL, B, R), jnp.float32),
                 jax.random.normal(kc, (NL, B, R), jnp.float32))

        # Run the pure-JAX reference FIRST: the pallas_call aliases the state
        # buffers in place, so old state must not be consumed afterwards.
        ref_top, ref_fake, (ref_h, ref_c) = ada_att_lstm_ref(
            base, xt, img_fc, state, num_layers=NL)
        jax.block_until_ready((ref_top, ref_fake, ref_h, ref_c))

        top_h, fake, (h_new, c_new) = ada_att_lstm_forward(
            packed, xt, img_fc, state, num_layers=NL)
        jax.block_until_ready((top_h, fake, h_new, c_new))

        for got, ref in [(top_h, ref_top), (fake, ref_fake),
                         (h_new, ref_h), (c_new, ref_c)]:
            assert jnp.allclose(got, ref, atol=3e-3, rtol=3e-3), \
                f"mismatch vs reference (num_layers={NL})"

    print("KERNEL_OK")
</pallas_src>

<mosaic_0001>
module attributes {stable_mosaic.version = 11 : i64} {
  func.func @_ada_att_lstm_kernel(%arg0: i32, %arg1: memref<16x256xbf16, #tpu.memory_space<vmem>>, %arg2: memref<2x16x128xf32, #tpu.memory_space<vmem>>, %arg3: memref<2x16x128xf32, #tpu.memory_space<vmem>>, %arg4: memref<256x640xbf16, #tpu.memory_space<vmem>>, %arg5: memref<1x640xf32, #tpu.memory_space<vmem>>, %arg6: memref<2x128x640xbf16, #tpu.memory_space<vmem>>, %arg7: memref<2x1x640xf32, #tpu.memory_space<vmem>>, %arg8: memref<1x128x640xbf16, #tpu.memory_space<vmem>>, %arg9: memref<1x1x640xf32, #tpu.memory_space<vmem>>, %arg10: memref<128x128xbf16, #tpu.memory_space<vmem>>, %arg11: memref<1x128xf32, #tpu.memory_space<vmem>>, %arg12: memref<128x128xbf16, #tpu.memory_space<vmem>>, %arg13: memref<1x128xf32, #tpu.memory_space<vmem>>, %arg14: memref<16x128xf32, #tpu.memory_space<vmem>>, %arg15: memref<16x128xf32, #tpu.memory_space<vmem>>, %arg16: memref<2x16x128xf32, #tpu.memory_space<vmem>>, %arg17: memref<2x16x128xf32, #tpu.memory_space<vmem>>) attributes {dimension_semantics = [#tpu.dimension_semantics<parallel>], iteration_bounds = array<i64: 1>, scalar_prefetch = 0 : i64, scratch_operands = 0 : i64, tpu.core_type = #tpu.core_type<tc>, window_params = [{transform_indices = @transform_0, window_bounds = array<i64: 16, 256>}, {transform_indices = @transform_1, window_bounds = array<i64: 2, 16, 128>}, {transform_indices = @transform_2, window_bounds = array<i64: 2, 16, 128>}, {pipeline_mode = #tpu.pipeline_mode<synchronous>, transform_indices = @transform_3, window_bounds = array<i64: 256, 640>}, {pipeline_mode = #tpu.pipeline_mode<synchronous>, transform_indices = @transform_4, window_bounds = array<i64: 1, 640>}, {pipeline_mode = #tpu.pipeline_mode<synchronous>, transform_indices = @transform_5, window_bounds = array<i64: 2, 128, 640>}, {pipeline_mode = #tpu.pipeline_mode<synchronous>, transform_indices = @transform_6, window_bounds = array<i64: 2, 1, 640>}, {pipeline_mode = #tpu.pipeline_mode<synchronous>, transform_indices = @transform_7, window_bounds = array<i64: 1, 128, 640>}, {pipeline_mode = #tpu.pipeline_mode<synchronous>, transform_indices = @transform_8, window_bounds = array<i64: 1, 1, 640>}, {pipeline_mode = #tpu.pipeline_mode<synchronous>, transform_indices = @transform_9, window_bounds = array<i64: 128, 128>}, {pipeline_mode = #tpu.pipeline_mode<synchronous>, transform_indices = @transform_10, window_bounds = array<i64: 1, 128>}, {pipeline_mode = #tpu.pipeline_mode<synchronous>, transform_indices = @transform_11, window_bounds = array<i64: 128, 128>}, {pipeline_mode = #tpu.pipeline_mode<synchronous>, transform_indices = @transform_12, window_bounds = array<i64: 1, 128>}, {transform_indices = @transform_13, window_bounds = array<i64: 16, 128>}, {transform_indices = @transform_14, window_bounds = array<i64: 16, 128>}, {transform_indices = @transform_15, window_bounds = array<i64: 2, 16, 128>}, {transform_indices = @transform_16, window_bounds = array<i64: 2, 16, 128>}]} {
    %c0 = arith.constant 0 : index
    %c0_0 = arith.constant 0 : index
    %0 = vector.load %arg1[%c0, %c0_0] : memref<16x256xbf16, #tpu.memory_space<vmem>>, vector<16x256xbf16>
    %c0_1 = arith.constant 0 : index
    %c0_2 = arith.constant 0 : index
    %c0_3 = arith.constant 0 : index
    %1 = vector.load %arg2[%c0_1, %c0_2, %c0_3] : memref<2x16x128xf32, #tpu.memory_space<vmem>>, vector<1x16x128xf32>
    %2 = vector.shape_cast %1 : vector<1x16x128xf32> to vector<16x128xf32>
    %c0_4 = arith.constant 0 : index
    %c0_5 = arith.constant 0 : index
    %c0_6 = arith.constant 0 : index
    %3 = vector.load %arg3[%c0_4, %c0_5, %c0_6] : memref<2x16x128xf32, #tpu.memory_space<vmem>>, vector<1x16x128xf32>
    %4 = vector.shape_cast %3 : vector<1x16x128xf32> to vector<16x128xf32>
    %5 = arith.truncf %2 : vector<16x128xf32> to vector<16x128xbf16>
    %c0_7 = arith.constant 0 : index
    %c0_8 = arith.constant 0 : index
    %6 = vector.load %arg4[%c0_7, %c0_8] : memref<256x640xbf16, #tpu.memory_space<vmem>>, vector<256x640xbf16>
    %cst = arith.constant dense<0.000000e+00> : vector<16x640xf32>
    %7 = tpu.matmul %0, %6, %cst {dimension_numbers = #tpu.dot_dimension_numbers<[1], [0], [0], [1], [0, 0, 1, 1], [], []>} : vector<16x256xbf16>, vector<256x640xbf16>, vector<16x640xf32> -> vector<16x640xf32>
    %c0_9 = arith.constant 0 : index
    %c0_10 = arith.constant 0 : index
    %8 = vector.load %arg5[%c0_9, %c0_10] : memref<1x640xf32, #tpu.memory_space<vmem>>, vector<1x640xf32>
    %9 = vector.broadcast %8 : vector<1x640xf32> to vector<16x640xf32>
    %10 = arith.addf %7, %9 : vector<16x640xf32>
    %c0_11 = arith.constant 0 : index
    %c0_12 = arith.constant 0 : index
    %c0_13 = arith.constant 0 : index
    %11 = vector.load %arg6[%c0_11, %c0_12, %c0_13] : memref<2x128x640xbf16, #tpu.memory_space<vmem>>, vector<1x128x640xbf16>
    %12 = vector.shape_cast %11 : vector<1x128x640xbf16> to vector<128x640xbf16>
    %cst_14 = arith.constant dense<0.000000e+00> : vector<16x640xf32>
    %13 = tpu.matmul %5, %12, %cst_14 {dimension_numbers = #tpu.dot_dimension_numbers<[1], [0], [0], [1], [0, 0, 1, 1], [], []>} : vector<16x128xbf16>, vector<128x640xbf16>, vector<16x640xf32> -> vector<16x640xf32>
    %14 = arith.addf %10, %13 : vector<16x640xf32>
    %c0_15 = arith.constant 0 : index
    %c0_16 = arith.constant 0 : index
    %c0_17 = arith.constant 0 : index
    %15 = vector.load %arg7[%c0_15, %c0_16, %c0_17] : memref<2x1x640xf32, #tpu.memory_space<vmem>>, vector<1x1x640xf32>
    %16 = vector.shape_cast %15 : vector<1x1x640xf32> to vector<1x640xf32>
    %17 = vector.broadcast %16 : vector<1x640xf32> to vector<16x640xf32>
    %18 = arith.addf %14, %17 : vector<16x640xf32>
    %19 = vector.extract_strided_slice %18 {offsets = [0, 0], sizes = [16, 128], strides = [1, 1]} : vector<16x640xf32> to vector<16x128xf32>
    %cst_18 = arith.constant 5.000000e-01 : f32
    %20 = vector.broadcast %cst_18 : f32 to vector<16x128xf32>
    %21 = arith.mulf %20, %19 : vector<16x128xf32>
    %22 = math.tanh %21 : vector<16x128xf32>
    %cst_19 = arith.constant 5.000000e-01 : f32
    %23 = vector.broadcast %cst_19 : f32 to vector<16x128xf32>
    %24 = arith.mulf %23, %22 : vector<16x128xf32>
    %cst_20 = arith.constant 5.000000e-01 : f32
    %25 = vector.broadcast %cst_20 : f32 to vector<16x128xf32>
    %26 = arith.addf %24, %25 : vector<16x128xf32>
    %27 = vector.extract_strided_slice %18 {offsets = [0, 128], sizes = [16, 128], strides = [1, 1]} : vector<16x640xf32> to vector<16x128xf32>
    %cst_21 = arith.constant 5.000000e-01 : f32
    %28 = vector.broadcast %cst_21 : f32 to vector<16x128xf32>
    %29 = arith.mulf %28, %27 : vector<16x128xf32>
    %30 = math.tanh %29 : vector<16x128xf32>
    %cst_22 = arith.constant 5.000000e-01 : f32
    %31 = vector.broadcast %cst_22 : f32 to vector<16x128xf32>
    %32 = arith.mulf %31, %30 : vector<16x128xf32>
    %cst_23 = arith.constant 5.000000e-01 : f32
    %33 = vector.broadcast %cst_23 : f32 to vector<16x128xf32>
    %34 = arith.addf %32, %33 : vector<16x128xf32>
    %35 = vector.extract_strided_slice %18 {offsets = [0, 256], sizes = [16, 128], strides = [1, 1]} : vector<16x640xf32> to vector<16x128xf32>
    %cst_24 = arith.constant 5.000000e-01 : f32
    %36 = vector.broadcast %cst_24 : f32 to vector<16x128xf32>
    %37 = arith.mulf %36, %35 : vector<16x128xf32>
    %38 = math.tanh %37 : vector<16x128xf32>
    %cst_25 = arith.constant 5.000000e-01 : f32
    %39 = vector.broadcast %cst_25 : f32 to vector<16x128xf32>
    %40 = arith.mulf %39, %38 : vector<16x128xf32>
    %cst_26 = arith.constant 5.000000e-01 : f32
    %41 = vector.broadcast %cst_26 : f32 to vector<16x128xf32>
    %42 = arith.addf %40, %41 : vector<16x128xf32>
    %43 = vector.extract_strided_slice %18 {offsets = [0, 384], sizes = [16, 128], strides = [1, 1]} : vector<16x640xf32> to vector<16x128xf32>
    %44 = vector.extract_strided_slice %18 {offsets = [0, 512], sizes = [16, 128], strides = [1, 1]} : vector<16x640xf32> to vector<16x128xf32>
    %45 = arith.maximumf %43, %44 : vector<16x128xf32>
    %46 = arith.mulf %34, %4 : vector<16x128xf32>
    %47 = arith.mulf %26, %45 : vector<16x128xf32>
    %48 = arith.addf %46, %47 : vector<16x128xf32>
    %49 = math.tanh %48 : vector<16x128xf32>
    %50 = arith.mulf %42, %49 : vector<16x128xf32>
    %c0_27 = arith.constant 0 : index
    %c0_28 = arith.constant 0 : index
    %c0_29 = arith.constant 0 : index
    %51 = vector.load %arg16[%c0_27, %c0_28, %c0_29] : memref<2x16x128xf32, #tpu.memory_space<vmem>>, vector<1x16x128xf32>
    %52 = vector.shape_cast %51 : vector<1x16x128xf32> to vector<16x128xf32>
    %53 = vector.shape_cast %50 : vector<16x128xf32> to vector<1x16x128xf32>
    tpu.vector_store %arg16[%c0_27, %c0_28, %c0_29], %53 {strides = array<i32>} : memref<2x16x128xf32, #tpu.memory_space<vmem>>, vector<1x16x128xf32>,
    %c0_30 = arith.constant 0 : index
    %c0_31 = arith.constant 0 : index
    %c0_32 = arith.constant 0 : index
    %54 = vector.load %arg17[%c0_30, %c0_31, %c0_32] : memref<2x16x128xf32, #tpu.memory_space<vmem>>, vector<1x16x128xf32>
    %55 = vector.shape_cast %54 : vector<1x16x128xf32> to vector<16x128xf32>
    %56 = vector.shape_cast %48 : vector<16x128xf32> to vector<1x16x128xf32>
    tpu.vector_store %arg17[%c0_30, %c0_31, %c0_32], %56 {strides = array<i32>} : memref<2x16x128xf32, #tpu.memory_space<vmem>>, vector<1x16x128xf32>,
    %57 = arith.truncf %50 : vector<16x128xf32> to vector<16x128xbf16>
    %c1 = arith.constant 1 : index
    %c0_33 = arith.constant 0 : index
    %c0_34 = arith.constant 0 : index
    %58 = vector.load %arg2[%c1, %c0_33, %c0_34] : memref<2x16x128xf32, #tpu.memory_space<vmem>>, vector<1x16x128xf32>
    %59 = vector.shape_cast %58 : vector<1x16x128xf32> to vector<16x128xf32>
    %c1_35 = arith.constant 1 : index
    %c0_36 = arith.constant 0 : index
    %c0_37 = arith.constant 0 : index
    %60 = vector.load %arg3[%c1_35, %c0_36, %c0_37] : memref<2x16x128xf32, #tpu.memory_space<vmem>>, vector<1x16x128xf32>
    %61 = vector.shape_cast %60 : vector<1x16x128xf32> to vector<16x128xf32>
    %62 = arith.truncf %59 : vector<16x128xf32> to vector<16x128xbf16>
    %c0_38 = arith.constant 0 : index
    %c0_39 = arith.constant 0 : index
    %c0_40 = arith.constant 0 : index
    %63 = vector.load %arg8[%c0_38, %c0_39, %c0_40] : memref<1x128x640xbf16, #tpu.memory_space<vmem>>, vector<1x128x640xbf16>
    %64 = vector.shape_cast %63 : vector<1x128x640xbf16> to vector<128x640xbf16>
    %cst_41 = arith.constant dense<0.000000e+00> : vector<16x640xf32>
    %65 = tpu.matmul %57, %64, %cst_41 {dimension_numbers = #tpu.dot_dimension_numbers<[1], [0], [0], [1], [0, 0, 1, 1], [], []>} : vector<16x128xbf16>, vector<128x640xbf16>, vector<16x640xf32> -> vector<16x640xf32>
    %c0_42 = arith.constant 0 : index
    %c0_43 = arith.constant 0 : index
    %c0_44 = arith.constant 0 : index
    %66 = vector.load %arg9[%c0_42, %c0_43, %c0_44] : memref<1x1x640xf32, #tpu.memory_space<vmem>>, vector<1x1x640xf32>
    %67 = vector.shape_cast %66 : vector<1x1x640xf32> to vector<1x640xf32>
    %68 = vector.broadcast %67 : vector<1x640xf32> to vector<16x640xf32>
    %69 = arith.addf %65, %68 : vector<16x640xf32>
    %c1_45 = arith.constant 1 : index
    %c0_46 = arith.constant 0 : index
    %c0_47 = arith.constant 0 : index
    %70 = vector.load %arg6[%c1_45, %c0_46, %c0_47] : memref<2x128x640xbf16, #tpu.memory_space<vmem>>, vector<1x128x640xbf16>
    %71 = vector.shape_cast %70 : vector<1x128x640xbf16> to vector<128x640xbf16>
    %cst_48 = arith.constant dense<0.000000e+00> : vector<16x640xf32>
    %72 = tpu.matmul %62, %71, %cst_48 {dimension_numbers = #tpu.dot_dimension_numbers<[1], [0], [0], [1], [0, 0, 1, 1], [], []>} : vector<16x128xbf16>, vector<128x640xbf16>, vector<16x640xf32> -> vector<16x640xf32>
    %73 = arith.addf %69, %72 : vector<16x640xf32>
    %c1_49 = arith.constant 1 : index
    %c0_50 = arith.constant 0 : index
    %c0_51 = arith.constant 0 : index
    %74 = vector.load %arg7[%c1_49, %c0_50, %c0_51] : memref<2x1x640xf32, #tpu.memory_space<vmem>>, vector<1x1x640xf32>
    %75 = vector.shape_cast %74 : vector<1x1x640xf32> to vector<1x640xf32>
    %76 = vector.broadcast %75 : vector<1x640xf32> to vector<16x640xf32>
    %77 = arith.addf %73, %76 : vector<16x640xf32>
    %78 = vector.extract_strided_slice %77 {offsets = [0, 0], sizes = [16, 128], strides = [1, 1]} : vector<16x640xf32> to vector<16x128xf32>
    %cst_52 = arith.constant 5.000000e-01 : f32
    %79 = vector.broadcast %cst_52 : f32 to vector<16x128xf32>
    %80 = arith.mulf %79, %78 : vector<16x128xf32>
    %81 = math.tanh %80 : vector<16x128xf32>
    %cst_53 = arith.constant 5.000000e-01 : f32
    %82 = vector.broadcast %cst_53 : f32 to vector<16x128xf32>
    %83 = arith.mulf %82, %81 : vector<16x128xf32>
    %cst_54 = arith.constant 5.000000e-01 : f32
    %84 = vector.broadcast %cst_54 : f32 to vector<16x128xf32>
    %85 = arith.addf %83, %84 : vector<16x128xf32>
    %86 = vector.extract_strided_slice %77 {offsets = [0, 128], sizes = [16, 128], strides = [1, 1]} : vector<16x640xf32> to vector<16x128xf32>
    %cst_55 = arith.constant 5.000000e-01 : f32
    %87 = vector.broadcast %cst_55 : f32 to vector<16x128xf32>
    %88 = arith.mulf %87, %86 : vector<16x128xf32>
    %89 = math.tanh %88 : vector<16x128xf32>
    %cst_56 = arith.constant 5.000000e-01 : f32
    %90 = vector.broadcast %cst_56 : f32 to vector<16x128xf32>
    %91 = arith.mulf %90, %89 : vector<16x128xf32>
    %cst_57 = arith.constant 5.000000e-01 : f32
    %92 = vector.broadcast %cst_57 : f32 to vector<16x128xf32>
    %93 = arith.addf %91, %92 : vector<16x128xf32>
    %94 = vector.extract_strided_slice %77 {offsets = [0, 256], sizes = [16, 128], strides = [1, 1]} : vector<16x640xf32> to vector<16x128xf32>
    %cst_58 = arith.constant 5.000000e-01 : f32
    %95 = vector.broadcast %cst_58 : f32 to vector<16x128xf32>
    %96 = arith.mulf %95, %94 : vector<16x128xf32>
    %97 = math.tanh %96 : vector<16x128xf32>
    %cst_59 = arith.constant 5.000000e-01 : f32
    %98 = vector.broadcast %cst_59 : f32 to vector<16x128xf32>
    %99 = arith.mulf %98, %97 : vector<16x128xf32>
    %cst_60 = arith.constant 5.000000e-01 : f32
    %100 = vector.broadcast %cst_60 : f32 to vector<16x128xf32>
    %101 = arith.addf %99, %100 : vector<16x128xf32>
    %102 = vector.extract_strided_slice %77 {offsets = [0, 384], sizes = [16, 128], strides = [1, 1]} : vector<16x640xf32> to vector<16x128xf32>
    %103 = vector.extract_strided_slice %77 {offsets = [0, 512], sizes = [16, 128], strides = [1, 1]} : vector<16x640xf32> to vector<16x128xf32>
    %104 = arith.maximumf %102, %103 : vector<16x128xf32>
    %105 = arith.mulf %93, %61 : vector<16x128xf32>
    %106 = arith.mulf %85, %104 : vector<16x128xf32>
    %107 = arith.addf %105, %106 : vector<16x128xf32>
    %108 = math.tanh %107 : vector<16x128xf32>
    %109 = arith.mulf %101, %108 : vector<16x128xf32>
    %c0_61 = arith.constant 0 : index
    %c0_62 = arith.constant 0 : index
    %110 = vector.load %arg10[%c0_61, %c0_62] : memref<128x128xbf16, #tpu.memory_space<vmem>>, vector<128x128xbf16>
    %cst_63 = arith.constant dense<0.000000e+00> : vector<16x128xf32>
    %111 = tpu.matmul %57, %110, %cst_63 {dimension_numbers = #tpu.dot_dimension_numbers<[1], [0], [0], [1], [0, 0, 1, 1], [], []>} : vector<16x128xbf16>, vector<128x128xbf16>, vector<16x128xf32> -> vector<16x128xf32>
    %c0_64 = arith.constant 0 : index
    %c0_65 = arith.constant 0 : index
    %112 = vector.load %arg11[%c0_64, %c0_65] : memref<1x128xf32, #tpu.memory_space<vmem>>, vector<1x128xf32>
    %113 = vector.broadcast %112 : vector<1x128xf32> to vector<16x128xf32>
    %114 = arith.addf %111, %113 : vector<16x128xf32>
    %c0_66 = arith.constant 0 : index
    %c0_67 = arith.constant 0 : index
    %115 = vector.load %arg12[%c0_66, %c0_67] : memref<128x128xbf16, #tpu.memory_space<vmem>>, vector<128x128xbf16>
    %cst_68 = arith.constant dense<0.000000e+00> : vector<16x128xf32>
    %116 = tpu.matmul %62, %115, %cst_68 {dimension_numbers = #tpu.dot_dimension_numbers<[1], [0], [0], [1], [0, 0, 1, 1], [], []>} : vector<16x128xbf16>, vector<128x128xbf16>, vector<16x128xf32> -> vector<16x128xf32>
    %117 = arith.addf %114, %116 : vector<16x128xf32>
    %c0_69 = arith.constant 0 : index
    %c0_70 = arith.constant 0 : index
    %118 = vector.load %arg13[%c0_69, %c0_70] : memref<1x128xf32, #tpu.memory_space<vmem>>, vector<1x128xf32>
    %119 = vector.broadcast %118 : vector<1x128xf32> to vector<16x128xf32>
    %120 = arith.addf %117, %119 : vector<16x128xf32>
    %cst_71 = arith.constant 5.000000e-01 : f32
    %121 = vector.broadcast %cst_71 : f32 to vector<16x128xf32>
    %122 = arith.mulf %121, %120 : vector<16x128xf32>
    %123 = math.tanh %122 : vector<16x128xf32>
    %cst_72 = arith.constant 5.000000e-01 : f32
    %124 = vector.broadcast %cst_72 : f32 to vector<16x128xf32>
    %125 = arith.mulf %124, %123 : vector<16x128xf32>
    %cst_73 = arith.constant 5.000000e-01 : f32
    %126 = vector.broadcast %cst_73 : f32 to vector<16x128xf32>
    %127 = arith.addf %125, %126 : vector<16x128xf32>
    %128 = arith.mulf %127, %108 : vector<16x128xf32>
    %c1_74 = arith.constant 1 : index
    %c0_75 = arith.constant 0 : index
    %c0_76 = arith.constant 0 : index
    %129 = vector.load %arg16[%c1_74, %c0_75, %c0_76] : memref<2x16x128xf32, #tpu.memory_space<vmem>>, vector<1x16x128xf32>
    %130 = vector.shape_cast %129 : vector<1x16x128xf32> to vector<16x128xf32>
    %131 = vector.shape_cast %109 : vector<16x128xf32> to vector<1x16x128xf32>
    tpu.vector_store %arg16[%c1_74, %c0_75, %c0_76], %131 {strides = array<i32>} : memref<2x16x128xf32, #tpu.memory_space<vmem>>, vector<1x16x128xf32>,
    %c1_77 = arith.constant 1 : index
    %c0_78 = arith.constant 0 : index
    %c0_79 = arith.constant 0 : index
    %132 = vector.load %arg17[%c1_77, %c0_78, %c0_79] : memref<2x16x128xf32, #tpu.memory_space<vmem>>, vector<1x16x128xf32>
    %133 = vector.shape_cast %132 : vector<1x16x128xf32> to vector<16x128xf32>
    %134 = vector.shape_cast %107 : vector<16x128xf32> to vector<1x16x128xf32>
    tpu.vector_store %arg17[%c1_77, %c0_78, %c0_79], %134 {strides = array<i32>} : memref<2x16x128xf32, #tpu.memory_space<vmem>>, vector<1x16x128xf32>,
    %c0_80 = arith.constant 0 : index
    %c0_81 = arith.constant 0 : index
    %135 = vector.load %arg14[%c0_80, %c0_81] : memref<16x128xf32, #tpu.memory_space<vmem>>, vector<16x128xf32>
    tpu.vector_store %arg14[%c0_80, %c0_81], %109 {strides = array<i32>} : memref<16x128xf32, #tpu.memory_space<vmem>>, vector<16x128xf32>,
    %c0_82 = arith.constant 0 : index
    %c0_83 = arith.constant 0 : index
    %136 = vector.load %arg15[%c0_82, %c0_83] : memref<16x128xf32, #tpu.memory_space<vmem>>, vector<16x128xf32>
    tpu.vector_store %arg15[%c0_82, %c0_83], %128 {strides = array<i32>} : memref<16x128xf32, #tpu.memory_space<vmem>>, vector<16x128xf32>,
    return
  }
  func.func @transform_0(%arg0: i32) -> (i32, i32) {
    %c0_i32 = arith.constant 0 : i32
    %c0_i32_0 = arith.constant 0 : i32
    return %arg0, %c0_i32 : i32, i32
  }
  func.func @transform_1(%arg0: i32) -> (i32, i32, i32) {
    %c0_i32 = arith.constant 0 : i32
    %c0_i32_0 = arith.constant 0 : i32
    %c0_i32_1 = arith.constant 0 : i32
    return %c0_i32, %arg0, %c0_i32_0 : i32, i32, i32
  }
  func.func @transform_2(%arg0: i32) -> (i32, i32, i32) {
    %c0_i32 = arith.constant 0 : i32
    %c0_i32_0 = arith.constant 0 : i32
    %c0_i32_1 = arith.constant 0 : i32
    return %c0_i32, %arg0, %c0_i32_0 : i32, i32, i32
  }
  func.func @transform_3(%arg0: i32) -> (i32, i32) {
    %c0_i32 = arith.constant 0 : i32
    %c0_i32_0 = arith.constant 0 : i32
    %c0_i32_1 = arith.constant 0 : i32
    return %c0_i32, %c0_i32_0 : i32, i32
  }
  func.func @transform_4(%arg0: i32) -> (i32, i32) {
    %c0_i32 = arith.constant 0 : i32
    %c0_i32_0 = arith.constant 0 : i32
    %c0_i32_1 = arith.constant 0 : i32
    return %c0_i32, %c0_i32_0 : i32, i32
  }
  func.func @transform_5(%arg0: i32) -> (i32, i32, i32) {
    %c0_i32 = arith.constant 0 : i32
    %c0_i32_0 = arith.constant 0 : i32
    %c0_i32_1 = arith.constant 0 : i32
    %c0_i32_2 = arith.constant 0 : i32
    return %c0_i32, %c0_i32_0, %c0_i32_1 : i32, i32, i32
  }
  func.func @transform_6(%arg0: i32) -> (i32, i32, i32) {
    %c0_i32 = arith.constant 0 : i32
    %c0_i32_0 = arith.constant 0 : i32
    %c0_i32_1 = arith.constant 0 : i32
    %c0_i32_2 = arith.constant 0 : i32
    return %c0_i32, %c0_i32_0, %c0_i32_1 : i32, i32, i32
  }
  func.func @transform_7(%arg0: i32) -> (i32, i32, i32) {
    %c0_i32 = arith.constant 0 : i32
    %c0_i32_0 = arith.constant 0 : i32
    %c0_i32_1 = arith.constant 0 : i32
    %c0_i32_2 = arith.constant 0 : i32
    return %c0_i32, %c0_i32_0, %c0_i32_1 : i32, i32, i32
  }
  func.func @transform_8(%arg0: i32) -> (i32, i32, i32) {
    %c0_i32 = arith.constant 0 : i32
    %c0_i32_0 = arith.constant 0 : i32
    %c0_i32_1 = arith.constant 0 : i32
    %c0_i32_2 = arith.constant 0 : i32
    return %c0_i32, %c0_i32_0, %c0_i32_1 : i32, i32, i32
  }
  func.func @transform_9(%arg0: i32) -> (i32, i32) {
    %c0_i32 = arith.constant 0 : i32
    %c0_i32_0 = arith.constant 0 : i32
    %c0_i32_1 = arith.constant 0 : i32
    return %c0_i32, %c0_i32_0 : i32, i32
  }
  func.func @transform_10(%arg0: i32) -> (i32, i32) {
    %c0_i32 = arith.constant 0 : i32
    %c0_i32_0 = arith.constant 0 : i32
    %c0_i32_1 = arith.constant 0 : i32
    return %c0_i32, %c0_i32_0 : i32, i32
  }
  func.func @transform_11(%arg0: i32) -> (i32, i32) {
    %c0_i32 = arith.constant 0 : i32
    %c0_i32_0 = arith.constant 0 : i32
    %c0_i32_1 = arith.constant 0 : i32
    return %c0_i32, %c0_i32_0 : i32, i32
  }
  func.func @transform_12(%arg0: i32) -> (i32, i32) {
    %c0_i32 = arith.constant 0 : i32
    %c0_i32_0 = arith.constant 0 : i32
    %c0_i32_1 = arith.constant 0 : i32
    return %c0_i32, %c0_i32_0 : i32, i32
  }
  func.func @transform_13(%arg0: i32) -> (i32, i32) {
    %c0_i32 = arith.constant 0 : i32
    %c0_i32_0 = arith.constant 0 : i32
    return %arg0, %c0_i32 : i32, i32
  }
  func.func @transform_14(%arg0: i32) -> (i32, i32) {
    %c0_i32 = arith.constant 0 : i32
    %c0_i32_0 = arith.constant 0 : i32
    return %arg0, %c0_i32 : i32, i32
  }
  func.func @transform_15(%arg0: i32) -> (i32, i32, i32) {
    %c0_i32 = arith.constant 0 : i32
    %c0_i32_0 = arith.constant 0 : i32
    %c0_i32_1 = arith.constant 0 : i32
    return %c0_i32, %arg0, %c0_i32_0 : i32, i32, i32
  }
  func.func @transform_16(%arg0: i32) -> (i32, i32, i32) {
    %c0_i32 = arith.constant 0 : i32
    %c0_i32_0 = arith.constant 0 : i32
    %c0_i32_1 = arith.constant 0 : i32
    return %c0_i32, %arg0, %c0_i32_0 : i32, i32, i32
  }
}

module attributes {stable_mosaic.version = 11 : i64} {
  func.func @_ada_att_lstm_kernel(%arg0: i32, %arg1: memref<16x256xbf16, #tpu.memory_space<vmem>>, %arg2: memref<2x16x128xf32, #tpu.memory_space<vmem>>, %arg3: memref<2x16x128xf32, #tpu.memory_space<vmem>>, %arg4: memref<256x640xbf16, #tpu.memory_space<vmem>>, %arg5: memref<1x640xf32, #tpu.memory_space<vmem>>, %arg6: memref<2x128x640xbf16, #tpu.memory_space<vmem>>, %arg7: memref<2x1x640xf32, #tpu.memory_space<vmem>>, %arg8: memref<1x128x640xbf16, #tpu.memory_space<vmem>>, %arg9: memref<1x1x640xf32, #tpu.memory_space<vmem>>, %arg10: memref<128x128xbf16, #tpu.memory_space<vmem>>, %arg11: memref<1x128xf32, #tpu.memory_space<vmem>>, %arg12: memref<128x128xbf16, #tpu.memory_space<vmem>>, %arg13: memref<1x128xf32, #tpu.memory_space<vmem>>, %arg14: memref<16x128xf32, #tpu.memory_space<vmem>>, %arg15: memref<16x128xf32, #tpu.memory_space<vmem>>, %arg16: memref<2x16x128xf32, #tpu.memory_space<vmem>>, %arg17: memref<2x16x128xf32, #tpu.memory_space<vmem>>) attributes {dimension_semantics = [#tpu.dimension_semantics<parallel>], iteration_bounds = array<i64: 1>, scalar_prefetch = 0 : i64, scratch_operands = 0 : i64, tpu.core_type = #tpu.core_type<tc>, window_params = [{transform_indices = @transform_0, window_bounds = array<i64: 16, 256>}, {transform_indices = @transform_1, window_bounds = array<i64: 2, 16, 128>}, {transform_indices = @transform_2, window_bounds = array<i64: 2, 16, 128>}, {pipeline_mode = #tpu.pipeline_mode<synchronous>, transform_indices = @transform_3, window_bounds = array<i64: 256, 640>}, {pipeline_mode = #tpu.pipeline_mode<synchronous>, transform_indices = @transform_4, window_bounds = array<i64: 1, 640>}, {pipeline_mode = #tpu.pipeline_mode<synchronous>, transform_indices = @transform_5, window_bounds = array<i64: 2, 128, 640>}, {pipeline_mode = #tpu.pipeline_mode<synchronous>, transform_indices = @transform_6, window_bounds = array<i64: 2, 1, 640>}, {pipeline_mode = #tpu.pipeline_mode<synchronous>, transform_indices = @transform_7, window_bounds = array<i64: 1, 128, 640>}, {pipeline_mode = #tpu.pipeline_mode<synchronous>, transform_indices = @transform_8, window_bounds = array<i64: 1, 1, 640>}, {pipeline_mode = #tpu.pipeline_mode<synchronous>, transform_indices = @transform_9, window_bounds = array<i64: 128, 128>}, {pipeline_mode = #tpu.pipeline_mode<synchronous>, transform_indices = @transform_10, window_bounds = array<i64: 1, 128>}, {pipeline_mode = #tpu.pipeline_mode<synchronous>, transform_indices = @transform_11, window_bounds = array<i64: 128, 128>}, {pipeline_mode = #tpu.pipeline_mode<synchronous>, transform_indices = @transform_12, window_bounds = array<i64: 1, 128>}, {transform_indices = @transform_13, window_bounds = array<i64: 16, 128>}, {transform_indices = @transform_14, window_bounds = array<i64: 16, 128>}, {transform_indices = @transform_15, window_bounds = array<i64: 2, 16, 128>}, {transform_indices = @transform_16, window_bounds = array<i64: 2, 16, 128>}]} {
    %c0 = arith.constant 0 : index
    %c0_0 = arith.constant 0 : index
    %0 = vector.load %arg1[%c0, %c0_0] : memref<16x256xbf16, #tpu.memory_space<vmem>>, vector<16x256xbf16>
    %c0_1 = arith.constant 0 : index
    %c0_2 = arith.constant 0 : index
    %c0_3 = arith.constant 0 : index
    %1 = vector.load %arg2[%c0_1, %c0_2, %c0_3] : memref<2x16x128xf32, #tpu.memory_space<vmem>>, vector<1x16x128xf32>
    %2 = vector.shape_cast %1 : vector<1x16x128xf32> to vector<16x128xf32>
    %c0_4 = arith.constant 0 : index
    %c0_5 = arith.constant 0 : index
    %c0_6 = arith.constant 0 : index
    %3 = vector.load %arg3[%c0_4, %c0_5, %c0_6] : memref<2x16x128xf32, #tpu.memory_space<vmem>>, vector<1x16x128xf32>
    %4 = vector.shape_cast %3 : vector<1x16x128xf32> to vector<16x128xf32>
    %5 = arith.truncf %2 : vector<16x128xf32> to vector<16x128xbf16>
    %c0_7 = arith.constant 0 : index
    %c0_8 = arith.constant 0 : index
    %6 = vector.load %arg4[%c0_7, %c0_8] : memref<256x640xbf16, #tpu.memory_space<vmem>>, vector<256x640xbf16>
    %cst = arith.constant dense<0.000000e+00> : vector<16x640xf32>
    %7 = tpu.matmul %0, %6, %cst {dimension_numbers = #tpu.dot_dimension_numbers<[1], [0], [0], [1], [0, 0, 1, 1], [], []>} : vector<16x256xbf16>, vector<256x640xbf16>, vector<16x640xf32> -> vector<16x640xf32>
    %c0_9 = arith.constant 0 : index
    %c0_10 = arith.constant 0 : index
    %8 = vector.load %arg5[%c0_9, %c0_10] : memref<1x640xf32, #tpu.memory_space<vmem>>, vector<1x640xf32>
    %9 = vector.broadcast %8 : vector<1x640xf32> to vector<16x640xf32>
    %10 = arith.addf %7, %9 : vector<16x640xf32>
    %c0_11 = arith.constant 0 : index
    %c0_12 = arith.constant 0 : index
    %c0_13 = arith.constant 0 : index
    %11 = vector.load %arg6[%c0_11, %c0_12, %c0_13] : memref<2x128x640xbf16, #tpu.memory_space<vmem>>, vector<1x128x640xbf16>
    %12 = vector.shape_cast %11 : vector<1x128x640xbf16> to vector<128x640xbf16>
    %cst_14 = arith.constant dense<0.000000e+00> : vector<16x640xf32>
    %13 = tpu.matmul %5, %12, %cst_14 {dimension_numbers = #tpu.dot_dimension_numbers<[1], [0], [0], [1], [0, 0, 1, 1], [], []>} : vector<16x128xbf16>, vector<128x640xbf16>, vector<16x640xf32> -> vector<16x640xf32>
    %14 = arith.addf %10, %13 : vector<16x640xf32>
    %c0_15 = arith.constant 0 : index
    %c0_16 = arith.constant 0 : index
    %c0_17 = arith.constant 0 : index
    %15 = vector.load %arg7[%c0_15, %c0_16, %c0_17] : memref<2x1x640xf32, #tpu.memory_space<vmem>>, vector<1x1x640xf32>
    %16 = vector.shape_cast %15 : vector<1x1x640xf32> to vector<1x640xf32>
    %17 = vector.broadcast %16 : vector<1x640xf32> to vector<16x640xf32>
    %18 = arith.addf %14, %17 : vector<16x640xf32>
    %19 = vector.extract_strided_slice %18 {offsets = [0, 0], sizes = [16, 128], strides = [1, 1]} : vector<16x640xf32> to vector<16x128xf32>
    %cst_18 = arith.constant 5.000000e-01 : f32
    %20 = vector.broadcast %cst_18 : f32 to vector<16x128xf32>
    %21 = arith.mulf %20, %19 : vector<16x128xf32>
    %22 = math.tanh %21 : vector<16x128xf32>
    %cst_19 = arith.constant 5.000000e-01 : f32
    %23 = vector.broadcast %cst_19 : f32 to vector<16x128xf32>
    %24 = arith.mulf %23, %22 : vector<16x128xf32>
    %cst_20 = arith.constant 5.000000e-01 : f32
    %25 = vector.broadcast %cst_20 : f32 to vector<16x128xf32>
    %26 = arith.addf %24, %25 : vector<16x128xf32>
    %27 = vector.extract_strided_slice %18 {offsets = [0, 128], sizes = [16, 128], strides = [1, 1]} : vector<16x640xf32> to vector<16x128xf32>
    %cst_21 = arith.constant 5.000000e-01 : f32
    %28 = vector.broadcast %cst_21 : f32 to vector<16x128xf32>
    %29 = arith.mulf %28, %27 : vector<16x128xf32>
    %30 = math.tanh %29 : vector<16x128xf32>
    %cst_22 = arith.constant 5.000000e-01 : f32
    %31 = vector.broadcast %cst_22 : f32 to vector<16x128xf32>
    %32 = arith.mulf %31, %30 : vector<16x128xf32>
    %cst_23 = arith.constant 5.000000e-01 : f32
    %33 = vector.broadcast %cst_23 : f32 to vector<16x128xf32>
    %34 = arith.addf %32, %33 : vector<16x128xf32>
    %35 = vector.extract_strided_slice %18 {offsets = [0, 256], sizes = [16, 128], strides = [1, 1]} : vector<16x640xf32> to vector<16x128xf32>
    %cst_24 = arith.constant 5.000000e-01 : f32
    %36 = vector.broadcast %cst_24 : f32 to vector<16x128xf32>
    %37 = arith.mulf %36, %35 : vector<16x128xf32>
    %38 = math.tanh %37 : vector<16x128xf32>
    %cst_25 = arith.constant 5.000000e-01 : f32
    %39 = vector.broadcast %cst_25 : f32 to vector<16x128xf32>
    %40 = arith.mulf %39, %38 : vector<16x128xf32>
    %cst_26 = arith.constant 5.000000e-01 : f32
    %41 = vector.broadcast %cst_26 : f32 to vector<16x128xf32>
    %42 = arith.addf %40, %41 : vector<16x128xf32>
    %43 = vector.extract_strided_slice %18 {offsets = [0, 384], sizes = [16, 128], strides = [1, 1]} : vector<16x640xf32> to vector<16x128xf32>
    %44 = vector.extract_strided_slice %18 {offsets = [0, 512], sizes = [16, 128], strides = [1, 1]} : vector<16x640xf32> to vector<16x128xf32>
    %45 = arith.maximumf %43, %44 : vector<16x128xf32>
    %46 = arith.mulf %34, %4 : vector<16x128xf32>
    %47 = arith.mulf %26, %45 : vector<16x128xf32>
    %48 = arith.addf %46, %47 : vector<16x128xf32>
    %49 = math.tanh %48 : vector<16x128xf32>
    %50 = arith.mulf %42, %49 : vector<16x128xf32>
    %c0_27 = arith.constant 0 : index
    %c0_28 = arith.constant 0 : index
    %c0_29 = arith.constant 0 : index
    %51 = vector.load %arg16[%c0_27, %c0_28, %c0_29] : memref<2x16x128xf32, #tpu.memory_space<vmem>>, vector<1x16x128xf32>
    %52 = vector.shape_cast %51 : vector<1x16x128xf32> to vector<16x128xf32>
    %53 = vector.shape_cast %50 : vector<16x128xf32> to vector<1x16x128xf32>
    tpu.vector_store %arg16[%c0_27, %c0_28, %c0_29], %53 {strides = array<i32>} : memref<2x16x128xf32, #tpu.memory_space<vmem>>, vector<1x16x128xf32>,
    %c0_30 = arith.constant 0 : index
    %c0_31 = arith.constant 0 : index
    %c0_32 = arith.constant 0 : index
    %54 = vector.load %arg17[%c0_30, %c0_31, %c0_32] : memref<2x16x128xf32, #tpu.memory_space<vmem>>, vector<1x16x128xf32>
    %55 = vector.shape_cast %54 : vector<1x16x128xf32> to vector<16x128xf32>
    %56 = vector.shape_cast %48 : vector<16x128xf32> to vector<1x16x128xf32>
    tpu.vector_store %arg17[%c0_30, %c0_31, %c0_32], %56 {strides = array<i32>} : memref<2x16x128xf32, #tpu.memory_space<vmem>>, vector<1x16x128xf32>,
    %57 = arith.truncf %50 : vector<16x128xf32> to vector<16x128xbf16>
    %c1 = arith.constant 1 : index
    %c0_33 = arith.constant 0 : index
    %c0_34 = arith.constant 0 : index
    %58 = vector.load %arg2[%c1, %c0_33, %c0_34] : memref<2x16x128xf32, #tpu.memory_space<vmem>>, vector<1x16x128xf32>
    %59 = vector.shape_cast %58 : vector<1x16x128xf32> to vector<16x128xf32>
    %c1_35 = arith.constant 1 : index
    %c0_36 = arith.constant 0 : index
    %c0_37 = arith.constant 0 : index
    %60 = vector.load %arg3[%c1_35, %c0_36, %c0_37] : memref<2x16x128xf32, #tpu.memory_space<vmem>>, vector<1x16x128xf32>
    %61 = vector.shape_cast %60 : vector<1x16x128xf32> to vector<16x128xf32>
    %62 = arith.truncf %59 : vector<16x128xf32> to vector<16x128xbf16>
    %c0_38 = arith.constant 0 : index
    %c0_39 = arith.constant 0 : index
    %c0_40 = arith.constant 0 : index
    %63 = vector.load %arg8[%c0_38, %c0_39, %c0_40] : memref<1x128x640xbf16, #tpu.memory_space<vmem>>, vector<1x128x640xbf16>
    %64 = vector.shape_cast %63 : vector<1x128x640xbf16> to vector<128x640xbf16>
    %cst_41 = arith.constant dense<0.000000e+00> : vector<16x640xf32>
    %65 = tpu.matmul %57, %64, %cst_41 {dimension_numbers = #tpu.dot_dimension_numbers<[1], [0], [0], [1], [0, 0, 1, 1], [], []>} : vector<16x128xbf16>, vector<128x640xbf16>, vector<16x640xf32> -> vector<16x640xf32>
    %c0_42 = arith.constant 0 : index
    %c0_43 = arith.constant 0 : index
    %c0_44 = arith.constant 0 : index
    %66 = vector.load %arg9[%c0_42, %c0_43, %c0_44] : memref<1x1x640xf32, #tpu.memory_space<vmem>>, vector<1x1x640xf32>
    %67 = vector.shape_cast %66 : vector<1x1x640xf32> to vector<1x640xf32>
    %68 = vector.broadcast %67 : vector<1x640xf32> to vector<16x640xf32>
    %69 = arith.addf %65, %68 : vector<16x640xf32>
    %c1_45 = arith.constant 1 : index
    %c0_46 = arith.constant 0 : index
    %c0_47 = arith.constant 0 : index
    %70 = vector.load %arg6[%c1_45, %c0_46, %c0_47] : memref<2x128x640xbf16, #tpu.memory_space<vmem>>, vector<1x128x640xbf16>
    %71 = vector.shape_cast %70 : vector<1x128x640xbf16> to vector<128x640xbf16>
    %cst_48 = arith.constant dense<0.000000e+00> : vector<16x640xf32>
    %72 = tpu.matmul %62, %71, %cst_48 {dimension_numbers = #tpu.dot_dimension_numbers<[1], [0], [0], [1], [0, 0, 1, 1], [], []>} : vector<16x128xbf16>, vector<128x640xbf16>, vector<16x640xf32> -> vector<16x640xf32>
    %73 = arith.addf %69, %72 : vector<16x640xf32>
    %c1_49 = arith.constant 1 : index
    %c0_50 = arith.constant 0 : index
    %c0_51 = arith.constant 0 : index
    %74 = vector.load %arg7[%c1_49, %c0_50, %c0_51] : memref<2x1x640xf32, #tpu.memory_space<vmem>>, vector<1x1x640xf32>
    %75 = vector.shape_cast %74 : vector<1x1x640xf32> to vector<1x640xf32>
    %76 = vector.broadcast %75 : vector<1x640xf32> to vector<16x640xf32>
    %77 = arith.addf %73, %76 : vector<16x640xf32>
    %78 = vector.extract_strided_slice %77 {offsets = [0, 0], sizes = [16, 128], strides = [1, 1]} : vector<16x640xf32> to vector<16x128xf32>
    %cst_52 = arith.constant 5.000000e-01 : f32
    %79 = vector.broadcast %cst_52 : f32 to vector<16x128xf32>
    %80 = arith.mulf %79, %78 : vector<16x128xf32>
    %81 = math.tanh %80 : vector<16x128xf32>
    %cst_53 = arith.constant 5.000000e-01 : f32
    %82 = vector.broadcast %cst_53 : f32 to vector<16x128xf32>
    %83 = arith.mulf %82, %81 : vector<16x128xf32>
    %cst_54 = arith.constant 5.000000e-01 : f32
    %84 = vector.broadcast %cst_54 : f32 to vector<16x128xf32>
    %85 = arith.addf %83, %84 : vector<16x128xf32>
    %86 = vector.extract_strided_slice %77 {offsets = [0, 128], sizes = [16, 128], strides = [1, 1]} : vector<16x640xf32> to vector<16x128xf32>
    %cst_55 = arith.constant 5.000000e-01 : f32
    %87 = vector.broadcast %cst_55 : f32 to vector<16x128xf32>
    %88 = arith.mulf %87, %86 : vector<16x128xf32>
    %89 = math.tanh %88 : vector<16x128xf32>
    %cst_56 = arith.constant 5.000000e-01 : f32
    %90 = vector.broadcast %cst_56 : f32 to vector<16x128xf32>
    %91 = arith.mulf %90, %89 : vector<16x128xf32>
    %cst_57 = arith.constant 5.000000e-01 : f32
    %92 = vector.broadcast %cst_57 : f32 to vector<16x128xf32>
    %93 = arith.addf %91, %92 : vector<16x128xf32>
    %94 = vector.extract_strided_slice %77 {offsets = [0, 256], sizes = [16, 128], strides = [1, 1]} : vector<16x640xf32> to vector<16x128xf32>
    %cst_58 = arith.constant 5.000000e-01 : f32
    %95 = vector.broadcast %cst_58 : f32 to vector<16x128xf32>
    %96 = arith.mulf %95, %94 : vector<16x128xf32>
    %97 = math.tanh %96 : vector<16x128xf32>
    %cst_59 = arith.constant 5.000000e-01 : f32
    %98 = vector.broadcast %cst_59 : f32 to vector<16x128xf32>
    %99 = arith.mulf %98, %97 : vector<16x128xf32>
    %cst_60 = arith.constant 5.000000e-01 : f32
    %100 = vector.broadcast %cst_60 : f32 to vector<16x128xf32>
    %101 = arith.addf %99, %100 : vector<16x128xf32>
    %102 = vector.extract_strided_slice %77 {offsets = [0, 384], sizes = [16, 128], strides = [1, 1]} : vector<16x640xf32> to vector<16x128xf32>
    %103 = vector.extract_strided_slice %77 {offsets = [0, 512], sizes = [16, 128], strides = [1, 1]} : vector<16x640xf32> to vector<16x128xf32>
    %104 = arith.maximumf %102, %103 : vector<16x128xf32>
    %105 = arith.mulf %93, %61 : vector<16x128xf32>
    %106 = arith.mulf %85, %104 : vector<16x128xf32>
    %107 = arith.addf %105, %106 : vector<16x128xf32>
    %108 = math.tanh %107 : vector<16x128xf32>
    %109 = arith.mulf %101, %108 : vector<16x128xf32>
    %c0_61 = arith.constant 0 : index
    %c0_62 = arith.constant 0 : index
    %110 = vector.load %arg10[%c0_61, %c0_62] : memref<128x128xbf16, #tpu.memory_space<vmem>>, vector<128x128xbf16>
    %cst_63 = arith.constant dense<0.000000e+00> : vector<16x128xf32>
    %111 = tpu.matmul %57, %110, %cst_63 {dimension_numbers = #tpu.dot_dimension_numbers<[1], [0], [0], [1], [0, 0, 1, 1], [], []>} : vector<16x128xbf16>, vector<128x128xbf16>, vector<16x128xf32> -> vector<16x128xf32>
    %c0_64 = arith.constant 0 : index
    %c0_65 = arith.constant 0 : index
    %112 = vector.load %arg11[%c0_64, %c0_65] : memref<1x128xf32, #tpu.memory_space<vmem>>, vector<1x128xf32>
    %113 = vector.broadcast %112 : vector<1x128xf32> to vector<16x128xf32>
    %114 = arith.addf %111, %113 : vector<16x128xf32>
    %c0_66 = arith.constant 0 : index
    %c0_67 = arith.constant 0 : index
    %115 = vector.load %arg12[%c0_66, %c0_67] : memref<128x128xbf16, #tpu.memory_space<vmem>>, vector<128x128xbf16>
    %cst_68 = arith.constant dense<0.000000e+00> : vector<16x128xf32>
    %116 = tpu.matmul %62, %115, %cst_68 {dimension_numbers = #tpu.dot_dimension_numbers<[1], [0], [0], [1], [0, 0, 1, 1], [], []>} : vector<16x128xbf16>, vector<128x128xbf16>, vector<16x128xf32> -> vector<16x128xf32>
    %117 = arith.addf %114, %116 : vector<16x128xf32>
    %c0_69 = arith.constant 0 : index
    %c0_70 = arith.constant 0 : index
    %118 = vector.load %arg13[%c0_69, %c0_70] : memref<1x128xf32, #tpu.memory_space<vmem>>, vector<1x128xf32>
    %119 = vector.broadcast %118 : vector<1x128xf32> to vector<16x128xf32>
    %120 = arith.addf %117, %119 : vector<16x128xf32>
    %cst_71 = arith.constant 5.000000e-01 : f32
    %121 = vector.broadcast %cst_71 : f32 to vector<16x128xf32>
    %122 = arith.mulf %121, %120 : vector<16x128xf32>
    %123 = math.tanh %122 : vector<16x128xf32>
    %cst_72 = arith.constant 5.000000e-01 : f32
    %124 = vector.broadcast %cst_72 : f32 to vector<16x128xf32>
    %125 = arith.mulf %124, %123 : vector<16x128xf32>
    %cst_73 = arith.constant 5.000000e-01 : f32
    %126 = vector.broadcast %cst_73 : f32 to vector<16x128xf32>
    %127 = arith.addf %125, %126 : vector<16x128xf32>
    %128 = arith.mulf %127, %108 : vector<16x128xf32>
    %c1_74 = arith.constant 1 : index
    %c0_75 = arith.constant 0 : index
    %c0_76 = arith.constant 0 : index
    %129 = vector.load %arg16[%c1_74, %c0_75, %c0_76] : memref<2x16x128xf32, #tpu.memory_space<vmem>>, vector<1x16x128xf32>
    %130 = vector.shape_cast %129 : vector<1x16x128xf32> to vector<16x128xf32>
    %131 = vector.shape_cast %109 : vector<16x128xf32> to vector<1x16x128xf32>
    tpu.vector_store %arg16[%c1_74, %c0_75, %c0_76], %131 {strides = array<i32>} : memref<2x16x128xf32, #tpu.memory_space<vmem>>, vector<1x16x128xf32>,
    %c1_77 = arith.constant 1 : index
    %c0_78 = arith.constant 0 : index
    %c0_79 = arith.constant 0 : index
    %132 = vector.load %arg17[%c1_77, %c0_78, %c0_79] : memref<2x16x128xf32, #tpu.memory_space<vmem>>, vector<1x16x128xf32>
    %133 = vector.shape_cast %132 : vector<1x16x128xf32> to vector<16x128xf32>
    %134 = vector.shape_cast %107 : vector<16x128xf32> to vector<1x16x128xf32>
    tpu.vector_store %arg17[%c1_77, %c0_78, %c0_79], %134 {strides = array<i32>} : memref<2x16x128xf32, #tpu.memory_space<vmem>>, vector<1x16x128xf32>,
    %c0_80 = arith.constant 0 : index
    %c0_81 = arith.constant 0 : index
    %135 = vector.load %arg14[%c0_80, %c0_81] : memref<16x128xf32, #tpu.memory_space<vmem>>, vector<16x128xf32>
    tpu.vector_store %arg14[%c0_80, %c0_81], %109 {strides = array<i32>} : memref<16x128xf32, #tpu.memory_space<vmem>>, vector<16x128xf32>,
    %c0_82 = arith.constant 0 : index
    %c0_83 = arith.constant 0 : index
    %136 = vector.load %arg15[%c0_82, %c0_83] : memref<16x128xf32, #tpu.memory_space<vmem>>, vector<16x128xf32>
    tpu.vector_store %arg15[%c0_82, %c0_83], %128 {strides = array<i32>} : memref<16x128xf32, #tpu.memory_space<vmem>>, vector<16x128xf32>,
    return
  }
  func.func @transform_0(%arg0: i32) -> (i32, i32) {
    %c0_i32 = arith.constant 0 : i32
    %c0_i32_0 = arith.constant 0 : i32
    return %arg0, %c0_i32 : i32, i32
  }
  func.func @transform_1(%arg0: i32) -> (i32, i32, i32) {
    %c0_i32 = arith.constant 0 : i32
    %c0_i32_0 = arith.constant 0 : i32
    %c0_i32_1 = arith.constant 0 : i32
    return %c0_i32, %arg0, %c0_i32_0 : i32, i32, i32
  }
  func.func @transform_2(%arg0: i32) -> (i32, i32, i32) {
    %c0_i32 = arith.constant 0 : i32
    %c0_i32_0 = arith.constant 0 : i32
    %c0_i32_1 = arith.constant 0 : i32
    return %c0_i32, %arg0, %c0_i32_0 : i32, i32, i32
  }
  func.func @transform_3(%arg0: i32) -> (i32, i32) {
    %c0_i32 = arith.constant 0 : i32
    %c0_i32_0 = arith.constant 0 : i32
    %c0_i32_1 = arith.constant 0 : i32
    return %c0_i32, %c0_i32_0 : i32, i32
  }
  func.func @transform_4(%arg0: i32) -> (i32, i32) {
    %c0_i32 = arith.constant 0 : i32
    %c0_i32_0 = arith.constant 0 : i32
    %c0_i32_1 = arith.constant 0 : i32
    return %c0_i32, %c0_i32_0 : i32, i32
  }
  func.func @transform_5(%arg0: i32) -> (i32, i32, i32) {
    %c0_i32 = arith.constant 0 : i32
    %c0_i32_0 = arith.constant 0 : i32
    %c0_i32_1 = arith.constant 0 : i32
    %c0_i32_2 = arith.constant 0 : i32
    return %c0_i32, %c0_i32_0, %c0_i32_1 : i32, i32, i32
  }
  func.func @transform_6(%arg0: i32) -> (i32, i32, i32) {
    %c0_i32 = arith.constant 0 : i32
    %c0_i32_0 = arith.constant 0 : i32
    %c0_i32_1 = arith.constant 0 : i32
    %c0_i32_2 = arith.constant 0 : i32
    return %c0_i32, %c0_i32_0, %c0_i32_1 : i32, i32, i32
  }
  func.func @transform_7(%arg0: i32) -> (i32, i32, i32) {
    %c0_i32 = arith.constant 0 : i32
    %c0_i32_0 = arith.constant 0 : i32
    %c0_i32_1 = arith.constant 0 : i32
    %c0_i32_2 = arith.constant 0 : i32
    return %c0_i32, %c0_i32_0, %c0_i32_1 : i32, i32, i32
  }
  func.func @transform_8(%arg0: i32) -> (i32, i32, i32) {
    %c0_i32 = arith.constant 0 : i32
    %c0_i32_0 = arith.constant 0 : i32
    %c0_i32_1 = arith.constant 0 : i32
    %c0_i32_2 = arith.constant 0 : i32
    return %c0_i32, %c0_i32_0, %c0_i32_1 : i32, i32, i32
  }
  func.func @transform_9(%arg0: i32) -> (i32, i32) {
    %c0_i32 = arith.constant 0 : i32
    %c0_i32_0 = arith.constant 0 : i32
    %c0_i32_1 = arith.constant 0 : i32
    return %c0_i32, %c0_i32_0 : i32, i32
  }
  func.func @transform_10(%arg0: i32) -> (i32, i32) {
    %c0_i32 = arith.constant 0 : i32
    %c0_i32_0 = arith.constant 0 : i32
    %c0_i32_1 = arith.constant 0 : i32
    return %c0_i32, %c0_i32_0 : i32, i32
  }
  func.func @transform_11(%arg0: i32) -> (i32, i32) {
    %c0_i32 = arith.constant 0 : i32
    %c0_i32_0 = arith.constant 0 : i32
    %c0_i32_1 = arith.constant 0 : i32
    return %c0_i32, %c0_i32_0 : i32, i32
  }
  func.func @transform_12(%arg0: i32) -> (i32, i32) {
    %c0_i32 = arith.constant 0 : i32
    %c0_i32_0 = arith.constant 0 : i32
    %c0_i32_1 = arith.constant 0 : i32
    return %c0_i32, %c0_i32_0 : i32, i32
  }
  func.func @transform_13(%arg0: i32) -> (i32, i32) {
    %c0_i32 = arith.constant 0 : i32
    %c0_i32_0 = arith.constant 0 : i32
    return %arg0, %c0_i32 : i32, i32
  }
  func.func @transform_14(%arg0: i32) -> (i32, i32) {
    %c0_i32 = arith.constant 0 : i32
    %c0_i32_0 = arith.constant 0 : i32
    return %arg0, %c0_i32 : i32, i32
  }
  func.func @transform_15(%arg0: i32) -> (i32, i32, i32) {
    %c0_i32 = arith.constant 0 : i32
    %c0_i32_0 = arith.constant 0 : i32
    %c0_i32_1 = arith.constant 0 : i32
    return %c0_i32, %arg0, %c0_i32_0 : i32, i32, i32
  }
  func.func @transform_16(%arg0: i32) -> (i32, i32, i32) {
    %c0_i32 = arith.constant 0 : i32
    %c0_i32_0 = arith.constant 0 : i32
    %c0_i32_1 = arith.constant 0 : i32
    return %c0_i32, %arg0, %c0_i32_0 : i32, i32, i32
  }
}

</mosaic_0001>

<llo_original>
// kernel: tpu_custom_call.1
$region0: #{tpu_custom_call.1}
  #allocation0 [shape = 'u32[]', space=smem, size = 0x4, offset = 0x4, fixed_abs, tag = 'smem constant byte address 0x4 - core index']
  #allocation1 [shape = 'u32[144,128]{1,0:T(1,128)}', space=vmem, size = 0x12000, scoped, tag = 'internal scratch']
  %s0 = inlined_call_operand.hbm [shape: bf16[16,256], index: 0, kind: input, shape index: {}]
  %s1 = inlined_call_operand.hbm [shape: f32[2,16,128], index: 1, kind: input, shape index: {}, may-alias: {1,15}]
  %s2 = inlined_call_operand.hbm [shape: f32[2,16,128], index: 2, kind: input, shape index: {}, may-alias: {2,16}]
  %s3 = inlined_call_operand.hbm [shape: bf16[256,640], index: 3, kind: input, shape index: {}]
  %s4 = inlined_call_operand.vmem [shape: f32[1,640], index: 4, kind: input, shape index: {}]
  %s5 = inlined_call_operand.hbm [shape: bf16[2,128,640], index: 5, kind: input, shape index: {}]
  %s6 = inlined_call_operand.hbm [shape: f32[2,1,640], index: 6, kind: input, shape index: {}]
  %s7 = inlined_call_operand.hbm [shape: bf16[1,128,640], index: 7, kind: input, shape index: {}]
  %s8 = inlined_call_operand.hbm [shape: f32[1,1,640], index: 8, kind: input, shape index: {}]
  %s9 = inlined_call_operand.vmem [shape: bf16[128,128], index: 9, kind: input, shape index: {}]
  %s10 = inlined_call_operand.hbm [shape: f32[1,128], index: 10, kind: input, shape index: {}]
  %s11 = inlined_call_operand.vmem [shape: bf16[128,128], index: 11, kind: input, shape index: {}]
  %s12 = inlined_call_operand.hbm [shape: f32[1,128], index: 12, kind: input, shape index: {}]
  %s13 = inlined_call_operand.hbm [shape: f32[16,128], index: 13, kind: output, shape index: {0}]
  %s14 = inlined_call_operand.hbm [shape: f32[16,128], index: 14, kind: output, shape index: {1}]
  %s15 = inlined_call_operand.hbm [shape: f32[2,16,128], index: 15, kind: output, shape index: {2}, may-alias: {1,15}]
  %s16 = inlined_call_operand.hbm [shape: f32[2,16,128], index: 16, kind: output, shape index: {3}, may-alias: {2,16}]
  %17 = xla_tuple %s13, %s14, %s15, %s16
  %s18 = sld [smem:[#allocation0]]
  $region126: #{tpu_custom_call.1} parent=0
    _
  %s20 = ssub.s32 1, %s18
  %s21 = scalar_select 0, %s20, %s18
  $region1: #{tpu_custom_call.1} parent=0
    #allocation2 [shape = 'u8[8192]{0}', space=vmem, size = 0x2000, scoped, tag = 'input window, operand 0, single buffered']
    #allocation3 [shape = 's32[1]{0}', space=sflag, size = 0x4, scoped, tag = 'scoped memory for tpu_custom_call.1']
    #allocation4 [shape = 's32[1]{0}', space=sflag, size = 0x4, scoped, tag = 'scoped memory for tpu_custom_call.1']
    #allocation5 [shape = 'u8[16384]{0}', space=vmem, size = 0x4000, scoped, tag = 'input window, operand 1, single buffered']
    #allocation6 [shape = 's32[1]{0}', space=sflag, size = 0x4, scoped, tag = 'scoped memory for tpu_custom_call.1']
    #allocation7 [shape = 'u8[16384]{0}', space=vmem, size = 0x4000, scoped, tag = 'input window, operand 2, single buffered']
    #allocation8 [shape = 'u8[327680]{0}', space=vmem, size = 0x50000, scoped, tag = 'input window, operand 3, single buffered']
    #allocation9 [shape = 's32[1]{0}', space=sflag, size = 0x4, scoped, tag = 'scoped memory for tpu_custom_call.1']
    #allocation10 [shape = 'u8[327680]{0}', space=vmem, size = 0x50000, scoped, tag = 'input window, operand 5, single buffered']
    #allocation11 [shape = 'u8[5120]{0}', space=vmem, size = 0x1400, scoped, tag = 'input window, operand 6, single buffered']
    #allocation12 [shape = 's32[1]{0}', space=sflag, size = 0x4, scoped, tag = 'scoped memory for tpu_custom_call.1']
    #allocation13 [shape = 'u8[163840]{0}', space=vmem, size = 0x28000, scoped, tag = 'input window, operand 7, single buffered']
    #allocation14 [shape = 'u8[2560]{0}', space=vmem, size = 0xc00, scoped, tag = 'input window, operand 8, single buffered']
    #allocation15 [shape = 's32[1]{0}', space=sflag, size = 0x4, scoped, tag = 'scoped memory for tpu_custom_call.1']
    #allocation16 [shape = 'u8[512]{0}', space=vmem, size = 0x400, scoped, tag = 'input window, operand 10, single buffered']
    #allocation17 [shape = 'u8[512]{0}', space=vmem, size = 0x400, scoped, tag = 'input window, operand 12, single buffered']
    #allocation18 [shape = 's32[1]{0}', space=sflag, size = 0x4, scoped, tag = 'scoped memory for tpu_custom_call.1']
    #allocation19 [shape = 'u8[8192]{0}', space=vmem, size = 0x2000, scoped, tag = 'output window, operand 0, single buffered']
    #allocation20 [shape = 'u8[8192]{0}', space=vmem, size = 0x2000, scoped, tag = 'output window, operand 1, single buffered']
    #allocation21 [shape = 's32[1]{0}', space=sflag, size = 0x4, scoped, tag = 'scoped memory for tpu_custom_call.1']
    #allocation22 [shape = 'u8[16384]{0}', space=vmem, size = 0x4000, scoped, tag = 'output window, operand 2, single buffered']
    #allocation23 [shape = 'u8[16384]{0}', space=vmem, size = 0x4000, scoped, tag = 'output window, operand 3, single buffered']
    #allocation24 [shape = 's32[1]{0}', space=sflag, size = 0x4, scoped, tag = 'scoped memory for tpu_custom_call.1']
    %22 = vsyncpa [#allocation3], 0
    %23 = vsyncpa [#allocation6], 0
    %24 = vsyncpa [#allocation9], 0
    %25 = vsyncpa [#allocation12], 0
    %26 = vsyncpa [#allocation15], 0
    %27 = vsyncpa [#allocation18], 0
    %28 = vsyncpa [#allocation4], 0
    %29 = vsyncpa [#allocation21], 0
    %30 = vsyncpa [#allocation24], 0
    // Predicated region
    $region2: #{tpu_custom_call.1} parent=1 // pred_check
      _
    $region3: #{tpu_custom_call.1} parent=1 // pred_check_branch
      %32 = sbr.rel (0) target = $region5
    $region4: #{tpu_custom_call.1} parent=1 // pred_region
      %s34 = ssub.s32 256, 256
      %35 = vsyncadd [#allocation3], %s34
      %s36 = sshll.u32 [#allocation2], 4
      %s37 = int_to_ptr.vmem [resolvable:$true] %s36
      %42 = dma.hbm_to_vmem [thread:$0]  %s0, 256, %s37, [#allocation3], 128, 128, 8
    $region5: #{tpu_custom_call.1} parent=1 // pred_fallthru
      _
    // Predicated region
    $region6: #{tpu_custom_call.1} parent=1 // pred_check
      _
    $region7: #{tpu_custom_call.1} parent=1 // pred_check_branch
      %44 = sbr.rel (0) target = $region9
    $region8: #{tpu_custom_call.1} parent=1 // pred_region
      %s46 = ssub.s32 512, 512
      %47 = vsyncadd [#allocation6], %s46
      %s48 = sshll.u32 [#allocation5], 4
      %s49 = int_to_ptr.vmem [resolvable:$true] %s48
      %54 = dma.hbm_to_vmem [thread:$0]  %s1, 512, %s49, [#allocation6], 128, 128, 8
    $region9: #{tpu_custom_call.1} parent=1 // pred_fallthru
      _
    // Predicated region
    $region10: #{tpu_custom_call.1} parent=1 // pred_check
      _
    $region11: #{tpu_custom_call.1} parent=1 // pred_check_branch
      %56 = sbr.rel (0) target = $region13
    $region12: #{tpu_custom_call.1} parent=1 // pred_region
      %s58 = ssub.s32 512, 512
      %59 = vsyncadd [#allocation6], %s58
      %s60 = sshll.u32 [#allocation7], 4
      %s61 = int_to_ptr.vmem [resolvable:$true] %s60
      %66 = dma.hbm_to_vmem [thread:$0]  %s2, 512, %s61, [#allocation6], 128, 128, 8
    $region13: #{tpu_custom_call.1} parent=1 // pred_fallthru
      _
    // Predicated region
    $region14: #{tpu_custom_call.1} parent=1 // pred_check
      _
    $region15: #{tpu_custom_call.1} parent=1 // pred_check_branch
      %68 = sbr.rel (0) target = $region17
    $region16: #{tpu_custom_call.1} parent=1 // pred_region
      %s70 = ssub.s32 10240, 10240
      %71 = vsyncadd [#allocation9], %s70
      %s72 = sshll.u32 [#allocation8], 4
      %s73 = int_to_ptr.vmem [resolvable:$true] %s72
      %78 = dma.hbm_to_vmem [thread:$0]  %s3, 10240, %s73, [#allocation9], 320, 320, 20
    $region17: #{tpu_custom_call.1} parent=1 // pred_fallthru
      _
    // Predicated region
    $region18: #{tpu_custom_call.1} parent=1 // pred_check
      _
    $region19: #{tpu_custom_call.1} parent=1 // pred_check_branch
      %80 = sbr.rel (0) target = $region21
    $region20: #{tpu_custom_call.1} parent=1 // pred_region
      _
    $region21: #{tpu_custom_call.1} parent=1 // pred_fallthru
      _
    // Predicated region
    $region22: #{tpu_custom_call.1} parent=1 // pred_check
      _
    $region23: #{tpu_custom_call.1} parent=1 // pred_check_branch
      %82 = sbr.rel (0) target = $region25
    $region24: #{tpu_custom_call.1} parent=1 // pred_region
      %s84 = ssub.s32 10240, 10240
      %85 = vsyncadd [#allocation9], %s84
      %s86 = sshll.u32 [#allocation10], 4
      %s87 = int_to_ptr.vmem [resolvable:$true] %s86
      %92 = dma.hbm_to_vmem [thread:$0]  %s5, 10240, %s87, [#allocation9], 320, 320, 20
    $region25: #{tpu_custom_call.1} parent=1 // pred_fallthru
      _
    // Predicated region
    $region26: #{tpu_custom_call.1} parent=1 // pred_check
      _
    $region27: #{tpu_custom_call.1} parent=1 // pred_check_branch
      %94 = sbr.rel (0) target = $region29
    $region28: #{tpu_custom_call.1} parent=1 // pred_region
      %s96 = ssub.s32 160, 160
      %97 = vsyncadd [#allocation12], %s96
      %s98 = sshll.u32 [#allocation11], 4
      %s99 = int_to_ptr.vmem [resolvable:$true] %s98
      %104 = dma.hbm_to_vmem [thread:$0]  %s6, 160, %s99, [#allocation12], 80, 80, 5
    $region29: #{tpu_custom_call.1} parent=1 // pred_fallthru
      _
    // Predicated region
    $region30: #{tpu_custom_call.1} parent=1 // pred_check
      _
    $region31: #{tpu_custom_call.1} parent=1 // pred_check_branch
      %106 = sbr.rel (0) target = $region33
    $region32: #{tpu_custom_call.1} parent=1 // pred_region
      %s108 = ssub.s32 5120, 5120
      %109 = vsyncadd [#allocation12], %s108
      %s110 = sshll.u32 [#allocation13], 4
      %s111 = int_to_ptr.vmem [resolvable:$true] %s110
      %116 = dma.hbm_to_vmem [thread:$0]  %s7, 5120, %s111, [#allocation12], 320, 320, 20
    $region33: #{tpu_custom_call.1} parent=1 // pred_fallthru
      _
    // Predicated region
    $region34: #{tpu_custom_call.1} parent=1 // pred_check
      _
    $region35: #{tpu_custom_call.1} parent=1 // pred_check_branch
      %118 = sbr.rel (0) target = $region37
    $region36: #{tpu_custom_call.1} parent=1 // pred_region
      %s120 = ssub.s32 80, 80
      %121 = vsyncadd [#allocation15], %s120
      %s123 = sshll.u32 [#allocation14], 4
      %s124 = int_to_ptr.vmem [resolvable:$true] %s123
      %126 = dma.hbm_to_vmem [thread:$0]  %s8, 80, %s124, [#allocation15]
    $region37: #{tpu_custom_call.1} parent=1 // pred_fallthru
      _
    // Predicated region
    $region38: #{tpu_custom_call.1} parent=1 // pred_check
      _
    $region39: #{tpu_custom_call.1} parent=1 // pred_check_branch
      %128 = sbr.rel (0) target = $region41
    $region40: #{tpu_custom_call.1} parent=1 // pred_region
      _
    $region41: #{tpu_custom_call.1} parent=1 // pred_fallthru
      _
    // Predicated region
    $region42: #{tpu_custom_call.1} parent=1 // pred_check
      _
    $region43: #{tpu_custom_call.1} parent=1 // pred_check_branch
      %130 = sbr.rel (0) target = $region45
    $region44: #{tpu_custom_call.1} parent=1 // pred_region
      %s132 = ssub.s32 16, 16
      %133 = vsyncadd [#allocation15], %s132
      %s135 = sshll.u32 [#allocation16], 4
      %s136 = int_to_ptr.vmem [resolvable:$true] %s135
      %138 = dma.hbm_to_vmem [thread:$0]  %s10, 16, %s136, [#allocation15]
    $region45: #{tpu_custom_call.1} parent=1 // pred_fallthru
      _
    // Predicated region
    $region46: #{tpu_custom_call.1} parent=1 // pred_check
      _
    $region47: #{tpu_custom_call.1} parent=1 // pred_check_branch
      %140 = sbr.rel (0) target = $region49
    $region48: #{tpu_custom_call.1} parent=1 // pred_region
      _
    $region49: #{tpu_custom_call.1} parent=1 // pred_fallthru
      _
    // Predicated region
    $region50: #{tpu_custom_call.1} parent=1 // pred_check
      _
    $region51: #{tpu_custom_call.1} parent=1 // pred_check_branch
      %142 = sbr.rel (0) target = $region53
    $region52: #{tpu_custom_call.1} parent=1 // pred_region
      %s144 = ssub.s32 16, 16
      %145 = vsyncadd [#allocation18], %s144
      %s147 = sshll.u32 [#allocation17], 4
      %s148 = int_to_ptr.vmem [resolvable:$true] %s147
      %150 = dma.hbm_to_vmem [thread:$0]  %s12, 16, %s148, [#allocation18]
    $region53: #{tpu_custom_call.1} parent=1 // pred_fallthru
      _
    // Predicated region
    $region54: #{tpu_custom_call.1} parent=1 // pred_check
      _
    $region55: #{tpu_custom_call.1} parent=1 // pred_check_branch
      %152 = sbr.rel (0) target = $region57
    $region56: #{tpu_custom_call.1} parent=1 // pred_region
      %153 = dma.done [#allocation3], 256
    $region57: #{tpu_custom_call.1} parent=1 // pred_fallthru
      _
    // Predicated region
    $region58: #{tpu_custom_call.1} parent=1 // pred_check
      _
    $region59: #{tpu_custom_call.1} parent=1 // pred_check_branch
      %155 = sbr.rel (0) target = $region61
    $region60: #{tpu_custom_call.1} parent=1 // pred_region
      %156 = dma.done [#allocation6], 512
    $region61: #{tpu_custom_call.1} parent=1 // pred_fallthru
      _
    // Predicated region
    $region62: #{tpu_custom_call.1} parent=1 // pred_check
      _
    $region63: #{tpu_custom_call.1} parent=1 // pred_check_branch
      %158 = sbr.rel (0) target = $region65
    $region64: #{tpu_custom_call.1} parent=1 // pred_region
      %159 = dma.done [#allocation6], 512
    $region65: #{tpu_custom_call.1} parent=1 // pred_fallthru
      _
    // Predicated region
    $region66: #{tpu_custom_call.1} parent=1 // pred_check
      _
    $region67: #{tpu_custom_call.1} parent=1 // pred_check_branch
      %161 = sbr.rel (0) target = $region69
    $region68: #{tpu_custom_call.1} parent=1 // pred_region
      %162 = dma.done [#allocation9], 10240
    $region69: #{tpu_custom_call.1} parent=1 // pred_fallthru
      _
    // Predicated region
    $region70: #{tpu_custom_call.1} parent=1 // pred_check
      _
    $region71: #{tpu_custom_call.1} parent=1 // pred_check_branch
      %164 = sbr.rel (0) target = $region73
    $region72: #{tpu_custom_call.1} parent=1 // pred_region
      %165 = dma.done [#allocation9], 10240
    $region73: #{tpu_custom_call.1} parent=1 // pred_fallthru
      _
    // Predicated region
    $region74: #{tpu_custom_call.1} parent=1 // pred_check
      _
    $region75: #{tpu_custom_call.1} parent=1 // pred_check_branch
      %167 = sbr.rel (0) target = $region77
    $region76: #{tpu_custom_call.1} parent=1 // pred_region
      %168 = dma.done [#allocation12], 160
    $region77: #{tpu_custom_call.1} parent=1 // pred_fallthru
      _
    // Predicated region
    $region78: #{tpu_custom_call.1} parent=1 // pred_check
      _
    $region79: #{tpu_custom_call.1} parent=1 // pred_check_branch
      %170 = sbr.rel (0) target = $region81
    $region80: #{tpu_custom_call.1} parent=1 // pred_region
      %171 = dma.done [#allocation12], 5120
    $region81: #{tpu_custom_call.1} parent=1 // pred_fallthru
      _
    // Predicated region
    $region82: #{tpu_custom_call.1} parent=1 // pred_check
      _
    $region83: #{tpu_custom_call.1} parent=1 // pred_check_branch
      %173 = sbr.rel (0) target = $region85
    $region84: #{tpu_custom_call.1} parent=1 // pred_region
      %174 = dma.done [#allocation15], 80
    $region85: #{tpu_custom_call.1} parent=1 // pred_fallthru
      _
    // Predicated region
    $region86: #{tpu_custom_call.1} parent=1 // pred_check
      _
    $region87: #{tpu_custom_call.1} parent=1 // pred_check_branch
      %176 = sbr.rel (0) target = $region89
    $region88: #{tpu_custom_call.1} parent=1 // pred_region
      %177 = dma.done [#allocation15], 16
    $region89: #{tpu_custom_call.1} parent=1 // pred_fallthru
      _
    // Predicated region
    $region90: #{tpu_custom_call.1} parent=1 // pred_check
      _
    $region91: #{tpu_custom_call.1} parent=1 // pred_check_branch
      %179 = sbr.rel (0) target = $region93
    $region92: #{tpu_custom_call.1} parent=1 // pred_region
      %180 = dma.done [#allocation18], 16
    $region93: #{tpu_custom_call.1} parent=1 // pred_fallthru
      _
    %v182 = vld [vmem:[#allocation2] sm:$0xff]
    %v183 = vld [vmem:[#allocation2 + $0x8] sm:$0xff]
    %v184 = vld [vmem:[#allocation5] sm:$0xff]
    %v185 = vld [vmem:[#allocation5 + $0x8] sm:$0xff]
    %v186 = vld [vmem:[#allocation7] sm:$0xff]
    %v187 = vld [vmem:[#allocation7 + $0x8] sm:$0xff]
    %v188 = vpack.c.bf16 %v185, %v184
    %v189 = vld [vmem:[#allocation8] sm:$0xff]
    %v190 = vld [vmem:[#allocation8 + $0x8] sm:$0xff]
    %v191 = vld [vmem:[#allocation8 + $0x10] sm:$0xf]
    %v192 = vld [vmem:[#allocation8 + $0x14] sm:$0xff]
    %v193 = vld [vmem:[#allocation8 + $0x1c] sm:$0xff]
    %v194 = vld [vmem:[#allocation8 + $0x24] sm:$0xf]
    %v195 = vld [vmem:[#allocation8 + $0x28] sm:$0xff]
    %v196 = vld [vmem:[#allocation8 + $0x30] sm:$0xff]
    %v197 = vld [vmem:[#allocation8 + $0x38] sm:$0xf]
    %v198 = vld [vmem:[#allocation8 + $0x3c] sm:$0xff]
    %v199 = vld [vmem:[#allocation8 + $0x44] sm:$0xff]
    %v200 = vld [vmem:[#allocation8 + $0x4c] sm:$0xf]
    %v201 = vld [vmem:[#allocation8 + $0x50] sm:$0xff]
    %v202 = vld [vmem:[#allocation8 + $0x58] sm:$0xff]
    %v203 = vld [vmem:[#allocation8 + $0x60] sm:$0xf]
    %v204 = vld [vmem:[#allocation8 + $0x64] sm:$0xff]
    %v205 = vld [vmem:[#allocation8 + $0x6c] sm:$0xff]
    %v206 = vld [vmem:[#allocation8 + $0x74] sm:$0xf]
    %v207 = vld [vmem:[#allocation8 + $0x78] sm:$0xff]
    %v208 = vld [vmem:[#allocation8 + $0x80] sm:$0xff]
    %v209 = vld [vmem:[#allocation8 + $0x88] sm:$0xf]
    %v210 = vld [vmem:[#allocation8 + $0x8c] sm:$0xff]
    %v211 = vld [vmem:[#allocation8 + $0x94] sm:$0xff]
    %v212 = vld [vmem:[#allocation8 + $0x9c] sm:$0xf]
    %v213 = vld [vmem:[#allocation8 + $0xa0] sm:$0xff]
    %v214 = vld [vmem:[#allocation8 + $0xa8] sm:$0xff]
    %v215 = vld [vmem:[#allocation8 + $0xb0] sm:$0xf]
    %v216 = vld [vmem:[#allocation8 + $0xb4] sm:$0xff]
    %v217 = vld [vmem:[#allocation8 + $0xbc] sm:$0xff]
    %v218 = vld [vmem:[#allocation8 + $0xc4] sm:$0xf]
    %v219 = vld [vmem:[#allocation8 + $0xc8] sm:$0xff]
    %v220 = vld [vmem:[#allocation8 + $0xd0] sm:$0xff]
    %v221 = vld [vmem:[#allocation8 + $0xd8] sm:$0xf]
    %v222 = vld [vmem:[#allocation8 + $0xdc] sm:$0xff]
    %v223 = vld [vmem:[#allocation8 + $0xe4] sm:$0xff]
    %v224 = vld [vmem:[#allocation8 + $0xec] sm:$0xf]
    %v225 = vld [vmem:[#allocation8 + $0xf0] sm:$0xff]
    %v226 = vld [vmem:[#allocation8 + $0xf8] sm:$0xff]
    %v227 = vld [vmem:[#allocation8 + $0x100] sm:$0xf]
    %v228 = vld [vmem:[#allocation8 + $0x104] sm:$0xff]
    %v229 = vld [vmem:[#allocation8 + $0x10c] sm:$0xff]
    %v230 = vld [vmem:[#allocation8 + $0x114] sm:$0xf]
    %v231 = vld [vmem:[#allocation8 + $0x118] sm:$0xff]
    %v232 = vld [vmem:[#allocation8 + $0x120] sm:$0xff]
    %v233 = vld [vmem:[#allocation8 + $0x128] sm:$0xf]
    %v234 = vld [vmem:[#allocation8 + $0x12c] sm:$0xff]
    %v235 = vld [vmem:[#allocation8 + $0x134] sm:$0xff]
    %v236 = vld [vmem:[#allocation8 + $0x13c] sm:$0xf]
    %v237 = vld [vmem:[#allocation8 + $0x140] sm:$0xff]
    %v238 = vld [vmem:[#allocation8 + $0x148] sm:$0xff]
    %v239 = vld [vmem:[#allocation8 + $0x150] sm:$0xf]
    %v240 = vld [vmem:[#allocation8 + $0x154] sm:$0xff]
    %v241 = vld [vmem:[#allocation8 + $0x15c] sm:$0xff]
    %v242 = vld [vmem:[#allocation8 + $0x164] sm:$0xf]
    %v243 = vld [vmem:[#allocation8 + $0x168] sm:$0xff]
    %v244 = vld [vmem:[#allocation8 + $0x170] sm:$0xff]
    %v245 = vld [vmem:[#allocation8 + $0x178] sm:$0xf]
    %v246 = vld [vmem:[#allocation8 + $0x17c] sm:$0xff]
    %v247 = vld [vmem:[#allocation8 + $0x184] sm:$0xff]
    %v248 = vld [vmem:[#allocation8 + $0x18c] sm:$0xf]
    %v249 = vld [vmem:[#allocation8 + $0x190] sm:$0xff]
    %v250 = vld [vmem:[#allocation8 + $0x198] sm:$0xff]
    %v251 = vld [vmem:[#allocation8 + $0x1a0] sm:$0xf]
    %v252 = vld [vmem:[#allocation8 + $0x1a4] sm:$0xff]
    %v253 = vld [vmem:[#allocation8 + $0x1ac] sm:$0xff]
    %v254 = vld [vmem:[#allocation8 + $0x1b4] sm:$0xf]
    %v255 = vld [vmem:[#allocation8 + $0x1b8] sm:$0xff]
    %v256 = vld [vmem:[#allocation8 + $0x1c0] sm:$0xff]
    %v257 = vld [vmem:[#allocation8 + $0x1c8] sm:$0xf]
    %v258 = vld [vmem:[#allocation8 + $0x1cc] sm:$0xff]
    %v259 = vld [vmem:[#allocation8 + $0x1d4] sm:$0xff]
    %v260 = vld [vmem:[#allocation8 + $0x1dc] sm:$0xf]
    %v261 = vld [vmem:[#allocation8 + $0x1e0] sm:$0xff]
    %v262 = vld [vmem:[#allocation8 + $0x1e8] sm:$0xff]
    %v263 = vld [vmem:[#allocation8 + $0x1f0] sm:$0xf]
    %v264 = vld [vmem:[#allocation8 + $0x1f4] sm:$0xff]
    %v265 = vld [vmem:[#allocation8 + $0x1fc] sm:$0xff]
    %v266 = vld [vmem:[#allocation8 + $0x204] sm:$0xf]
    %v267 = vld [vmem:[#allocation8 + $0x208] sm:$0xff]
    %v268 = vld [vmem:[#allocation8 + $0x210] sm:$0xff]
    %v269 = vld [vmem:[#allocation8 + $0x218] sm:$0xf]
    %v270 = vld [vmem:[#allocation8 + $0x21c] sm:$0xff]
    %v271 = vld [vmem:[#allocation8 + $0x224] sm:$0xff]
    %v272 = vld [vmem:[#allocation8 + $0x22c] sm:$0xf]
    %v273 = vld [vmem:[#allocation8 + $0x230] sm:$0xff]
    %v274 = vld [vmem:[#allocation8 + $0x238] sm:$0xff]
    %v275 = vld [vmem:[#allocation8 + $0x240] sm:$0xf]
    %v276 = vld [vmem:[#allocation8 + $0x244] sm:$0xff]
    %v277 = vld [vmem:[#allocation8 + $0x24c] sm:$0xff]
    %v278 = vld [vmem:[#allocation8 + $0x254] sm:$0xf]
    %v279 = vld [vmem:[#allocation8 + $0x258] sm:$0xff]
    %v280 = vld [vmem:[#allocation8 + $0x260] sm:$0xff]
    %v281 = vld [vmem:[#allocation8 + $0x268] sm:$0xf]
    %v282 = vld [vmem:[#allocation8 + $0x26c] sm:$0xff]
    %v283 = vld [vmem:[#allocation8 + $0x274] sm:$0xff]
    %v284 = vld [vmem:[#allocation8 + $0x27c] sm:$0xf]
    %v285 = vld [vmem:[%s4] sm:$0x1f]
    %v287 = vlaneseq
    %v288 = vshrl.u32 %v287, 7
    %v289 = vsub.s32 0, %v288
    %v290 = vrot.slane %v285, %v289
    %v291 = vlaneseq
    %v292 = vshrl.u32 %v291, 7
    %v293 = vsub.s32 1, %v292
    %v294 = vrot.slane %v285, %v293
    %v295 = vlaneseq
    %v296 = vshrl.u32 %v295, 7
    %v297 = vsub.s32 2, %v296
    %v298 = vrot.slane %v285, %v297
    %v299 = vlaneseq
    %v300 = vshrl.u32 %v299, 7
    %v301 = vsub.s32 3, %v300
    %v302 = vrot.slane %v285, %v301
    %v303 = vlaneseq
    %v304 = vshrl.u32 %v303, 7
    %v305 = vsub.s32 4, %v304
    %v306 = vrot.slane %v285, %v305
    %v314 = vunpack.c.l.b16 %v182
    %v315 = vunpack.c.h.b16 %v182
    %v316 = vunpack.c.l.b16 %v183
    %v317 = vunpack.c.h.b16 %v183
    %v318 = vpack.c.b16 %v316, %v314
    %v319 = vpack.c.b16 %v317, %v315
    %v418 = vunpack.c.l.b16 %v189
    %v419 = vunpack.c.h.b16 %v189
    %v420 = vunpack.c.l.b16 %v190
    %v421 = vunpack.c.h.b16 %v190
    %v422 = vunpack.c.l.b16 %v191
    %v423 = vunpack.c.l.b16 %v192
    %v424 = vunpack.c.h.b16 %v192
    %v425 = vunpack.c.l.b16 %v193
    %v426 = vunpack.c.h.b16 %v193
    %v427 = vunpack.c.l.b16 %v194
    %v428 = vunpack.c.l.b16 %v195
    %v429 = vunpack.c.h.b16 %v195
    %v430 = vunpack.c.l.b16 %v196
    %v431 = vunpack.c.h.b16 %v196
    %v432 = vunpack.c.l.b16 %v197
    %v433 = vunpack.c.l.b16 %v198
    %v434 = vunpack.c.h.b16 %v198
    %v435 = vunpack.c.l.b16 %v199
    %v436 = vunpack.c.h.b16 %v199
    %v437 = vunpack.c.l.b16 %v200
    %v438 = vunpack.c.l.b16 %v201
    %v439 = vunpack.c.h.b16 %v201
    %v440 = vunpack.c.l.b16 %v202
    %v441 = vunpack.c.h.b16 %v202
    %v442 = vunpack.c.l.b16 %v203
    %v443 = vunpack.c.l.b16 %v204
    %v444 = vunpack.c.h.b16 %v204
    %v445 = vunpack.c.l.b16 %v205
    %v446 = vunpack.c.h.b16 %v205
    %v447 = vunpack.c.l.b16 %v206
    %v448 = vunpack.c.l.b16 %v207
    %v449 = vunpack.c.h.b16 %v207
    %v450 = vunpack.c.l.b16 %v208
    %v451 = vunpack.c.h.b16 %v208
    %v452 = vunpack.c.l.b16 %v209
    %v453 = vunpack.c.l.b16 %v210
    %v454 = vunpack.c.h.b16 %v210
    %v455 = vunpack.c.l.b16 %v211
    %v456 = vunpack.c.h.b16 %v211
    %v457 = vunpack.c.l.b16 %v212
    %v458 = vunpack.c.l.b16 %v213
    %v459 = vunpack.c.h.b16 %v213
    %v460 = vunpack.c.l.b16 %v214
    %v461 = vunpack.c.h.b16 %v214
    %v462 = vunpack.c.l.b16 %v215
    %v463 = vunpack.c.l.b16 %v216
    %v464 = vunpack.c.h.b16 %v216
    %v465 = vunpack.c.l.b16 %v217
    %v466 = vunpack.c.h.b16 %v217
    %v467 = vunpack.c.l.b16 %v218
    %v468 = vunpack.c.l.b16 %v219
    %v469 = vunpack.c.h.b16 %v219
    %v470 = vunpack.c.l.b16 %v220
    %v471 = vunpack.c.h.b16 %v220
    %v472 = vunpack.c.l.b16 %v221
    %v473 = vunpack.c.l.b16 %v222
    %v474 = vunpack.c.h.b16 %v222
    %v475 = vunpack.c.l.b16 %v223
    %v476 = vunpack.c.h.b16 %v223
    %v477 = vunpack.c.l.b16 %v224
    %v478 = vunpack.c.l.b16 %v225
    %v479 = vunpack.c.h.b16 %v225
    %v480 = vunpack.c.l.b16 %v226
    %v481 = vunpack.c.h.b16 %v226
    %v482 = vunpack.c.l.b16 %v227
    %v483 = vunpack.c.l.b16 %v228
    %v484 = vunpack.c.h.b16 %v228
    %v485 = vunpack.c.l.b16 %v229
    %v486 = vunpack.c.h.b16 %v229
    %v487 = vunpack.c.l.b16 %v230
    %v488 = vunpack.c.l.b16 %v231
    %v489 = vunpack.c.h.b16 %v231
    %v490 = vunpack.c.l.b16 %v232
    %v491 = vunpack.c.h.b16 %v232
    %v492 = vunpack.c.l.b16 %v233
    %v493 = vunpack.c.l.b16 %v234
    %v494 = vunpack.c.h.b16 %v234
    %v495 = vunpack.c.l.b16 %v235
    %v496 = vunpack.c.h.b16 %v235
    %v497 = vunpack.c.l.b16 %v236
    %v498 = vunpack.c.l.b16 %v237
    %v499 = vunpack.c.h.b16 %v237
    %v500 = vunpack.c.l.b16 %v238
    %v501 = vunpack.c.h.b16 %v238
    %v502 = vunpack.c.l.b16 %v239
    %v503 = vunpack.c.l.b16 %v240
    %v504 = vunpack.c.h.b16 %v240
    %v505 = vunpack.c.l.b16 %v241
    %v506 = vunpack.c.h.b16 %v241
    %v507 = vunpack.c.l.b16 %v242
    %v508 = vunpack.c.l.b16 %v243
    %v509 = vunpack.c.h.b16 %v243
    %v510 = vunpack.c.l.b16 %v244
    %v511 = vunpack.c.h.b16 %v244
    %v512 = vunpack.c.l.b16 %v245
    %v513 = vunpack.c.l.b16 %v246
    %v514 = vunpack.c.h.b16 %v246
    %v515 = vunpack.c.l.b16 %v247
    %v516 = vunpack.c.h.b16 %v247
    %v517 = vunpack.c.l.b16 %v248
    %v518 = vunpack.c.l.b16 %v249
    %v519 = vunpack.c.h.b16 %v249
    %v520 = vunpack.c.l.b16 %v250
    %v521 = vunpack.c.h.b16 %v250
    %v522 = vunpack.c.l.b16 %v251
    %v523 = vunpack.c.l.b16 %v252
    %v524 = vunpack.c.h.b16 %v252
    %v525 = vunpack.c.l.b16 %v253
    %v526 = vunpack.c.h.b16 %v253
    %v527 = vunpack.c.l.b16 %v254
    %v528 = vunpack.c.l.b16 %v255
    %v529 = vunpack.c.h.b16 %v255
    %v530 = vunpack.c.l.b16 %v256
    %v531 = vunpack.c.h.b16 %v256
    %v532 = vunpack.c.l.b16 %v257
    %v533 = vunpack.c.l.b16 %v258
    %v534 = vunpack.c.h.b16 %v258
    %v535 = vunpack.c.l.b16 %v259
    %v536 = vunpack.c.h.b16 %v259
    %v537 = vunpack.c.l.b16 %v260
    %v538 = vunpack.c.l.b16 %v261
    %v539 = vunpack.c.h.b16 %v261
    %v540 = vunpack.c.l.b16 %v262
    %v541 = vunpack.c.h.b16 %v262
    %v542 = vunpack.c.l.b16 %v263
    %v543 = vunpack.c.l.b16 %v264
    %v544 = vunpack.c.h.b16 %v264
    %v545 = vunpack.c.l.b16 %v265
    %v546 = vunpack.c.h.b16 %v265
    %v547 = vunpack.c.l.b16 %v266
    %v548 = vunpack.c.l.b16 %v267
    %v549 = vunpack.c.h.b16 %v267
    %v550 = vunpack.c.l.b16 %v268
    %v551 = vunpack.c.h.b16 %v268
    %v552 = vunpack.c.l.b16 %v269
    %v553 = vunpack.c.l.b16 %v270
    %v554 = vunpack.c.h.b16 %v270
    %v555 = vunpack.c.l.b16 %v271
    %v556 = vunpack.c.h.b16 %v271
    %v557 = vunpack.c.l.b16 %v272
    %v558 = vunpack.c.l.b16 %v273
    %v559 = vunpack.c.h.b16 %v273
    %v560 = vunpack.c.l.b16 %v274
    %v561 = vunpack.c.h.b16 %v274
    %v562 = vunpack.c.l.b16 %v275
    %v563 = vunpack.c.l.b16 %v276
    %v564 = vunpack.c.h.b16 %v276
    %v565 = vunpack.c.l.b16 %v277
    %v566 = vunpack.c.h.b16 %v277
    %v567 = vunpack.c.l.b16 %v278
    %v568 = vunpack.c.l.b16 %v279
    %v569 = vunpack.c.h.b16 %v279
    %v570 = vunpack.c.l.b16 %v280
    %v571 = vunpack.c.h.b16 %v280
    %v572 = vunpack.c.l.b16 %v281
    %v573 = vunpack.c.l.b16 %v282
    %v574 = vunpack.c.h.b16 %v282
    %v575 = vunpack.c.l.b16 %v283
    %v576 = vunpack.c.h.b16 %v283
    %v577 = vunpack.c.l.b16 %v284
    %v578 = vpack.c.b16 %v423, %v418
    %v579 = vpack.c.b16 %v424, %v419
    %v580 = vpack.c.b16 %v425, %v420
    %v581 = vpack.c.b16 %v426, %v421
    %v582 = vpack.c.b16 %v427, %v422
    %v583 = vpack.c.b16 %v433, %v428
    %v584 = vpack.c.b16 %v434, %v429
    %v585 = vpack.c.b16 %v435, %v430
    %v586 = vpack.c.b16 %v436, %v431
    %v587 = vpack.c.b16 %v437, %v432
    %v588 = vpack.c.b16 %v443, %v438
    %v589 = vpack.c.b16 %v444, %v439
    %v590 = vpack.c.b16 %v445, %v440
    %v591 = vpack.c.b16 %v446, %v441
    %v592 = vpack.c.b16 %v447, %v442
    %v593 = vpack.c.b16 %v453, %v448
    %v594 = vpack.c.b16 %v454, %v449
    %v595 = vpack.c.b16 %v455, %v450
    %v596 = vpack.c.b16 %v456, %v451
    %v597 = vpack.c.b16 %v457, %v452
    %v598 = vpack.c.b16 %v463, %v458
    %v599 = vpack.c.b16 %v464, %v459
    %v600 = vpack.c.b16 %v465, %v460
    %v601 = vpack.c.b16 %v466, %v461
    %v602 = vpack.c.b16 %v467, %v462
    %v603 = vpack.c.b16 %v473, %v468
    %v604 = vpack.c.b16 %v474, %v469
    %v605 = vpack.c.b16 %v475, %v470
    %v606 = vpack.c.b16 %v476, %v471
    %v607 = vpack.c.b16 %v477, %v472
    %v608 = vpack.c.b16 %v483, %v478
    %v609 = vpack.c.b16 %v484, %v479
    %v610 = vpack.c.b16 %v485, %v480
    %v611 = vpack.c.b16 %v486, %v481
    %v612 = vpack.c.b16 %v487, %v482
    %v613 = vpack.c.b16 %v493, %v488
    %v614 = vpack.c.b16 %v494, %v489
    %v615 = vpack.c.b16 %v495, %v490
    %v616 = vpack.c.b16 %v496, %v491
    %v617 = vpack.c.b16 %v497, %v492
    %v618 = vpack.c.b16 %v503, %v498
    %v619 = vpack.c.b16 %v504, %v499
    %v620 = vpack.c.b16 %v505, %v500
    %v621 = vpack.c.b16 %v506, %v501
    %v622 = vpack.c.b16 %v507, %v502
    %v623 = vpack.c.b16 %v513, %v508
    %v624 = vpack.c.b16 %v514, %v509
    %v625 = vpack.c.b16 %v515, %v510
    %v626 = vpack.c.b16 %v516, %v511
    %v627 = vpack.c.b16 %v517, %v512
    %v628 = vpack.c.b16 %v523, %v518
    %v629 = vpack.c.b16 %v524, %v519
    %v630 = vpack.c.b16 %v525, %v520
    %v631 = vpack.c.b16 %v526, %v521
    %v632 = vpack.c.b16 %v527, %v522
    %v633 = vpack.c.b16 %v533, %v528
    %v634 = vpack.c.b16 %v534, %v529
    %v635 = vpack.c.b16 %v535, %v530
    %v636 = vpack.c.b16 %v536, %v531
    %v637 = vpack.c.b16 %v537, %v532
    %v638 = vpack.c.b16 %v543, %v538
    %v639 = vpack.c.b16 %v544, %v539
    %v640 = vpack.c.b16 %v545, %v540
    %v641 = vpack.c.b16 %v546, %v541
    %v642 = vpack.c.b16 %v547, %v542
    %v643 = vpack.c.b16 %v553, %v548
    %v644 = vpack.c.b16 %v554, %v549
    %v645 = vpack.c.b16 %v555, %v550
    %v646 = vpack.c.b16 %v556, %v551
    %v647 = vpack.c.b16 %v557, %v552
    %v648 = vpack.c.b16 %v563, %v558
    %v649 = vpack.c.b16 %v564, %v559
    %v650 = vpack.c.b16 %v565, %v560
    %v651 = vpack.c.b16 %v566, %v561
    %v652 = vpack.c.b16 %v567, %v562
    %v653 = vpack.c.b16 %v573, %v568
    %v654 = vpack.c.b16 %v574, %v569
    %v655 = vpack.c.b16 %v575, %v570
    %v656 = vpack.c.b16 %v576, %v571
    %v657 = vpack.c.b16 %v577, %v572
    %738 = vmatprep.subr.bf16.mxu0 %v579
    %739 = vmatpush1.bf16.msra.mxu0 %v578
    %740 = vmatprep.subr.bf16.mxu0 %v584
    %741 = vmatpush1.bf16.msra.mxu0 %v583
    %742 = vmatprep.subr.bf16.mxu0 %v589
    %743 = vmatpush1.bf16.msra.mxu0 %v588
    %744 = vmatprep.subr.bf16.mxu0 %v594
    %745 = vmatpush1.bf16.msra.mxu0 %v593
    %746 = vmatprep.subr.bf16.mxu0 %v599
    %747 = vmatpush1.bf16.msra.mxu0 %v598
    %748 = vmatprep.subr.bf16.mxu0 %v604
    %749 = vmatpush1.bf16.msra.mxu0 %v603
    %750 = vmatprep.subr.bf16.mxu0 %v609
    %751 = vmatpush1.bf16.msra.mxu0 %v608
    %752 = vmatprep.subr.bf16.mxu0 %v614
    %753 = vmatpush1.bf16.msra.mxu0 %v613
    %754 = vmatprep.subr.bf16.mxu0 %v619
    %755 = vmatpush1.bf16.msra.mxu0 %v618
    %756 = vmatprep.subr.bf16.mxu0 %v624
    %757 = vmatpush1.bf16.msra.mxu0 %v623
    %758 = vmatprep.subr.bf16.mxu0 %v629
    %759 = vmatpush1.bf16.msra.mxu0 %v628
    %760 = vmatprep.subr.bf16.mxu0 %v634
    %761 = vmatpush1.bf16.msra.mxu0 %v633
    %762 = vmatprep.subr.bf16.mxu0 %v639
    %763 = vmatpush1.bf16.msra.mxu0 %v638
    %764 = vmatprep.subr.bf16.mxu0 %v644
    %765 = vmatpush1.bf16.msra.mxu0 %v643
    %766 = vmatprep.subr.bf16.mxu0 %v649
    %767 = vmatpush1.bf16.msra.mxu0 %v648
    %768 = vmatprep.subr.bf16.mxu0 %v654
    %769 = vmatpush1.bf16.msra.mxu0 %v653
    %770 = vmatprep.mubr.bf16.mxu0 %v319
    %771 = vmatmul.mubr.bf16.gmra.mrb[0].mxu0 %v318
    %v772 = vpop.f32.mrb[0].mxu0
    %v773 = vadd.f32 %v290, %v772
    %v774 = vpop.f32.mrb[0].mxu0
    %v775 = vadd.f32 %v294, %v774
    %v776 = vpop.f32.mrb[0].mxu0
    %v777 = vadd.f32 %v290, %v776
    %v778 = vpop.f32.mrb[0].mxu0
    %v779 = vadd.f32 %v294, %v778
    %780 = vdwg.mxu0
    %781 = vmatprep.subr.bf16.mxu0 %v581
    %782 = vmatpush1.bf16.msra.mxu0 %v580
    %783 = vmatprep.subr.bf16.mxu0 %v586
    %784 = vmatpush1.bf16.msra.mxu0 %v585
    %785 = vmatprep.subr.bf16.mxu0 %v591
    %786 = vmatpush1.bf16.msra.mxu0 %v590
    %787 = vmatprep.subr.bf16.mxu0 %v596
    %788 = vmatpush1.bf16.msra.mxu0 %v595
    %789 = vmatprep.subr.bf16.mxu0 %v601
    %790 = vmatpush1.bf16.msra.mxu0 %v600
    %791 = vmatprep.subr.bf16.mxu0 %v606
    %792 = vmatpush1.bf16.msra.mxu0 %v605
    %793 = vmatprep.subr.bf16.mxu0 %v611
    %794 = vmatpush1.bf16.msra.mxu0 %v610
    %795 = vmatprep.subr.bf16.mxu0 %v616
    %796 = vmatpush1.bf16.msra.mxu0 %v615
    %797 = vmatprep.subr.bf16.mxu0 %v621
    %798 = vmatpush1.bf16.msra.mxu0 %v620
    %799 = vmatprep.subr.bf16.mxu0 %v626
    %800 = vmatpush1.bf16.msra.mxu0 %v625
    %801 = vmatprep.subr.bf16.mxu0 %v631
    %802 = vmatpush1.bf16.msra.mxu0 %v630
    %803 = vmatprep.subr.bf16.mxu0 %v636
    %804 = vmatpush1.bf16.msra.mxu0 %v635
    %805 = vmatprep.subr.bf16.mxu0 %v641
    %806 = vmatpush1.bf16.msra.mxu0 %v640
    %807 = vmatprep.subr.bf16.mxu0 %v646
    %808 = vmatpush1.bf16.msra.mxu0 %v645
    %809 = vmatprep.subr.bf16.mxu0 %v651
    %810 = vmatpush1.bf16.msra.mxu0 %v650
    %811 = vmatprep.subr.bf16.mxu0 %v656
    %812 = vmatpush1.bf16.msra.mxu0 %v655
    %813 = vmatprep.mubr.bf16.mxu0 %v319
    %814 = vmatmul.mubr.bf16.gmra.mrb[0].mxu0 %v318
    %v815 = vpop.f32.mrb[0].mxu0
    %v816 = vadd.f32 %v298, %v815
    %v817 = vpop.f32.mrb[0].mxu0
    %v818 = vadd.f32 %v302, %v817
    %v819 = vpop.f32.mrb[0].mxu0
    %v820 = vadd.f32 %v298, %v819
    %v821 = vpop.f32.mrb[0].mxu0
    %v822 = vadd.f32 %v302, %v821
    %823 = vdwg.mxu0
    %824 = vmatprep.subr.bf16.mxu0 0
    %825 = vmatpush1.bf16.msra.mxu0 %v582
    %826 = vmatprep.subr.bf16.mxu0 0
    %827 = vmatpush1.bf16.msra.mxu0 %v587
    %828 = vmatprep.subr.bf16.mxu0 0
    %829 = vmatpush1.bf16.msra.mxu0 %v592
    %830 = vmatprep.subr.bf16.mxu0 0
    %831 = vmatpush1.bf16.msra.mxu0 %v597
    %832 = vmatprep.subr.bf16.mxu0 0
    %833 = vmatpush1.bf16.msra.mxu0 %v602
    %834 = vmatprep.subr.bf16.mxu0 0
    %835 = vmatpush1.bf16.msra.mxu0 %v607
    %836 = vmatprep.subr.bf16.mxu0 0
    %837 = vmatpush1.bf16.msra.mxu0 %v612
    %838 = vmatprep.subr.bf16.mxu0 0
    %839 = vmatpush1.bf16.msra.mxu0 %v617
    %840 = vmatprep.subr.bf16.mxu0 0
    %841 = vmatpush1.bf16.msra.mxu0 %v622
    %842 = vmatprep.subr.bf16.mxu0 0
    %843 = vmatpush1.bf16.msra.mxu0 %v627
    %844 = vmatprep.subr.bf16.mxu0 0
    %845 = vmatpush1.bf16.msra.mxu0 %v632
    %846 = vmatprep.subr.bf16.mxu0 0
    %847 = vmatpush1.bf16.msra.mxu0 %v637
    %848 = vmatprep.subr.bf16.mxu0 0
    %849 = vmatpush1.bf16.msra.mxu0 %v642
    %850 = vmatprep.subr.bf16.mxu0 0
    %851 = vmatpush1.bf16.msra.mxu0 %v647
    %852 = vmatprep.subr.bf16.mxu0 0
    %853 = vmatpush1.bf16.msra.mxu0 %v652
    %854 = vmatprep.subr.bf16.mxu0 0
    %855 = vmatpush1.bf16.msra.mxu0 %v657
    %856 = vmatprep.mubr.bf16.mxu0 %v319
    %857 = vmatmul.mubr.bf16.gmra.mrb[0].mxu0 %v318
    %v858 = vpop.f32.mrb[0].mxu0
    %v859 = vadd.f32 %v306, %v858
    %v860 = vpop.f32.mrb[0].mxu0
    %v861 = vpop.f32.mrb[0].mxu0
    %v862 = vadd.f32 %v306, %v861
    %v863 = vpop.f32.mrb[0].mxu0
    %864 = vdwg.mxu0
    %v865 = vld [vmem:[#allocation10] sm:$0xff]
    %v866 = vld [vmem:[#allocation10 + $0x8] sm:$0xff]
    %v867 = vld [vmem:[#allocation10 + $0x10] sm:$0xf]
    %v868 = vld [vmem:[#allocation10 + $0x14] sm:$0xff]
    %v869 = vld [vmem:[#allocation10 + $0x1c] sm:$0xff]
    %v870 = vld [vmem:[#allocation10 + $0x24] sm:$0xf]
    %v871 = vld [vmem:[#allocation10 + $0x28] sm:$0xff]
    %v872 = vld [vmem:[#allocation10 + $0x30] sm:$0xff]
    %v873 = vld [vmem:[#allocation10 + $0x38] sm:$0xf]
    %v874 = vld [vmem:[#allocation10 + $0x3c] sm:$0xff]
    %v875 = vld [vmem:[#allocation10 + $0x44] sm:$0xff]
    %v876 = vld [vmem:[#allocation10 + $0x4c] sm:$0xf]
    %v877 = vld [vmem:[#allocation10 + $0x50] sm:$0xff]
    %v878 = vld [vmem:[#allocation10 + $0x58] sm:$0xff]
    %v879 = vld [vmem:[#allocation10 + $0x60] sm:$0xf]
    %v880 = vld [vmem:[#allocation10 + $0x64] sm:$0xff]
    %v881 = vld [vmem:[#allocation10 + $0x6c] sm:$0xff]
    %v882 = vld [vmem:[#allocation10 + $0x74] sm:$0xf]
    %v883 = vld [vmem:[#allocation10 + $0x78] sm:$0xff]
    %v884 = vld [vmem:[#allocation10 + $0x80] sm:$0xff]
    %v885 = vld [vmem:[#allocation10 + $0x88] sm:$0xf]
    %v886 = vld [vmem:[#allocation10 + $0x8c] sm:$0xff]
    %v887 = vld [vmem:[#allocation10 + $0x94] sm:$0xff]
    %v888 = vld [vmem:[#allocation10 + $0x9c] sm:$0xf]
    %v889 = vld [vmem:[#allocation10 + $0xa0] sm:$0xff]
    %v890 = vld [vmem:[#allocation10 + $0xa8] sm:$0xff]
    %v891 = vld [vmem:[#allocation10 + $0xb0] sm:$0xf]
    %v892 = vld [vmem:[#allocation10 + $0xb4] sm:$0xff]
    %v893 = vld [vmem:[#allocation10 + $0xbc] sm:$0xff]
    %v894 = vld [vmem:[#allocation10 + $0xc4] sm:$0xf]
    %v895 = vld [vmem:[#allocation10 + $0xc8] sm:$0xff]
    %v896 = vld [vmem:[#allocation10 + $0xd0] sm:$0xff]
    %v897 = vld [vmem:[#allocation10 + $0xd8] sm:$0xf]
    %v898 = vld [vmem:[#allocation10 + $0xdc] sm:$0xff]
    %v899 = vld [vmem:[#allocation10 + $0xe4] sm:$0xff]
    %v900 = vld [vmem:[#allocation10 + $0xec] sm:$0xf]
    %v901 = vld [vmem:[#allocation10 + $0xf0] sm:$0xff]
    %v902 = vld [vmem:[#allocation10 + $0xf8] sm:$0xff]
    %v903 = vld [vmem:[#allocation10 + $0x100] sm:$0xf]
    %v904 = vld [vmem:[#allocation10 + $0x104] sm:$0xff]
    %v905 = vld [vmem:[#allocation10 + $0x10c] sm:$0xff]
    %v906 = vld [vmem:[#allocation10 + $0x114] sm:$0xf]
    %v907 = vld [vmem:[#allocation10 + $0x118] sm:$0xff]
    %v908 = vld [vmem:[#allocation10 + $0x120] sm:$0xff]
    %v909 = vld [vmem:[#allocation10 + $0x128] sm:$0xf]
    %v910 = vld [vmem:[#allocation10 + $0x12c] sm:$0xff]
    %v911 = vld [vmem:[#allocation10 + $0x134] sm:$0xff]
    %v912 = vld [vmem:[#allocation10 + $0x13c] sm:$0xf]
    %v961 = vunpack.c.l.b16 %v865
    %v962 = vunpack.c.h.b16 %v865
    %v963 = vunpack.c.l.b16 %v866
    %v964 = vunpack.c.h.b16 %v866
    %v965 = vunpack.c.l.b16 %v867
    %v966 = vunpack.c.l.b16 %v868
    %v967 = vunpack.c.h.b16 %v868
    %v968 = vunpack.c.l.b16 %v869
    %v969 = vunpack.c.h.b16 %v869
    %v970 = vunpack.c.l.b16 %v870
    %v971 = vunpack.c.l.b16 %v871
    %v972 = vunpack.c.h.b16 %v871
    %v973 = vunpack.c.l.b16 %v872
    %v974 = vunpack.c.h.b16 %v872
    %v975 = vunpack.c.l.b16 %v873
    %v976 = vunpack.c.l.b16 %v874
    %v977 = vunpack.c.h.b16 %v874
    %v978 = vunpack.c.l.b16 %v875
    %v979 = vunpack.c.h.b16 %v875
    %v980 = vunpack.c.l.b16 %v876
    %v981 = vunpack.c.l.b16 %v877
    %v982 = vunpack.c.h.b16 %v877
    %v983 = vunpack.c.l.b16 %v878
    %v984 = vunpack.c.h.b16 %v878
    %v985 = vunpack.c.l.b16 %v879
    %v986 = vunpack.c.l.b16 %v880
    %v987 = vunpack.c.h.b16 %v880
    %v988 = vunpack.c.l.b16 %v881
    %v989 = vunpack.c.h.b16 %v881
    %v990 = vunpack.c.l.b16 %v882
    %v991 = vunpack.c.l.b16 %v883
    %v992 = vunpack.c.h.b16 %v883
    %v993 = vunpack.c.l.b16 %v884
    %v994 = vunpack.c.h.b16 %v884
    %v995 = vunpack.c.l.b16 %v885
    %v996 = vunpack.c.l.b16 %v886
    %v997 = vunpack.c.h.b16 %v886
    %v998 = vunpack.c.l.b16 %v887
    %v999 = vunpack.c.h.b16 %v887
    %v1000 = vunpack.c.l.b16 %v888
    %v1001 = vunpack.c.l.b16 %v889
    %v1002 = vunpack.c.h.b16 %v889
    %v1003 = vunpack.c.l.b16 %v890
    %v1004 = vunpack.c.h.b16 %v890
    %v1005 = vunpack.c.l.b16 %v891
    %v1006 = vunpack.c.l.b16 %v892
    %v1007 = vunpack.c.h.b16 %v892
    %v1008 = vunpack.c.l.b16 %v893
    %v1009 = vunpack.c.h.b16 %v893
    %v1010 = vunpack.c.l.b16 %v894
    %v1011 = vunpack.c.l.b16 %v895
    %v1012 = vunpack.c.h.b16 %v895
    %v1013 = vunpack.c.l.b16 %v896
    %v1014 = vunpack.c.h.b16 %v896
    %v1015 = vunpack.c.l.b16 %v897
    %v1016 = vunpack.c.l.b16 %v898
    %v1017 = vunpack.c.h.b16 %v898
    %v1018 = vunpack.c.l.b16 %v899
    %v1019 = vunpack.c.h.b16 %v899
    %v1020 = vunpack.c.l.b16 %v900
    %v1021 = vunpack.c.l.b16 %v901
    %v1022 = vunpack.c.h.b16 %v901
    %v1023 = vunpack.c.l.b16 %v902
    %v1024 = vunpack.c.h.b16 %v902
    %v1025 = vunpack.c.l.b16 %v903
    %v1026 = vunpack.c.l.b16 %v904
    %v1027 = vunpack.c.h.b16 %v904
    %v1028 = vunpack.c.l.b16 %v905
    %v1029 = vunpack.c.h.b16 %v905
    %v1030 = vunpack.c.l.b16 %v906
    %v1031 = vunpack.c.l.b16 %v907
    %v1032 = vunpack.c.h.b16 %v907
    %v1033 = vunpack.c.l.b16 %v908
    %v1034 = vunpack.c.h.b16 %v908
    %v1035 = vunpack.c.l.b16 %v909
    %v1036 = vunpack.c.l.b16 %v910
    %v1037 = vunpack.c.h.b16 %v910
    %v1038 = vunpack.c.l.b16 %v911
    %v1039 = vunpack.c.h.b16 %v911
    %v1040 = vunpack.c.l.b16 %v912
    %v1041 = vpack.c.b16 %v966, %v961
    %v1042 = vpack.c.b16 %v967, %v962
    %v1043 = vpack.c.b16 %v968, %v963
    %v1044 = vpack.c.b16 %v969, %v964
    %v1045 = vpack.c.b16 %v970, %v965
    %v1046 = vpack.c.b16 %v976, %v971
    %v1047 = vpack.c.b16 %v977, %v972
    %v1048 = vpack.c.b16 %v978, %v973
    %v1049 = vpack.c.b16 %v979, %v974
    %v1050 = vpack.c.b16 %v980, %v975
    %v1051 = vpack.c.b16 %v986, %v981
    %v1052 = vpack.c.b16 %v987, %v982
    %v1053 = vpack.c.b16 %v988, %v983
    %v1054 = vpack.c.b16 %v989, %v984
    %v1055 = vpack.c.b16 %v990, %v985
    %v1056 = vpack.c.b16 %v996, %v991
    %v1057 = vpack.c.b16 %v997, %v992
    %v1058 = vpack.c.b16 %v998, %v993
    %v1059 = vpack.c.b16 %v999, %v994
    %v1060 = vpack.c.b16 %v1000, %v995
    %v1061 = vpack.c.b16 %v1006, %v1001
    %v1062 = vpack.c.b16 %v1007, %v1002
    %v1063 = vpack.c.b16 %v1008, %v1003
    %v1064 = vpack.c.b16 %v1009, %v1004
    %v1065 = vpack.c.b16 %v1010, %v1005
    %v1066 = vpack.c.b16 %v1016, %v1011
    %v1067 = vpack.c.b16 %v1017, %v1012
    %v1068 = vpack.c.b16 %v1018, %v1013
    %v1069 = vpack.c.b16 %v1019, %v1014
    %v1070 = vpack.c.b16 %v1020, %v1015
    %v1071 = vpack.c.b16 %v1026, %v1021
    %v1072 = vpack.c.b16 %v1027, %v1022
    %v1073 = vpack.c.b16 %v1028, %v1023
    %v1074 = vpack.c.b16 %v1029, %v1024
    %v1075 = vpack.c.b16 %v1030, %v1025
    %v1076 = vpack.c.b16 %v1036, %v1031
    %v1077 = vpack.c.b16 %v1037, %v1032
    %v1078 = vpack.c.b16 %v1038, %v1033
    %v1079 = vpack.c.b16 %v1039, %v1034
    %v1080 = vpack.c.b16 %v1040, %v1035
    %1121 = vmatprep.subr.bf16.mxu0 %v1042
    %1122 = vmatpush1.bf16.msra.mxu0 %v1041
    %1123 = vmatprep.subr.bf16.mxu0 %v1047
    %1124 = vmatpush1.bf16.msra.mxu0 %v1046
    %1125 = vmatprep.subr.bf16.mxu0 %v1052
    %1126 = vmatpush1.bf16.msra.mxu0 %v1051
    %1127 = vmatprep.subr.bf16.mxu0 %v1057
    %1128 = vmatpush1.bf16.msra.mxu0 %v1056
    %1129 = vmatprep.subr.bf16.mxu0 %v1062
    %1130 = vmatpush1.bf16.msra.mxu0 %v1061
    %1131 = vmatprep.subr.bf16.mxu0 %v1067
    %1132 = vmatpush1.bf16.msra.mxu0 %v1066
    %1133 = vmatprep.subr.bf16.mxu0 %v1072
    %1134 = vmatpush1.bf16.msra.mxu0 %v1071
    %1135 = vmatprep.subr.bf16.mxu0 %v1077
    %1136 = vmatpush1.bf16.msra.mxu0 %v1076
    %1137 = vmatprep.subr.bf16.mxu0 0
    %1138 = vmatpush1.bf16.msra.mxu0 0
    %1139 = vmatprep.subr.bf16.mxu0 0
    %1140 = vmatpush1.bf16.msra.mxu0 0
    %1141 = vmatprep.subr.bf16.mxu0 0
    %1142 = vmatpush1.bf16.msra.mxu0 0
    %1143 = vmatprep.subr.bf16.mxu0 0
    %1144 = vmatpush1.bf16.msra.mxu0 0
    %1145 = vmatprep.subr.bf16.mxu0 0
    %1146 = vmatpush1.bf16.msra.mxu0 0
    %1147 = vmatprep.subr.bf16.mxu0 0
    %1148 = vmatpush1.bf16.msra.mxu0 0
    %1149 = vmatprep.subr.bf16.mxu0 0
    %1150 = vmatpush1.bf16.msra.mxu0 0
    %1151 = vmatprep.subr.bf16.mxu0 0
    %1152 = vmatpush1.bf16.msra.mxu0 0
    %1153 = vmatprep.mubr.bf16.mxu0 0
    %1154 = vmatmul.mubr.bf16.gmra.mrb[0].mxu0 %v188
    %v1155 = vpop.f32.mrb[0].mxu0
    %v1156 = vadd.f32 0.0, %v1155
    %v1157 = vpop.f32.mrb[0].mxu0
    %v1158 = vadd.f32 0.0, %v1157
    %v1159 = vpop.f32.mrb[0].mxu0
    %v1160 = vadd.f32 0.0, %v1159
    %v1161 = vpop.f32.mrb[0].mxu0
    %v1162 = vadd.f32 0.0, %v1161
    %1163 = vdwg.mxu0
    %1164 = vmatprep.subr.bf16.mxu0 %v1044
    %1165 = vmatpush1.bf16.msra.mxu0 %v1043
    %1166 = vmatprep.subr.bf16.mxu0 %v1049
    %1167 = vmatpush1.bf16.msra.mxu0 %v1048
    %1168 = vmatprep.subr.bf16.mxu0 %v1054
    %1169 = vmatpush1.bf16.msra.mxu0 %v1053
    %1170 = vmatprep.subr.bf16.mxu0 %v1059
    %1171 = vmatpush1.bf16.msra.mxu0 %v1058
    %1172 = vmatprep.subr.bf16.mxu0 %v1064
    %1173 = vmatpush1.bf16.msra.mxu0 %v1063
    %1174 = vmatprep.subr.bf16.mxu0 %v1069
    %1175 = vmatpush1.bf16.msra.mxu0 %v1068
    %1176 = vmatprep.subr.bf16.mxu0 %v1074
    %1177 = vmatpush1.bf16.msra.mxu0 %v1073
    %1178 = vmatprep.subr.bf16.mxu0 %v1079
    %1179 = vmatpush1.bf16.msra.mxu0 %v1078
    %1180 = vmatprep.subr.bf16.mxu0 0
    %1181 = vmatpush1.bf16.msra.mxu0 0
    %1182 = vmatprep.subr.bf16.mxu0 0
    %1183 = vmatpush1.bf16.msra.mxu0 0
    %1184 = vmatprep.subr.bf16.mxu0 0
    %1185 = vmatpush1.bf16.msra.mxu0 0
    %1186 = vmatprep.subr.bf16.mxu0 0
    %1187 = vmatpush1.bf16.msra.mxu0 0
    %1188 = vmatprep.subr.bf16.mxu0 0
    %1189 = vmatpush1.bf16.msra.mxu0 0
    %1190 = vmatprep.subr.bf16.mxu0 0
    %1191 = vmatpush1.bf16.msra.mxu0 0
    %1192 = vmatprep.subr.bf16.mxu0 0
    %1193 = vmatpush1.bf16.msra.mxu0 0
    %1194 = vmatprep.subr.bf16.mxu0 0
    %1195 = vmatpush1.bf16.msra.mxu0 0
    %1196 = vmatprep.mubr.bf16.mxu0 0
    %1197 = vmatmul.mubr.bf16.gmra.mrb[0].mxu0 %v188
    %v1198 = vpop.f32.mrb[0].mxu0
    %v1199 = vadd.f32 0.0, %v1198
    %v1200 = vpop.f32.mrb[0].mxu0
    %v1201 = vadd.f32 0.0, %v1200
    %v1202 = vpop.f32.mrb[0].mxu0
    %v1203 = vadd.f32 0.0, %v1202
    %v1204 = vpop.f32.mrb[0].mxu0
    %v1205 = vadd.f32 0.0, %v1204
    %1206 = vdwg.mxu0
    %1207 = vmatprep.subr.bf16.mxu0 0
    %1208 = vmatpush1.bf16.msra.mxu0 %v1045
    %1209 = vmatprep.subr.bf16.mxu0 0
    %1210 = vmatpush1.bf16.msra.mxu0 %v1050
    %1211 = vmatprep.subr.bf16.mxu0 0
    %1212 = vmatpush1.bf16.msra.mxu0 %v1055
    %1213 = vmatprep.subr.bf16.mxu0 0
    %1214 = vmatpush1.bf16.msra.mxu0 %v1060
    %1215 = vmatprep.subr.bf16.mxu0 0
    %1216 = vmatpush1.bf16.msra.mxu0 %v1065
    %1217 = vmatprep.subr.bf16.mxu0 0
    %1218 = vmatpush1.bf16.msra.mxu0 %v1070
    %1219 = vmatprep.subr.bf16.mxu0 0
    %1220 = vmatpush1.bf16.msra.mxu0 %v1075
    %1221 = vmatprep.subr.bf16.mxu0 0
    %1222 = vmatpush1.bf16.msra.mxu0 %v1080
    %1223 = vmatprep.subr.bf16.mxu0 0
    %1224 = vmatpush1.bf16.msra.mxu0 0
    %1225 = vmatprep.subr.bf16.mxu0 0
    %1226 = vmatpush1.bf16.msra.mxu0 0
    %1227 = vmatprep.subr.bf16.mxu0 0
    %1228 = vmatpush1.bf16.msra.mxu0 0
    %1229 = vmatprep.subr.bf16.mxu0 0
    %1230 = vmatpush1.bf16.msra.mxu0 0
    %1231 = vmatprep.subr.bf16.mxu0 0
    %1232 = vmatpush1.bf16.msra.mxu0 0
    %1233 = vmatprep.subr.bf16.mxu0 0
    %1234 = vmatpush1.bf16.msra.mxu0 0
    %1235 = vmatprep.subr.bf16.mxu0 0
    %1236 = vmatpush1.bf16.msra.mxu0 0
    %1237 = vmatprep.subr.bf16.mxu0 0
    %1238 = vmatpush1.bf16.msra.mxu0 0
    %1239 = vmatprep.mubr.bf16.mxu0 0
    %1240 = vmatmul.mubr.bf16.gmra.mrb[0].mxu0 %v188
    %v1241 = vpop.f32.mrb[0].mxu0
    %v1242 = vadd.f32 0.0, %v1241
    %v1243 = vpop.f32.mrb[0].mxu0
    %v1244 = vpop.f32.mrb[0].mxu0
    %v1245 = vadd.f32 0.0, %v1244
    %v1246 = vpop.f32.mrb[0].mxu0
    %1247 = vdwg.mxu0
    %v1248 = vadd.f32 %v773, %v1156
    %v1249 = vadd.f32 %v775, %v1158
    %v1250 = vadd.f32 %v816, %v1199
    %v1251 = vadd.f32 %v818, %v1201
    %v1252 = vadd.f32 %v859, %v1242
    %v1253 = vadd.f32 %v777, %v1160
    %v1254 = vadd.f32 %v779, %v1162
    %v1255 = vadd.f32 %v820, %v1203
    %v1256 = vadd.f32 %v822, %v1205
    %v1257 = vadd.f32 %v862, %v1245
    %v1258 = vld [vmem:[#allocation11] sm:$0x1f]
    %v1260 = vlaneseq
    %v1261 = vshrl.u32 %v1260, 7
    %v1262 = vsub.s32 0, %v1261
    %v1263 = vrot.slane %v1258, %v1262
    %v1264 = vlaneseq
    %v1265 = vshrl.u32 %v1264, 7
    %v1266 = vsub.s32 1, %v1265
    %v1267 = vrot.slane %v1258, %v1266
    %v1268 = vlaneseq
    %v1269 = vshrl.u32 %v1268, 7
    %v1270 = vsub.s32 2, %v1269
    %v1271 = vrot.slane %v1258, %v1270
    %v1272 = vlaneseq
    %v1273 = vshrl.u32 %v1272, 7
    %v1274 = vsub.s32 3, %v1273
    %v1275 = vrot.slane %v1258, %v1274
    %v1276 = vlaneseq
    %v1277 = vshrl.u32 %v1276, 7
    %v1278 = vsub.s32 4, %v1277
    %v1279 = vrot.slane %v1258, %v1278
    %v1285 = vadd.f32 %v1248, %v1263
    %v1286 = vadd.f32 %v1249, %v1267
    %v1287 = vadd.f32 %v1250, %v1271
    %v1288 = vadd.f32 %v1251, %v1275
    %v1289 = vadd.f32 %v1252, %v1279
    %v1290 = vadd.f32 %v1253, %v1263
    %v1291 = vadd.f32 %v1254, %v1267
    %v1292 = vadd.f32 %v1255, %v1271
    %v1293 = vadd.f32 %v1256, %v1275
    %v1294 = vadd.f32 %v1257, %v1279
    %v1295 = vmul.f32 %v1285, 0.5
    %v1296 = vmul.f32 %v1290, 0.5
    %v1297 = vtanh.pop %v1295
    %v1298 = vtanh.pop %v1296
    %v1299 = vmul.f32 %v1297, 0.5
    %v1300 = vmul.f32 %v1298, 0.5
    %v1301 = vadd.f32 %v1299, 0.5
    %v1302 = vadd.f32 %v1300, 0.5
    %v1303 = vmul.f32 %v1286, 0.5
    %v1304 = vmul.f32 %v1291, 0.5
    %v1305 = vtanh.pop %v1303
    %v1306 = vtanh.pop %v1304
    %v1307 = vmul.f32 %v1305, 0.5
    %v1308 = vmul.f32 %v1306, 0.5
    %v1309 = vadd.f32 %v1307, 0.5
    %v1310 = vadd.f32 %v1308, 0.5
    %v1311 = vmul.f32 %v1287, 0.5
    %v1312 = vmul.f32 %v1292, 0.5
    %v1313 = vtanh.pop %v1311
    %v1314 = vtanh.pop %v1312
    %v1315 = vmul.f32 %v1313, 0.5
    %v1316 = vmul.f32 %v1314, 0.5
    %v1317 = vadd.f32 %v1315, 0.5
    %v1318 = vadd.f32 %v1316, 0.5
    %v1319 = vmax.f32 %v1288, %v1289
    %v1320 = vmax.f32 %v1293, %v1294
    %v1321 = vmul.f32 %v1309, %v186
    %v1322 = vmul.f32 %v1310, %v187
    %v1323 = vmul.f32 %v1301, %v1319
    %v1324 = vmul.f32 %v1302, %v1320
    %v1325 = vadd.f32 %v1321, %v1323
    %v1326 = vadd.f32 %v1322, %v1324
    %v1327 = vtanh.pop %v1325
    %v1328 = vtanh.pop %v1326
    %v1329 = vmul.f32 %v1317, %v1327
    %v1330 = vmul.f32 %v1318, %v1328
    %1331 = vst [vmem:[#allocation22] sm:$0xff] %v1329
    %1332 = vst [vmem:[#allocation22 + $0x8] sm:$0xff] %v1330
    %1333 = vst [vmem:[#allocation23] sm:$0xff] %v1325
    %1334 = vst [vmem:[#allocation23 + $0x8] sm:$0xff] %v1326
    %v1335 = vpack.c.bf16 %v1330, %v1329
    %s1336 = scalar_lea.vmem [#allocation5], 16
    %v1337 = vld [vmem:[%s1336] sm:$0xff]
    %v1338 = vld [vmem:[%s1336 + $0x8] sm:$0xff]
    %s1339 = scalar_lea.vmem [#allocation7], 16
    %v1340 = vld [vmem:[%s1339] sm:$0xff]
    %v1341 = vld [vmem:[%s1339 + $0x8] sm:$0xff]
    %v1342 = vpack.c.bf16 %v1338, %v1337
    %v1343 = vld [vmem:[#allocation13] sm:$0xff]
    %v1344 = vld [vmem:[#allocation13 + $0x8] sm:$0xff]
    %v1345 = vld [vmem:[#allocation13 + $0x10] sm:$0xf]
    %v1346 = vld [vmem:[#allocation13 + $0x14] sm:$0xff]
    %v1347 = vld [vmem:[#allocation13 + $0x1c] sm:$0xff]
    %v1348 = vld [vmem:[#allocation13 + $0x24] sm:$0xf]
    %v1349 = vld [vmem:[#allocation13 + $0x28] sm:$0xff]
    %v1350 = vld [vmem:[#allocation13 + $0x30] sm:$0xff]
    %v1351 = vld [vmem:[#allocation13 + $0x38] sm:$0xf]
    %v1352 = vld [vmem:[#allocation13 + $0x3c] sm:$0xff]
    %v1353 = vld [vmem:[#allocation13 + $0x44] sm:$0xff]
    %v1354 = vld [vmem:[#allocation13 + $0x4c] sm:$0xf]
    %v1355 = vld [vmem:[#allocation13 + $0x50] sm:$0xff]
    %v1356 = vld [vmem:[#allocation13 + $0x58] sm:$0xff]
    %v1357 = vld [vmem:[#allocation13 + $0x60] sm:$0xf]
    %v1358 = vld [vmem:[#allocation13 + $0x64] sm:$0xff]
    %v1359 = vld [vmem:[#allocation13 + $0x6c] sm:$0xff]
    %v1360 = vld [vmem:[#allocation13 + $0x74] sm:$0xf]
    %v1361 = vld [vmem:[#allocation13 + $0x78] sm:$0xff]
    %v1362 = vld [vmem:[#allocation13 + $0x80] sm:$0xff]
    %v1363 = vld [vmem:[#allocation13 + $0x88] sm:$0xf]
    %v1364 = vld [vmem:[#allocation13 + $0x8c] sm:$0xff]
    %v1365 = vld [vmem:[#allocation13 + $0x94] sm:$0xff]
    %v1366 = vld [vmem:[#allocation13 + $0x9c] sm:$0xf]
    %v1367 = vld [vmem:[#allocation13 + $0xa0] sm:$0xff]
    %v1368 = vld [vmem:[#allocation13 + $0xa8] sm:$0xff]
    %v1369 = vld [vmem:[#allocation13 + $0xb0] sm:$0xf]
    %v1370 = vld [vmem:[#allocation13 + $0xb4] sm:$0xff]
    %v1371 = vld [vmem:[#allocation13 + $0xbc] sm:$0xff]
    %v1372 = vld [vmem:[#allocation13 + $0xc4] sm:$0xf]
    %v1373 = vld [vmem:[#allocation13 + $0xc8] sm:$0xff]
    %v1374 = vld [vmem:[#allocation13 + $0xd0] sm:$0xff]
    %v1375 = vld [vmem:[#allocation13 + $0xd8] sm:$0xf]
    %v1376 = vld [vmem:[#allocation13 + $0xdc] sm:$0xff]
    %v1377 = vld [vmem:[#allocation13 + $0xe4] sm:$0xff]
    %v1378 = vld [vmem:[#allocation13 + $0xec] sm:$0xf]
    %v1379 = vld [vmem:[#allocation13 + $0xf0] sm:$0xff]
    %v1380 = vld [vmem:[#allocation13 + $0xf8] sm:$0xff]
    %v1381 = vld [vmem:[#allocation13 + $0x100] sm:$0xf]
    %v1382 = vld [vmem:[#allocation13 + $0x104] sm:$0xff]
    %v1383 = vld [vmem:[#allocation13 + $0x10c] sm:$0xff]
    %v1384 = vld [vmem:[#allocation13 + $0x114] sm:$0xf]
    %v1385 = vld [vmem:[#allocation13 + $0x118] sm:$0xff]
    %v1386 = vld [vmem:[#allocation13 + $0x120] sm:$0xff]
    %v1387 = vld [vmem:[#allocation13 + $0x128] sm:$0xf]
    %v1388 = vld [vmem:[#allocation13 + $0x12c] sm:$0xff]
    %v1389 = vld [vmem:[#allocation13 + $0x134] sm:$0xff]
    %v1390 = vld [vmem:[#allocation13 + $0x13c] sm:$0xf]
    %v1391 = vld [vmem:[#allocation14] sm:$0x1f]
    %v1393 = vlaneseq
    %v1394 = vshrl.u32 %v1393, 7
    %v1395 = vsub.s32 0, %v1394
    %v1396 = vrot.slane %v1391, %v1395
    %v1397 = vlaneseq
    %v1398 = vshrl.u32 %v1397, 7
    %v1399 = vsub.s32 1, %v1398
    %v1400 = vrot.slane %v1391, %v1399
    %v1401 = vlaneseq
    %v1402 = vshrl.u32 %v1401, 7
    %v1403 = vsub.s32 2, %v1402
    %v1404 = vrot.slane %v1391, %v1403
    %v1405 = vlaneseq
    %v1406 = vshrl.u32 %v1405, 7
    %v1407 = vsub.s32 3, %v1406
    %v1408 = vrot.slane %v1391, %v1407
    %v1409 = vlaneseq
    %v1410 = vshrl.u32 %v1409, 7
    %v1411 = vsub.s32 4, %v1410
    %v1412 = vrot.slane %v1391, %v1411
    %v1466 = vunpack.c.l.b16 %v1343
    %v1467 = vunpack.c.h.b16 %v1343
    %v1468 = vunpack.c.l.b16 %v1344
    %v1469 = vunpack.c.h.b16 %v1344
    %v1470 = vunpack.c.l.b16 %v1345
    %v1471 = vunpack.c.l.b16 %v1346
    %v1472 = vunpack.c.h.b16 %v1346
    %v1473 = vunpack.c.l.b16 %v1347
    %v1474 = vunpack.c.h.b16 %v1347
    %v1475 = vunpack.c.l.b16 %v1348
    %v1476 = vunpack.c.l.b16 %v1349
    %v1477 = vunpack.c.h.b16 %v1349
    %v1478 = vunpack.c.l.b16 %v1350
    %v1479 = vunpack.c.h.b16 %v1350
    %v1480 = vunpack.c.l.b16 %v1351
    %v1481 = vunpack.c.l.b16 %v1352
    %v1482 = vunpack.c.h.b16 %v1352
    %v1483 = vunpack.c.l.b16 %v1353
    %v1484 = vunpack.c.h.b16 %v1353
    %v1485 = vunpack.c.l.b16 %v1354
    %v1486 = vunpack.c.l.b16 %v1355
    %v1487 = vunpack.c.h.b16 %v1355
    %v1488 = vunpack.c.l.b16 %v1356
    %v1489 = vunpack.c.h.b16 %v1356
    %v1490 = vunpack.c.l.b16 %v1357
    %v1491 = vunpack.c.l.b16 %v1358
    %v1492 = vunpack.c.h.b16 %v1358
    %v1493 = vunpack.c.l.b16 %v1359
    %v1494 = vunpack.c.h.b16 %v1359
    %v1495 = vunpack.c.l.b16 %v1360
    %v1496 = vunpack.c.l.b16 %v1361
    %v1497 = vunpack.c.h.b16 %v1361
    %v1498 = vunpack.c.l.b16 %v1362
    %v1499 = vunpack.c.h.b16 %v1362
    %v1500 = vunpack.c.l.b16 %v1363
    %v1501 = vunpack.c.l.b16 %v1364
    %v1502 = vunpack.c.h.b16 %v1364
    %v1503 = vunpack.c.l.b16 %v1365
    %v1504 = vunpack.c.h.b16 %v1365
    %v1505 = vunpack.c.l.b16 %v1366
    %v1506 = vunpack.c.l.b16 %v1367
    %v1507 = vunpack.c.h.b16 %v1367
    %v1508 = vunpack.c.l.b16 %v1368
    %v1509 = vunpack.c.h.b16 %v1368
    %v1510 = vunpack.c.l.b16 %v1369
    %v1511 = vunpack.c.l.b16 %v1370
    %v1512 = vunpack.c.h.b16 %v1370
    %v1513 = vunpack.c.l.b16 %v1371
    %v1514 = vunpack.c.h.b16 %v1371
    %v1515 = vunpack.c.l.b16 %v1372
    %v1516 = vunpack.c.l.b16 %v1373
    %v1517 = vunpack.c.h.b16 %v1373
    %v1518 = vunpack.c.l.b16 %v1374
    %v1519 = vunpack.c.h.b16 %v1374
    %v1520 = vunpack.c.l.b16 %v1375
    %v1521 = vunpack.c.l.b16 %v1376
    %v1522 = vunpack.c.h.b16 %v1376
    %v1523 = vunpack.c.l.b16 %v1377
    %v1524 = vunpack.c.h.b16 %v1377
    %v1525 = vunpack.c.l.b16 %v1378
    %v1526 = vunpack.c.l.b16 %v1379
    %v1527 = vunpack.c.h.b16 %v1379
    %v1528 = vunpack.c.l.b16 %v1380
    %v1529 = vunpack.c.h.b16 %v1380
    %v1530 = vunpack.c.l.b16 %v1381
    %v1531 = vunpack.c.l.b16 %v1382
    %v1532 = vunpack.c.h.b16 %v1382
    %v1533 = vunpack.c.l.b16 %v1383
    %v1534 = vunpack.c.h.b16 %v1383
    %v1535 = vunpack.c.l.b16 %v1384
    %v1536 = vunpack.c.l.b16 %v1385
    %v1537 = vunpack.c.h.b16 %v1385
    %v1538 = vunpack.c.l.b16 %v1386
    %v1539 = vunpack.c.h.b16 %v1386
    %v1540 = vunpack.c.l.b16 %v1387
    %v1541 = vunpack.c.l.b16 %v1388
    %v1542 = vunpack.c.h.b16 %v1388
    %v1543 = vunpack.c.l.b16 %v1389
    %v1544 = vunpack.c.h.b16 %v1389
    %v1545 = vunpack.c.l.b16 %v1390
    %v1546 = vpack.c.b16 %v1471, %v1466
    %v1547 = vpack.c.b16 %v1472, %v1467
    %v1548 = vpack.c.b16 %v1473, %v1468
    %v1549 = vpack.c.b16 %v1474, %v1469
    %v1550 = vpack.c.b16 %v1475, %v1470
    %v1551 = vpack.c.b16 %v1481, %v1476
    %v1552 = vpack.c.b16 %v1482, %v1477
    %v1553 = vpack.c.b16 %v1483, %v1478
    %v1554 = vpack.c.b16 %v1484, %v1479
    %v1555 = vpack.c.b16 %v1485, %v1480
    %v1556 = vpack.c.b16 %v1491, %v1486
    %v1557 = vpack.c.b16 %v1492, %v1487
    %v1558 = vpack.c.b16 %v1493, %v1488
    %v1559 = vpack.c.b16 %v1494, %v1489
    %v1560 = vpack.c.b16 %v1495, %v1490
    %v1561 = vpack.c.b16 %v1501, %v1496
    %v1562 = vpack.c.b16 %v1502, %v1497
    %v1563 = vpack.c.b16 %v1503, %v1498
    %v1564 = vpack.c.b16 %v1504, %v1499
    %v1565 = vpack.c.b16 %v1505, %v1500
    %v1566 = vpack.c.b16 %v1511, %v1506
    %v1567 = vpack.c.b16 %v1512, %v1507
    %v1568 = vpack.c.b16 %v1513, %v1508
    %v1569 = vpack.c.b16 %v1514, %v1509
    %v1570 = vpack.c.b16 %v1515, %v1510
    %v1571 = vpack.c.b16 %v1521, %v1516
    %v1572 = vpack.c.b16 %v1522, %v1517
    %v1573 = vpack.c.b16 %v1523, %v1518
    %v1574 = vpack.c.b16 %v1524, %v1519
    %v1575 = vpack.c.b16 %v1525, %v1520
    %v1576 = vpack.c.b16 %v1531, %v1526
    %v1577 = vpack.c.b16 %v1532, %v1527
    %v1578 = vpack.c.b16 %v1533, %v1528
    %v1579 = vpack.c.b16 %v1534, %v1529
    %v1580 = vpack.c.b16 %v1535, %v1530
    %v1581 = vpack.c.b16 %v1541, %v1536
    %v1582 = vpack.c.b16 %v1542, %v1537
    %v1583 = vpack.c.b16 %v1543, %v1538
    %v1584 = vpack.c.b16 %v1544, %v1539
    %v1585 = vpack.c.b16 %v1545, %v1540
    %1626 = vmatprep.subr.bf16.mxu0 %v1547
    %1627 = vmatpush1.bf16.msra.mxu0 %v1546
    %1628 = vmatprep.subr.bf16.mxu0 %v1552
    %1629 = vmatpush1.bf16.msra.mxu0 %v1551
    %1630 = vmatprep.subr.bf16.mxu0 %v1557
    %1631 = vmatpush1.bf16.msra.mxu0 %v1556
    %1632 = vmatprep.subr.bf16.mxu0 %v1562
    %1633 = vmatpush1.bf16.msra.mxu0 %v1561
    %1634 = vmatprep.subr.bf16.mxu0 %v1567
    %1635 = vmatpush1.bf16.msra.mxu0 %v1566
    %1636 = vmatprep.subr.bf16.mxu0 %v1572
    %1637 = vmatpush1.bf16.msra.mxu0 %v1571
    %1638 = vmatprep.subr.bf16.mxu0 %v1577
    %1639 = vmatpush1.bf16.msra.mxu0 %v1576
    %1640 = vmatprep.subr.bf16.mxu0 %v1582
    %1641 = vmatpush1.bf16.msra.mxu0 %v1581
    %1642 = vmatprep.subr.bf16.mxu0 0
    %1643 = vmatpush1.bf16.msra.mxu0 0
    %1644 = vmatprep.subr.bf16.mxu0 0
    %1645 = vmatpush1.bf16.msra.mxu0 0
    %1646 = vmatprep.subr.bf16.mxu0 0
    %1647 = vmatpush1.bf16.msra.mxu0 0
    %1648 = vmatprep.subr.bf16.mxu0 0
    %1649 = vmatpush1.bf16.msra.mxu0 0
    %1650 = vmatprep.subr.bf16.mxu0 0
    %1651 = vmatpush1.bf16.msra.mxu0 0
    %1652 = vmatprep.subr.bf16.mxu0 0
    %1653 = vmatpush1.bf16.msra.mxu0 0
    %1654 = vmatprep.subr.bf16.mxu0 0
    %1655 = vmatpush1.bf16.msra.mxu0 0
    %1656 = vmatprep.subr.bf16.mxu0 0
    %1657 = vmatpush1.bf16.msra.mxu0 0
    %1658 = vmatprep.mubr.bf16.mxu0 0
    %1659 = vmatmul.mubr.bf16.gmra.mrb[0].mxu0 %v1335
    %v1660 = vpop.f32.mrb[0].mxu0
    %v1661 = vadd.f32 %v1396, %v1660
    %v1662 = vpop.f32.mrb[0].mxu0
    %v1663 = vadd.f32 %v1400, %v1662
    %v1664 = vpop.f32.mrb[0].mxu0
    %v1665 = vadd.f32 %v1396, %v1664
    %v1666 = vpop.f32.mrb[0].mxu0
    %v1667 = vadd.f32 %v1400, %v1666
    %1668 = vdwg.mxu0
    %1669 = vmatprep.subr.bf16.mxu0 %v1549
    %1670 = vmatpush1.bf16.msra.mxu0 %v1548
    %1671 = vmatprep.subr.bf16.mxu0 %v1554
    %1672 = vmatpush1.bf16.msra.mxu0 %v1553
    %1673 = vmatprep.subr.bf16.mxu0 %v1559
    %1674 = vmatpush1.bf16.msra.mxu0 %v1558
    %1675 = vmatprep.subr.bf16.mxu0 %v1564
    %1676 = vmatpush1.bf16.msra.mxu0 %v1563
    %1677 = vmatprep.subr.bf16.mxu0 %v1569
    %1678 = vmatpush1.bf16.msra.mxu0 %v1568
    %1679 = vmatprep.subr.bf16.mxu0 %v1574
    %1680 = vmatpush1.bf16.msra.mxu0 %v1573
    %1681 = vmatprep.subr.bf16.mxu0 %v1579
    %1682 = vmatpush1.bf16.msra.mxu0 %v1578
    %1683 = vmatprep.subr.bf16.mxu0 %v1584
    %1684 = vmatpush1.bf16.msra.mxu0 %v1583
    %1685 = vmatprep.subr.bf16.mxu0 0
    %1686 = vmatpush1.bf16.msra.mxu0 0
    %1687 = vmatprep.subr.bf16.mxu0 0
    %1688 = vmatpush1.bf16.msra.mxu0 0
    %1689 = vmatprep.subr.bf16.mxu0 0
    %1690 = vmatpush1.bf16.msra.mxu0 0
    %1691 = vmatprep.subr.bf16.mxu0 0
    %1692 = vmatpush1.bf16.msra.mxu0 0
    %1693 = vmatprep.subr.bf16.mxu0 0
    %1694 = vmatpush1.bf16.msra.mxu0 0
    %1695 = vmatprep.subr.bf16.mxu0 0
    %1696 = vmatpush1.bf16.msra.mxu0 0
    %1697 = vmatprep.subr.bf16.mxu0 0
    %1698 = vmatpush1.bf16.msra.mxu0 0
    %1699 = vmatprep.subr.bf16.mxu0 0
    %1700 = vmatpush1.bf16.msra.mxu0 0
    %1701 = vmatprep.mubr.bf16.mxu0 0
    %1702 = vmatmul.mubr.bf16.gmra.mrb[0].mxu0 %v1335
    %v1703 = vpop.f32.mrb[0].mxu0
    %v1704 = vadd.f32 %v1404, %v1703
    %v1705 = vpop.f32.mrb[0].mxu0
    %v1706 = vadd.f32 %v1408, %v1705
    %v1707 = vpop.f32.mrb[0].mxu0
    %v1708 = vadd.f32 %v1404, %v1707
    %v1709 = vpop.f32.mrb[0].mxu0
    %v1710 = vadd.f32 %v1408, %v1709
    %1711 = vdwg.mxu0
    %1712 = vmatprep.subr.bf16.mxu0 0
    %1713 = vmatpush1.bf16.msra.mxu0 %v1550
    %1714 = vmatprep.subr.bf16.mxu0 0
    %1715 = vmatpush1.bf16.msra.mxu0 %v1555
    %1716 = vmatprep.subr.bf16.mxu0 0
    %1717 = vmatpush1.bf16.msra.mxu0 %v1560
    %1718 = vmatprep.subr.bf16.mxu0 0
    %1719 = vmatpush1.bf16.msra.mxu0 %v1565
    %1720 = vmatprep.subr.bf16.mxu0 0
    %1721 = vmatpush1.bf16.msra.mxu0 %v1570
    %1722 = vmatprep.subr.bf16.mxu0 0
    %1723 = vmatpush1.bf16.msra.mxu0 %v1575
    %1724 = vmatprep.subr.bf16.mxu0 0
    %1725 = vmatpush1.bf16.msra.mxu0 %v1580
    %1726 = vmatprep.subr.bf16.mxu0 0
    %1727 = vmatpush1.bf16.msra.mxu0 %v1585
    %1728 = vmatprep.subr.bf16.mxu0 0
    %1729 = vmatpush1.bf16.msra.mxu0 0
    %1730 = vmatprep.subr.bf16.mxu0 0
    %1731 = vmatpush1.bf16.msra.mxu0 0
    %1732 = vmatprep.subr.bf16.mxu0 0
    %1733 = vmatpush1.bf16.msra.mxu0 0
    %1734 = vmatprep.subr.bf16.mxu0 0
    %1735 = vmatpush1.bf16.msra.mxu0 0
    %1736 = vmatprep.subr.bf16.mxu0 0
    %1737 = vmatpush1.bf16.msra.mxu0 0
    %1738 = vmatprep.subr.bf16.mxu0 0
    %1739 = vmatpush1.bf16.msra.mxu0 0
    %1740 = vmatprep.subr.bf16.mxu0 0
    %1741 = vmatpush1.bf16.msra.mxu0 0
    %1742 = vmatprep.subr.bf16.mxu0 0
    %1743 = vmatpush1.bf16.msra.mxu0 0
    %1744 = vmatprep.mubr.bf16.mxu0 0
    %1745 = vmatmul.mubr.bf16.gmra.mrb[0].mxu0 %v1335
    %v1746 = vpop.f32.mrb[0].mxu0
    %v1747 = vadd.f32 %v1412, %v1746
    %v1748 = vpop.f32.mrb[0].mxu0
    %v1749 = vpop.f32.mrb[0].mxu0
    %v1750 = vadd.f32 %v1412, %v1749
    %v1751 = vpop.f32.mrb[0].mxu0
    %1752 = vdwg.mxu0
    %s1753 = scalar_lea.vmem [#allocation10], 320
    %v1754 = vld [vmem:[%s1753] sm:$0xff]
    %v1755 = vld [vmem:[%s1753 + $0x8] sm:$0xff]
    %v1756 = vld [vmem:[%s1753 + $0x10] sm:$0xf]
    %v1757 = vld [vmem:[%s1753 + $0x14] sm:$0xff]
    %v1758 = vld [vmem:[%s1753 + $0x1c] sm:$0xff]
    %v1759 = vld [vmem:[%s1753 + $0x24] sm:$0xf]
    %v1760 = vld [vmem:[%s1753 + $0x28] sm:$0xff]
    %v1761 = vld [vmem:[%s1753 + $0x30] sm:$0xff]
    %v1762 = vld [vmem:[%s1753 + $0x38] sm:$0xf]
    %v1763 = vld [vmem:[%s1753 + $0x3c] sm:$0xff]
    %v1764 = vld [vmem:[%s1753 + $0x44] sm:$0xff]
    %v1765 = vld [vmem:[%s1753 + $0x4c] sm:$0xf]
    %v1766 = vld [vmem:[%s1753 + $0x50] sm:$0xff]
    %v1767 = vld [vmem:[%s1753 + $0x58] sm:$0xff]
    %v1768 = vld [vmem:[%s1753 + $0x60] sm:$0xf]
    %v1769 = vld [vmem:[%s1753 + $0x64] sm:$0xff]
    %v1770 = vld [vmem:[%s1753 + $0x6c] sm:$0xff]
    %v1771 = vld [vmem:[%s1753 + $0x74] sm:$0xf]
    %v1772 = vld [vmem:[%s1753 + $0x78] sm:$0xff]
    %v1773 = vld [vmem:[%s1753 + $0x80] sm:$0xff]
    %v1774 = vld [vmem:[%s1753 + $0x88] sm:$0xf]
    %v1775 = vld [vmem:[%s1753 + $0x8c] sm:$0xff]
    %v1776 = vld [vmem:[%s1753 + $0x94] sm:$0xff]
    %v1777 = vld [vmem:[%s1753 + $0x9c] sm:$0xf]
    %v1778 = vld [vmem:[%s1753 + $0xa0] sm:$0xff]
    %v1779 = vld [vmem:[%s1753 + $0xa8] sm:$0xff]
    %v1780 = vld [vmem:[%s1753 + $0xb0] sm:$0xf]
    %v1781 = vld [vmem:[%s1753 + $0xb4] sm:$0xff]
    %v1782 = vld [vmem:[%s1753 + $0xbc] sm:$0xff]
    %v1783 = vld [vmem:[%s1753 + $0xc4] sm:$0xf]
    %v1784 = vld [vmem:[%s1753 + $0xc8] sm:$0xff]
    %v1785 = vld [vmem:[%s1753 + $0xd0] sm:$0xff]
    %v1786 = vld [vmem:[%s1753 + $0xd8] sm:$0xf]
    %v1787 = vld [vmem:[%s1753 + $0xdc] sm:$0xff]
    %v1788 = vld [vmem:[%s1753 + $0xe4] sm:$0xff]
    %v1789 = vld [vmem:[%s1753 + $0xec] sm:$0xf]
    %v1790 = vld [vmem:[%s1753 + $0xf0] sm:$0xff]
    %v1791 = vld [vmem:[%s1753 + $0xf8] sm:$0xff]
    %v1792 = vld [vmem:[%s1753 + $0x100] sm:$0xf]
    %v1793 = vld [vmem:[%s1753 + $0x104] sm:$0xff]
    %v1794 = vld [vmem:[%s1753 + $0x10c] sm:$0xff]
    %v1795 = vld [vmem:[%s1753 + $0x114] sm:$0xf]
    %v1796 = vld [vmem:[%s1753 + $0x118] sm:$0xff]
    %v1797 = vld [vmem:[%s1753 + $0x120] sm:$0xff]
    %v1798 = vld [vmem:[%s1753 + $0x128] sm:$0xf]
    %v1799 = vld [vmem:[%s1753 + $0x12c] sm:$0xff]
    %v1800 = vld [vmem:[%s1753 + $0x134] sm:$0xff]
    %v1801 = vld [vmem:[%s1753 + $0x13c] sm:$0xf]
    %v1850 = vunpack.c.l.b16 %v1754
    %v1851 = vunpack.c.h.b16 %v1754
    %v1852 = vunpack.c.l.b16 %v1755
    %v1853 = vunpack.c.h.b16 %v1755
    %v1854 = vunpack.c.l.b16 %v1756
    %v1855 = vunpack.c.l.b16 %v1757
    %v1856 = vunpack.c.h.b16 %v1757
    %v1857 = vunpack.c.l.b16 %v1758
    %v1858 = vunpack.c.h.b16 %v1758
    %v1859 = vunpack.c.l.b16 %v1759
    %v1860 = vunpack.c.l.b16 %v1760
    %v1861 = vunpack.c.h.b16 %v1760
    %v1862 = vunpack.c.l.b16 %v1761
    %v1863 = vunpack.c.h.b16 %v1761
    %v1864 = vunpack.c.l.b16 %v1762
    %v1865 = vunpack.c.l.b16 %v1763
    %v1866 = vunpack.c.h.b16 %v1763
    %v1867 = vunpack.c.l.b16 %v1764
    %v1868 = vunpack.c.h.b16 %v1764
    %v1869 = vunpack.c.l.b16 %v1765
    %v1870 = vunpack.c.l.b16 %v1766
    %v1871 = vunpack.c.h.b16 %v1766
    %v1872 = vunpack.c.l.b16 %v1767
    %v1873 = vunpack.c.h.b16 %v1767
    %v1874 = vunpack.c.l.b16 %v1768
    %v1875 = vunpack.c.l.b16 %v1769
    %v1876 = vunpack.c.h.b16 %v1769
    %v1877 = vunpack.c.l.b16 %v1770
    %v1878 = vunpack.c.h.b16 %v1770
    %v1879 = vunpack.c.l.b16 %v1771
    %v1880 = vunpack.c.l.b16 %v1772
    %v1881 = vunpack.c.h.b16 %v1772
    %v1882 = vunpack.c.l.b16 %v1773
    %v1883 = vunpack.c.h.b16 %v1773
    %v1884 = vunpack.c.l.b16 %v1774
    %v1885 = vunpack.c.l.b16 %v1775
    %v1886 = vunpack.c.h.b16 %v1775
    %v1887 = vunpack.c.l.b16 %v1776
    %v1888 = vunpack.c.h.b16 %v1776
    %v1889 = vunpack.c.l.b16 %v1777
    %v1890 = vunpack.c.l.b16 %v1778
    %v1891 = vunpack.c.h.b16 %v1778
    %v1892 = vunpack.c.l.b16 %v1779
    %v1893 = vunpack.c.h.b16 %v1779
    %v1894 = vunpack.c.l.b16 %v1780
    %v1895 = vunpack.c.l.b16 %v1781
    %v1896 = vunpack.c.h.b16 %v1781
    %v1897 = vunpack.c.l.b16 %v1782
    %v1898 = vunpack.c.h.b16 %v1782
    %v1899 = vunpack.c.l.b16 %v1783
    %v1900 = vunpack.c.l.b16 %v1784
    %v1901 = vunpack.c.h.b16 %v1784
    %v1902 = vunpack.c.l.b16 %v1785
    %v1903 = vunpack.c.h.b16 %v1785
    %v1904 = vunpack.c.l.b16 %v1786
    %v1905 = vunpack.c.l.b16 %v1787
    %v1906 = vunpack.c.h.b16 %v1787
    %v1907 = vunpack.c.l.b16 %v1788
    %v1908 = vunpack.c.h.b16 %v1788
    %v1909 = vunpack.c.l.b16 %v1789
    %v1910 = vunpack.c.l.b16 %v1790
    %v1911 = vunpack.c.h.b16 %v1790
    %v1912 = vunpack.c.l.b16 %v1791
    %v1913 = vunpack.c.h.b16 %v1791
    %v1914 = vunpack.c.l.b16 %v1792
    %v1915 = vunpack.c.l.b16 %v1793
    %v1916 = vunpack.c.h.b16 %v1793
    %v1917 = vunpack.c.l.b16 %v1794
    %v1918 = vunpack.c.h.b16 %v1794
    %v1919 = vunpack.c.l.b16 %v1795
    %v1920 = vunpack.c.l.b16 %v1796
    %v1921 = vunpack.c.h.b16 %v1796
    %v1922 = vunpack.c.l.b16 %v1797
    %v1923 = vunpack.c.h.b16 %v1797
    %v1924 = vunpack.c.l.b16 %v1798
    %v1925 = vunpack.c.l.b16 %v1799
    %v1926 = vunpack.c.h.b16 %v1799
    %v1927 = vunpack.c.l.b16 %v1800
    %v1928 = vunpack.c.h.b16 %v1800
    %v1929 = vunpack.c.l.b16 %v1801
    %v1930 = vpack.c.b16 %v1855, %v1850
    %v1931 = vpack.c.b16 %v1856, %v1851
    %v1932 = vpack.c.b16 %v1857, %v1852
    %v1933 = vpack.c.b16 %v1858, %v1853
    %v1934 = vpack.c.b16 %v1859, %v1854
    %v1935 = vpack.c.b16 %v1865, %v1860
    %v1936 = vpack.c.b16 %v1866, %v1861
    %v1937 = vpack.c.b16 %v1867, %v1862
    %v1938 = vpack.c.b16 %v1868, %v1863
    %v1939 = vpack.c.b16 %v1869, %v1864
    %v1940 = vpack.c.b16 %v1875, %v1870
    %v1941 = vpack.c.b16 %v1876, %v1871
    %v1942 = vpack.c.b16 %v1877, %v1872
    %v1943 = vpack.c.b16 %v1878, %v1873
    %v1944 = vpack.c.b16 %v1879, %v1874
    %v1945 = vpack.c.b16 %v1885, %v1880
    %v1946 = vpack.c.b16 %v1886, %v1881
    %v1947 = vpack.c.b16 %v1887, %v1882
    %v1948 = vpack.c.b16 %v1888, %v1883
    %v1949 = vpack.c.b16 %v1889, %v1884
    %v1950 = vpack.c.b16 %v1895, %v1890
    %v1951 = vpack.c.b16 %v1896, %v1891
    %v1952 = vpack.c.b16 %v1897, %v1892
    %v1953 = vpack.c.b16 %v1898, %v1893
    %v1954 = vpack.c.b16 %v1899, %v1894
    %v1955 = vpack.c.b16 %v1905, %v1900
    %v1956 = vpack.c.b16 %v1906, %v1901
    %v1957 = vpack.c.b16 %v1907, %v1902
    %v1958 = vpack.c.b16 %v1908, %v1903
    %v1959 = vpack.c.b16 %v1909, %v1904
    %v1960 = vpack.c.b16 %v1915, %v1910
    %v1961 = vpack.c.b16 %v1916, %v1911
    %v1962 = vpack.c.b16 %v1917, %v1912
    %v1963 = vpack.c.b16 %v1918, %v1913
    %v1964 = vpack.c.b16 %v1919, %v1914
    %v1965 = vpack.c.b16 %v1925, %v1920
    %v1966 = vpack.c.b16 %v1926, %v1921
    %v1967 = vpack.c.b16 %v1927, %v1922
    %v1968 = vpack.c.b16 %v1928, %v1923
    %v1969 = vpack.c.b16 %v1929, %v1924
    %2010 = vmatprep.subr.bf16.mxu0 %v1931
    %2011 = vmatpush1.bf16.msra.mxu0 %v1930
    %2012 = vmatprep.subr.bf16.mxu0 %v1936
    %2013 = vmatpush1.bf16.msra.mxu0 %v1935
    %2014 = vmatprep.subr.bf16.mxu0 %v1941
    %2015 = vmatpush1.bf16.msra.mxu0 %v1940
    %2016 = vmatprep.subr.bf16.mxu0 %v1946
    %2017 = vmatpush1.bf16.msra.mxu0 %v1945
    %2018 = vmatprep.subr.bf16.mxu0 %v1951
    %2019 = vmatpush1.bf16.msra.mxu0 %v1950
    %2020 = vmatprep.subr.bf16.mxu0 %v1956
    %2021 = vmatpush1.bf16.msra.mxu0 %v1955
    %2022 = vmatprep.subr.bf16.mxu0 %v1961
    %2023 = vmatpush1.bf16.msra.mxu0 %v1960
    %2024 = vmatprep.subr.bf16.mxu0 %v1966
    %2025 = vmatpush1.bf16.msra.mxu0 %v1965
    %2026 = vmatprep.subr.bf16.mxu0 0
    %2027 = vmatpush1.bf16.msra.mxu0 0
    %2028 = vmatprep.subr.bf16.mxu0 0
    %2029 = vmatpush1.bf16.msra.mxu0 0
    %2030 = vmatprep.subr.bf16.mxu0 0
    %2031 = vmatpush1.bf16.msra.mxu0 0
    %2032 = vmatprep.subr.bf16.mxu0 0
    %2033 = vmatpush1.bf16.msra.mxu0 0
    %2034 = vmatprep.subr.bf16.mxu0 0
    %2035 = vmatpush1.bf16.msra.mxu0 0
    %2036 = vmatprep.subr.bf16.mxu0 0
    %2037 = vmatpush1.bf16.msra.mxu0 0
    %2038 = vmatprep.subr.bf16.mxu0 0
    %2039 = vmatpush1.bf16.msra.mxu0 0
    %2040 = vmatprep.subr.bf16.mxu0 0
    %2041 = vmatpush1.bf16.msra.mxu0 0
    %2042 = vmatprep.mubr.bf16.mxu0 0
    %2043 = vmatmul.mubr.bf16.gmra.mrb[0].mxu0 %v1342
    %v2044 = vpop.f32.mrb[0].mxu0
    %v2045 = vadd.f32 0.0, %v2044
    %v2046 = vpop.f32.mrb[0].mxu0
    %v2047 = vadd.f32 0.0, %v2046
    %v2048 = vpop.f32.mrb[0].mxu0
    %v2049 = vadd.f32 0.0, %v2048
    %v2050 = vpop.f32.mrb[0].mxu0
    %v2051 = vadd.f32 0.0, %v2050
    %2052 = vdwg.mxu0
    %2053 = vmatprep.subr.bf16.mxu0 %v1933
    %2054 = vmatpush1.bf16.msra.mxu0 %v1932
    %2055 = vmatprep.subr.bf16.mxu0 %v1938
    %2056 = vmatpush1.bf16.msra.mxu0 %v1937
    %2057 = vmatprep.subr.bf16.mxu0 %v1943
    %2058 = vmatpush1.bf16.msra.mxu0 %v1942
    %2059 = vmatprep.subr.bf16.mxu0 %v1948
    %2060 = vmatpush1.bf16.msra.mxu0 %v1947
    %2061 = vmatprep.subr.bf16.mxu0 %v1953
    %2062 = vmatpush1.bf16.msra.mxu0 %v1952
    %2063 = vmatprep.subr.bf16.mxu0 %v1958
    %2064 = vmatpush1.bf16.msra.mxu0 %v1957
    %2065 = vmatprep.subr.bf16.mxu0 %v1963
    %2066 = vmatpush1.bf16.msra.mxu0 %v1962
    %2067 = vmatprep.subr.bf16.mxu0 %v1968
    %2068 = vmatpush1.bf16.msra.mxu0 %v1967
    %2069 = vmatprep.subr.bf16.mxu0 0
    %2070 = vmatpush1.bf16.msra.mxu0 0
    %2071 = vmatprep.subr.bf16.mxu0 0
    %2072 = vmatpush1.bf16.msra.mxu0 0
    %2073 = vmatprep.subr.bf16.mxu0 0
    %2074 = vmatpush1.bf16.msra.mxu0 0
    %2075 = vmatprep.subr.bf16.mxu0 0
    %2076 = vmatpush1.bf16.msra.mxu0 0
    %2077 = vmatprep.subr.bf16.mxu0 0
    %2078 = vmatpush1.bf16.msra.mxu0 0
    %2079 = vmatprep.subr.bf16.mxu0 0
    %2080 = vmatpush1.bf16.msra.mxu0 0
    %2081 = vmatprep.subr.bf16.mxu0 0
    %2082 = vmatpush1.bf16.msra.mxu0 0
    %2083 = vmatprep.subr.bf16.mxu0 0
    %2084 = vmatpush1.bf16.msra.mxu0 0
    %2085 = vmatprep.mubr.bf16.mxu0 0
    %2086 = vmatmul.mubr.bf16.gmra.mrb[0].mxu0 %v1342
    %v2087 = vpop.f32.mrb[0].mxu0
    %v2088 = vadd.f32 0.0, %v2087
    %v2089 = vpop.f32.mrb[0].mxu0
    %v2090 = vadd.f32 0.0, %v2089
    %v2091 = vpop.f32.mrb[0].mxu0
    %v2092 = vadd.f32 0.0, %v2091
    %v2093 = vpop.f32.mrb[0].mxu0
    %v2094 = vadd.f32 0.0, %v2093
    %2095 = vdwg.mxu0
    %2096 = vmatprep.subr.bf16.mxu0 0
    %2097 = vmatpush1.bf16.msra.mxu0 %v1934
    %2098 = vmatprep.subr.bf16.mxu0 0
    %2099 = vmatpush1.bf16.msra.mxu0 %v1939
    %2100 = vmatprep.subr.bf16.mxu0 0
    %2101 = vmatpush1.bf16.msra.mxu0 %v1944
    %2102 = vmatprep.subr.bf16.mxu0 0
    %2103 = vmatpush1.bf16.msra.mxu0 %v1949
    %2104 = vmatprep.subr.bf16.mxu0 0
    %2105 = vmatpush1.bf16.msra.mxu0 %v1954
    %2106 = vmatprep.subr.bf16.mxu0 0
    %2107 = vmatpush1.bf16.msra.mxu0 %v1959
    %2108 = vmatprep.subr.bf16.mxu0 0
    %2109 = vmatpush1.bf16.msra.mxu0 %v1964
    %2110 = vmatprep.subr.bf16.mxu0 0
    %2111 = vmatpush1.bf16.msra.mxu0 %v1969
    %2112 = vmatprep.subr.bf16.mxu0 0
    %2113 = vmatpush1.bf16.msra.mxu0 0
    %2114 = vmatprep.subr.bf16.mxu0 0
    %2115 = vmatpush1.bf16.msra.mxu0 0
    %2116 = vmatprep.subr.bf16.mxu0 0
    %2117 = vmatpush1.bf16.msra.mxu0 0
    %2118 = vmatprep.subr.bf16.mxu0 0
    %2119 = vmatpush1.bf16.msra.mxu0 0
    %2120 = vmatprep.subr.bf16.mxu0 0
    %2121 = vmatpush1.bf16.msra.mxu0 0
    %2122 = vmatprep.subr.bf16.mxu0 0
    %2123 = vmatpush1.bf16.msra.mxu0 0
    %2124 = vmatprep.subr.bf16.mxu0 0
    %2125 = vmatpush1.bf16.msra.mxu0 0
    %2126 = vmatprep.subr.bf16.mxu0 0
    %2127 = vmatpush1.bf16.msra.mxu0 0
    %2128 = vmatprep.mubr.bf16.mxu0 0
    %2129 = vmatmul.mubr.bf16.gmra.mrb[0].mxu0 %v1342
    %v2130 = vpop.f32.mrb[0].mxu0
    %v2131 = vadd.f32 0.0, %v2130
    %v2132 = vpop.f32.mrb[0].mxu0
    %v2133 = vpop.f32.mrb[0].mxu0
    %v2134 = vadd.f32 0.0, %v2133
    %v2135 = vpop.f32.mrb[0].mxu0
    %2136 = vdwg.mxu0
    %v2137 = vadd.f32 %v1661, %v2045
    %v2138 = vadd.f32 %v1663, %v2047
    %v2139 = vadd.f32 %v1704, %v2088
    %v2140 = vadd.f32 %v1706, %v2090
    %v2141 = vadd.f32 %v1747, %v2131
    %v2142 = vadd.f32 %v1665, %v2049
    %v2143 = vadd.f32 %v1667, %v2051
    %v2144 = vadd.f32 %v1708, %v2092
    %v2145 = vadd.f32 %v1710, %v2094
    %v2146 = vadd.f32 %v1750, %v2134
    %s2147 = scalar_lea.vmem [#allocation11], 5
    %v2148 = vld [vmem:[%s2147] sm:$0x1f]
    %v2150 = vlaneseq
    %v2151 = vshrl.u32 %v2150, 7
    %v2152 = vsub.s32 0, %v2151
    %v2153 = vrot.slane %v2148, %v2152
    %v2154 = vlaneseq
    %v2155 = vshrl.u32 %v2154, 7
    %v2156 = vsub.s32 1, %v2155
    %v2157 = vrot.slane %v2148, %v2156
    %v2158 = vlaneseq
    %v2159 = vshrl.u32 %v2158, 7
    %v2160 = vsub.s32 2, %v2159
    %v2161 = vrot.slane %v2148, %v2160
    %v2162 = vlaneseq
    %v2163 = vshrl.u32 %v2162, 7
    %v2164 = vsub.s32 3, %v2163
    %v2165 = vrot.slane %v2148, %v2164
    %v2166 = vlaneseq
    %v2167 = vshrl.u32 %v2166, 7
    %v2168 = vsub.s32 4, %v2167
    %v2169 = vrot.slane %v2148, %v2168
    %v2175 = vadd.f32 %v2137, %v2153
    %v2176 = vadd.f32 %v2138, %v2157
    %v2177 = vadd.f32 %v2139, %v2161
    %v2178 = vadd.f32 %v2140, %v2165
    %v2179 = vadd.f32 %v2141, %v2169
    %v2180 = vadd.f32 %v2142, %v2153
    %v2181 = vadd.f32 %v2143, %v2157
    %v2182 = vadd.f32 %v2144, %v2161
    %v2183 = vadd.f32 %v2145, %v2165
    %v2184 = vadd.f32 %v2146, %v2169
    %v2185 = vmul.f32 %v2175, 0.5
    %v2186 = vmul.f32 %v2180, 0.5
    %v2187 = vtanh.pop %v2185
    %v2188 = vtanh.pop %v2186
    %v2189 = vmul.f32 %v2187, 0.5
    %v2190 = vmul.f32 %v2188, 0.5
    %v2191 = vadd.f32 %v2189, 0.5
    %v2192 = vadd.f32 %v2190, 0.5
    %v2193 = vmul.f32 %v2176, 0.5
    %v2194 = vmul.f32 %v2181, 0.5
    %v2195 = vtanh.pop %v2193
    %v2196 = vtanh.pop %v2194
    %v2197 = vmul.f32 %v2195, 0.5
    %v2198 = vmul.f32 %v2196, 0.5
    %v2199 = vadd.f32 %v2197, 0.5
    %v2200 = vadd.f32 %v2198, 0.5
    %v2201 = vmul.f32 %v2177, 0.5
    %v2202 = vmul.f32 %v2182, 0.5
    %v2203 = vtanh.pop %v2201
    %v2204 = vtanh.pop %v2202
    %v2205 = vmul.f32 %v2203, 0.5
    %v2206 = vmul.f32 %v2204, 0.5
    %v2207 = vadd.f32 %v2205, 0.5
    %v2208 = vadd.f32 %v2206, 0.5
    %v2209 = vmax.f32 %v2178, %v2179
    %v2210 = vmax.f32 %v2183, %v2184
    %v2211 = vmul.f32 %v2199, %v1340
    %v2212 = vmul.f32 %v2200, %v1341
    %v2213 = vmul.f32 %v2191, %v2209
    %v2214 = vmul.f32 %v2192, %v2210
    %v2215 = vadd.f32 %v2211, %v2213
    %v2216 = vadd.f32 %v2212, %v2214
    %v2217 = vtanh.pop %v2215
    %v2218 = vtanh.pop %v2216
    %v2219 = vmul.f32 %v2207, %v2217
    %v2220 = vmul.f32 %v2208, %v2218
    %v2221 = vld [vmem:[%s9] sm:$0xf]
    %v2222 = vld [vmem:[%s9 + $0x4] sm:$0xf]
    %v2223 = vld [vmem:[%s9 + $0x8] sm:$0xf]
    %v2224 = vld [vmem:[%s9 + $0xc] sm:$0xf]
    %v2225 = vld [vmem:[%s9 + $0x10] sm:$0xf]
    %v2226 = vld [vmem:[%s9 + $0x14] sm:$0xf]
    %v2227 = vld [vmem:[%s9 + $0x18] sm:$0xf]
    %v2228 = vld [vmem:[%s9 + $0x1c] sm:$0xf]
    %v2229 = vld [vmem:[%s9 + $0x20] sm:$0xf]
    %v2230 = vld [vmem:[%s9 + $0x24] sm:$0xf]
    %v2231 = vld [vmem:[%s9 + $0x28] sm:$0xf]
    %v2232 = vld [vmem:[%s9 + $0x2c] sm:$0xf]
    %v2233 = vld [vmem:[%s9 + $0x30] sm:$0xf]
    %v2234 = vld [vmem:[%s9 + $0x34] sm:$0xf]
    %v2235 = vld [vmem:[%s9 + $0x38] sm:$0xf]
    %v2236 = vld [vmem:[%s9 + $0x3c] sm:$0xf]
    %v2237 = vld [vmem:[#allocation16] sm:$0x1]
    %v2239 = vlaneseq
    %v2240 = vshrl.u32 %v2239, 7
    %v2241 = vsub.s32 0, %v2240
    %v2242 = vrot.slane %v2237, %v2241
    %v2260 = vunpack.c.l.b16 %v2221
    %v2261 = vunpack.c.l.b16 %v2222
    %v2262 = vunpack.c.l.b16 %v2223
    %v2263 = vunpack.c.l.b16 %v2224
    %v2264 = vunpack.c.l.b16 %v2225
    %v2265 = vunpack.c.l.b16 %v2226
    %v2266 = vunpack.c.l.b16 %v2227
    %v2267 = vunpack.c.l.b16 %v2228
    %v2268 = vunpack.c.l.b16 %v2229
    %v2269 = vunpack.c.l.b16 %v2230
    %v2270 = vunpack.c.l.b16 %v2231
    %v2271 = vunpack.c.l.b16 %v2232
    %v2272 = vunpack.c.l.b16 %v2233
    %v2273 = vunpack.c.l.b16 %v2234
    %v2274 = vunpack.c.l.b16 %v2235
    %v2275 = vunpack.c.l.b16 %v2236
    %v2276 = vpack.c.b16 %v2261, %v2260
    %v2277 = vpack.c.b16 %v2263, %v2262
    %v2278 = vpack.c.b16 %v2265, %v2264
    %v2279 = vpack.c.b16 %v2267, %v2266
    %v2280 = vpack.c.b16 %v2269, %v2268
    %v2281 = vpack.c.b16 %v2271, %v2270
    %v2282 = vpack.c.b16 %v2273, %v2272
    %v2283 = vpack.c.b16 %v2275, %v2274
    %2292 = vmatprep.subr.bf16.mxu0 0
    %2293 = vmatpush1.bf16.msra.mxu0 %v2276
    %2294 = vmatprep.subr.bf16.mxu0 0
    %2295 = vmatpush1.bf16.msra.mxu0 %v2277
    %2296 = vmatprep.subr.bf16.mxu0 0
    %2297 = vmatpush1.bf16.msra.mxu0 %v2278
    %2298 = vmatprep.subr.bf16.mxu0 0
    %2299 = vmatpush1.bf16.msra.mxu0 %v2279
    %2300 = vmatprep.subr.bf16.mxu0 0
    %2301 = vmatpush1.bf16.msra.mxu0 %v2280
    %2302 = vmatprep.subr.bf16.mxu0 0
    %2303 = vmatpush1.bf16.msra.mxu0 %v2281
    %2304 = vmatprep.subr.bf16.mxu0 0
    %2305 = vmatpush1.bf16.msra.mxu0 %v2282
    %2306 = vmatprep.subr.bf16.mxu0 0
    %2307 = vmatpush1.bf16.msra.mxu0 %v2283
    %2308 = vmatprep.subr.bf16.mxu0 0
    %2309 = vmatpush1.bf16.msra.mxu0 0
    %2310 = vmatprep.subr.bf16.mxu0 0
    %2311 = vmatpush1.bf16.msra.mxu0 0
    %2312 = vmatprep.subr.bf16.mxu0 0
    %2313 = vmatpush1.bf16.msra.mxu0 0
    %2314 = vmatprep.subr.bf16.mxu0 0
    %2315 = vmatpush1.bf16.msra.mxu0 0
    %2316 = vmatprep.subr.bf16.mxu0 0
    %2317 = vmatpush1.bf16.msra.mxu0 0
    %2318 = vmatprep.subr.bf16.mxu0 0
    %2319 = vmatpush1.bf16.msra.mxu0 0
    %2320 = vmatprep.subr.bf16.mxu0 0
    %2321 = vmatpush1.bf16.msra.mxu0 0
    %2322 = vmatprep.subr.bf16.mxu0 0
    %2323 = vmatpush1.bf16.msra.mxu0 0
    %2324 = vmatprep.mubr.bf16.mxu0 0
    %2325 = vmatmul.mubr.bf16.gmra.mrb[0].mxu0 %v1335
    %v2326 = vpop.f32.mrb[0].mxu0
    %v2327 = vadd.f32 %v2242, %v2326
    %v2328 = vpop.f32.mrb[0].mxu0
    %v2329 = vpop.f32.mrb[0].mxu0
    %v2330 = vadd.f32 %v2242, %v2329
    %v2331 = vpop.f32.mrb[0].mxu0
    %2332 = vdwg.mxu0
    %v2333 = vld [vmem:[%s11] sm:$0xf]
    %v2334 = vld [vmem:[%s11 + $0x4] sm:$0xf]
    %v2335 = vld [vmem:[%s11 + $0x8] sm:$0xf]
    %v2336 = vld [vmem:[%s11 + $0xc] sm:$0xf]
    %v2337 = vld [vmem:[%s11 + $0x10] sm:$0xf]
    %v2338 = vld [vmem:[%s11 + $0x14] sm:$0xf]
    %v2339 = vld [vmem:[%s11 + $0x18] sm:$0xf]
    %v2340 = vld [vmem:[%s11 + $0x1c] sm:$0xf]
    %v2341 = vld [vmem:[%s11 + $0x20] sm:$0xf]
    %v2342 = vld [vmem:[%s11 + $0x24] sm:$0xf]
    %v2343 = vld [vmem:[%s11 + $0x28] sm:$0xf]
    %v2344 = vld [vmem:[%s11 + $0x2c] sm:$0xf]
    %v2345 = vld [vmem:[%s11 + $0x30] sm:$0xf]
    %v2346 = vld [vmem:[%s11 + $0x34] sm:$0xf]
    %v2347 = vld [vmem:[%s11 + $0x38] sm:$0xf]
    %v2348 = vld [vmem:[%s11 + $0x3c] sm:$0xf]
    %v2365 = vunpack.c.l.b16 %v2333
    %v2366 = vunpack.c.l.b16 %v2334
    %v2367 = vunpack.c.l.b16 %v2335
    %v2368 = vunpack.c.l.b16 %v2336
    %v2369 = vunpack.c.l.b16 %v2337
    %v2370 = vunpack.c.l.b16 %v2338
    %v2371 = vunpack.c.l.b16 %v2339
    %v2372 = vunpack.c.l.b16 %v2340
    %v2373 = vunpack.c.l.b16 %v2341
    %v2374 = vunpack.c.l.b16 %v2342
    %v2375 = vunpack.c.l.b16 %v2343
    %v2376 = vunpack.c.l.b16 %v2344
    %v2377 = vunpack.c.l.b16 %v2345
    %v2378 = vunpack.c.l.b16 %v2346
    %v2379 = vunpack.c.l.b16 %v2347
    %v2380 = vunpack.c.l.b16 %v2348
    %v2381 = vpack.c.b16 %v2366, %v2365
    %v2382 = vpack.c.b16 %v2368, %v2367
    %v2383 = vpack.c.b16 %v2370, %v2369
    %v2384 = vpack.c.b16 %v2372, %v2371
    %v2385 = vpack.c.b16 %v2374, %v2373
    %v2386 = vpack.c.b16 %v2376, %v2375
    %v2387 = vpack.c.b16 %v2378, %v2377
    %v2388 = vpack.c.b16 %v2380, %v2379
    %2397 = vmatprep.subr.bf16.mxu0 0
    %2398 = vmatpush1.bf16.msra.mxu0 %v2381
    %2399 = vmatprep.subr.bf16.mxu0 0
    %2400 = vmatpush1.bf16.msra.mxu0 %v2382
    %2401 = vmatprep.subr.bf16.mxu0 0
    %2402 = vmatpush1.bf16.msra.mxu0 %v2383
    %2403 = vmatprep.subr.bf16.mxu0 0
    %2404 = vmatpush1.bf16.msra.mxu0 %v2384
    %2405 = vmatprep.subr.bf16.mxu0 0
    %2406 = vmatpush1.bf16.msra.mxu0 %v2385
    %2407 = vmatprep.subr.bf16.mxu0 0
    %2408 = vmatpush1.bf16.msra.mxu0 %v2386
    %2409 = vmatprep.subr.bf16.mxu0 0
    %2410 = vmatpush1.bf16.msra.mxu0 %v2387
    %2411 = vmatprep.subr.bf16.mxu0 0
    %2412 = vmatpush1.bf16.msra.mxu0 %v2388
    %2413 = vmatprep.subr.bf16.mxu0 0
    %2414 = vmatpush1.bf16.msra.mxu0 0
    %2415 = vmatprep.subr.bf16.mxu0 0
    %2416 = vmatpush1.bf16.msra.mxu0 0
    %2417 = vmatprep.subr.bf16.mxu0 0
    %2418 = vmatpush1.bf16.msra.mxu0 0
    %2419 = vmatprep.subr.bf16.mxu0 0
    %2420 = vmatpush1.bf16.msra.mxu0 0
    %2421 = vmatprep.subr.bf16.mxu0 0
    %2422 = vmatpush1.bf16.msra.mxu0 0
    %2423 = vmatprep.subr.bf16.mxu0 0
    %2424 = vmatpush1.bf16.msra.mxu0 0
    %2425 = vmatprep.subr.bf16.mxu0 0
    %2426 = vmatpush1.bf16.msra.mxu0 0
    %2427 = vmatprep.subr.bf16.mxu0 0
    %2428 = vmatpush1.bf16.msra.mxu0 0
    %2429 = vmatprep.mubr.bf16.mxu0 0
    %2430 = vmatmul.mubr.bf16.gmra.mrb[0].mxu0 %v1342
    %v2431 = vpop.f32.mrb[0].mxu0
    %v2432 = vadd.f32 0.0, %v2431
    %v2433 = vpop.f32.mrb[0].mxu0
    %v2434 = vpop.f32.mrb[0].mxu0
    %v2435 = vadd.f32 0.0, %v2434
    %v2436 = vpop.f32.mrb[0].mxu0
    %2437 = vdwg.mxu0
    %v2438 = vadd.f32 %v2327, %v2432
    %v2439 = vadd.f32 %v2330, %v2435
    %v2440 = vld [vmem:[#allocation17] sm:$0x1]
    %v2442 = vlaneseq
    %v2443 = vshrl.u32 %v2442, 7
    %v2444 = vsub.s32 0, %v2443
    %v2445 = vrot.slane %v2440, %v2444
    %v2447 = vadd.f32 %v2438, %v2445
    %v2448 = vadd.f32 %v2439, %v2445
    %v2449 = vmul.f32 %v2447, 0.5
    %v2450 = vmul.f32 %v2448, 0.5
    %v2451 = vtanh.pop %v2449
    %v2452 = vtanh.pop %v2450
    %v2453 = vmul.f32 %v2451, 0.5
    %v2454 = vmul.f32 %v2452, 0.5
    %v2455 = vadd.f32 %v2453, 0.5
    %v2456 = vadd.f32 %v2454, 0.5
    %v2457 = vmul.f32 %v2455, %v2217
    %v2458 = vmul.f32 %v2456, %v2218
    %s2459 = scalar_lea.vmem [#allocation22], 16
    %2460 = vst [vmem:[%s2459] sm:$0xff] %v2219
    %2461 = vst [vmem:[%s2459 + $0x8] sm:$0xff] %v2220
    %s2462 = scalar_lea.vmem [#allocation23], 16
    %2463 = vst [vmem:[%s2462] sm:$0xff] %v2215
    %2464 = vst [vmem:[%s2462 + $0x8] sm:$0xff] %v2216
    %2465 = vst [vmem:[#allocation19] sm:$0xff] %v2219
    %2466 = vst [vmem:[#allocation19 + $0x8] sm:$0xff] %v2220
    %2467 = vst [vmem:[#allocation20] sm:$0xff] %v2457
    %2468 = vst [vmem:[#allocation20 + $0x8] sm:$0xff] %v2458
    // Predicated region
    $region94: #{tpu_custom_call.1} parent=1 // pred_check
      _
    $region95: #{tpu_custom_call.1} parent=1 // pred_check_branch
      %2470 = sbr.rel (0) target = $region97
    $region96: #{tpu_custom_call.1} parent=1 // pred_region
      %s2472 = ssub.s32 256, 256
      %2473 = vsyncadd [#allocation4], %s2472
      %s2474 = sshll.u32 [#allocation19], 4
      %s2475 = int_to_ptr.vmem [resolvable:$true] %s2474
      %2480 = dma.vmem_to_hbm [thread:$0]  %s2475, 256, %s13, [#allocation4], 128, 128, 8
    $region97: #{tpu_custom_call.1} parent=1 // pred_fallthru
      _
    // Predicated region
    $region98: #{tpu_custom_call.1} parent=1 // pred_check
      _
    $region99: #{tpu_custom_call.1} parent=1 // pred_check_branch
      %2482 = sbr.rel (0) target = $region101
    $region100: #{tpu_custom_call.1} parent=1 // pred_region
      %s2484 = ssub.s32 256, 256
      %2485 = vsyncadd [#allocation21], %s2484
      %s2486 = sshll.u32 [#allocation20], 4
      %s2487 = int_to_ptr.vmem [resolvable:$true] %s2486
      %2492 = dma.vmem_to_hbm [thread:$0]  %s2487, 256, %s14, [#allocation21], 128, 128, 8
    $region101: #{tpu_custom_call.1} parent=1 // pred_fallthru
      _
    // Predicated region
    $region102: #{tpu_custom_call.1} parent=1 // pred_check
      _
    $region103: #{tpu_custom_call.1} parent=1 // pred_check_branch
      %2494 = sbr.rel (0) target = $region105
    $region104: #{tpu_custom_call.1} parent=1 // pred_region
      %s2496 = ssub.s32 512, 512
      %2497 = vsyncadd [#allocation21], %s2496
      %s2498 = sshll.u32 [#allocation22], 4
      %s2499 = int_to_ptr.vmem [resolvable:$true] %s2498
      %2504 = dma.vmem_to_hbm [thread:$0]  %s2499, 512, %s15, [#allocation21], 128, 128, 8
    $region105: #{tpu_custom_call.1} parent=1 // pred_fallthru
      _
    // Predicated region
    $region106: #{tpu_custom_call.1} parent=1 // pred_check
      _
    $region107: #{tpu_custom_call.1} parent=1 // pred_check_branch
      %2506 = sbr.rel (0) target = $region109
    $region108: #{tpu_custom_call.1} parent=1 // pred_region
      %s2508 = ssub.s32 512, 512
      %2509 = vsyncadd [#allocation24], %s2508
      %s2510 = sshll.u32 [#allocation23], 4
      %s2511 = int_to_ptr.vmem [resolvable:$true] %s2510
      %2516 = dma.vmem_to_hbm [thread:$0]  %s2511, 512, %s16, [#allocation24], 128, 128, 8
    $region109: #{tpu_custom_call.1} parent=1 // pred_fallthru
      _
    // Predicated region
    $region110: #{tpu_custom_call.1} parent=1 // pred_check
      _
    $region111: #{tpu_custom_call.1} parent=1 // pred_check_branch
      %2518 = sbr.rel (0) target = $region113
    $region112: #{tpu_custom_call.1} parent=1 // pred_region
      %2519 = dma.done [#allocation4], 256
    $region113: #{tpu_custom_call.1} parent=1 // pred_fallthru
      _
    // Predicated region
    $region114: #{tpu_custom_call.1} parent=1 // pred_check
      _
    $region115: #{tpu_custom_call.1} parent=1 // pred_check_branch
      %2521 = sbr.rel (0) target = $region117
    $region116: #{tpu_custom_call.1} parent=1 // pred_region
      %2522 = dma.done [#allocation21], 256
    $region117: #{tpu_custom_call.1} parent=1 // pred_fallthru
      _
    // Predicated region
    $region118: #{tpu_custom_call.1} parent=1 // pred_check
      _
    $region119: #{tpu_custom_call.1} parent=1 // pred_check_branch
      %2524 = sbr.rel (0) target = $region121
    $region120: #{tpu_custom_call.1} parent=1 // pred_region
      %2525 = dma.done [#allocation21], 512
    $region121: #{tpu_custom_call.1} parent=1 // pred_fallthru
      _
    // Predicated region
    $region122: #{tpu_custom_call.1} parent=1 // pred_check
      _
    $region123: #{tpu_custom_call.1} parent=1 // pred_check_branch
      %2527 = sbr.rel (0) target = $region125
    $region124: #{tpu_custom_call.1} parent=1 // pred_region
      %2528 = dma.done [#allocation24], 512
    $region125: #{tpu_custom_call.1} parent=1 // pred_fallthru
      _
    %2529 = vsyncpa [#allocation3], 1
    %2530 = vsyncpa [#allocation6], 1
    %2531 = vsyncpa [#allocation9], 1
    %2532 = vsyncpa [#allocation12], 1
    %2533 = vsyncpa [#allocation15], 1
    %2534 = vsyncpa [#allocation18], 1
    %2535 = vsyncpa [#allocation4], 1
    %2536 = vsyncpa [#allocation21], 1
    %2537 = vsyncpa [#allocation24], 1

// kernel: tpu_custom_call.1
$region0: #{tpu_custom_call.1}
  #allocation0 [shape = 'u32[]', space=smem, size = 0x4, offset = 0x4, fixed_abs, tag = 'smem constant byte address 0x4 - core index']
  #allocation1 [shape = 'u32[144,128]{1,0:T(1,128)}', space=vmem, size = 0x12000, scoped, tag = 'internal scratch']
  %s0 = inlined_call_operand.hbm [shape: bf16[16,256], index: 0, kind: input, shape index: {}]
  %s1 = inlined_call_operand.hbm [shape: f32[2,16,128], index: 1, kind: input, shape index: {}, may-alias: {1,15}]
  %s2 = inlined_call_operand.hbm [shape: f32[2,16,128], index: 2, kind: input, shape index: {}, may-alias: {2,16}]
  %s3 = inlined_call_operand.hbm [shape: bf16[256,640], index: 3, kind: input, shape index: {}]
  %s4 = inlined_call_operand.vmem [shape: f32[1,640], index: 4, kind: input, shape index: {}]
  %s5 = inlined_call_operand.hbm [shape: bf16[2,128,640], index: 5, kind: input, shape index: {}]
  %s6 = inlined_call_operand.hbm [shape: f32[2,1,640], index: 6, kind: input, shape index: {}]
  %s7 = inlined_call_operand.hbm [shape: bf16[1,128,640], index: 7, kind: input, shape index: {}]
  %s8 = inlined_call_operand.hbm [shape: f32[1,1,640], index: 8, kind: input, shape index: {}]
  %s9 = inlined_call_operand.vmem [shape: bf16[128,128], index: 9, kind: input, shape index: {}]
  %s10 = inlined_call_operand.hbm [shape: f32[1,128], index: 10, kind: input, shape index: {}]
  %s11 = inlined_call_operand.vmem [shape: bf16[128,128], index: 11, kind: input, shape index: {}]
  %s12 = inlined_call_operand.hbm [shape: f32[1,128], index: 12, kind: input, shape index: {}]
  %s13 = inlined_call_operand.hbm [shape: f32[16,128], index: 13, kind: output, shape index: {0}]
  %s14 = inlined_call_operand.hbm [shape: f32[16,128], index: 14, kind: output, shape index: {1}]
  %s15 = inlined_call_operand.hbm [shape: f32[2,16,128], index: 15, kind: output, shape index: {2}, may-alias: {1,15}]
  %s16 = inlined_call_operand.hbm [shape: f32[2,16,128], index: 16, kind: output, shape index: {3}, may-alias: {2,16}]
  %17 = xla_tuple %s13, %s14, %s15, %s16
  %s18 = sld [smem:[#allocation0]]
  $region126: #{tpu_custom_call.1} parent=0
    _
  %s20 = ssub.s32 1, %s18
  %s21 = scalar_select 0, %s20, %s18
  $region1: #{tpu_custom_call.1} parent=0
    #allocation2 [shape = 'u8[8192]{0}', space=vmem, size = 0x2000, scoped, tag = 'input window, operand 0, single buffered']
    #allocation3 [shape = 's32[1]{0}', space=sflag, size = 0x4, scoped, tag = 'scoped memory for tpu_custom_call.1']
    #allocation4 [shape = 's32[1]{0}', space=sflag, size = 0x4, scoped, tag = 'scoped memory for tpu_custom_call.1']
    #allocation5 [shape = 'u8[16384]{0}', space=vmem, size = 0x4000, scoped, tag = 'input window, operand 1, single buffered']
    #allocation6 [shape = 's32[1]{0}', space=sflag, size = 0x4, scoped, tag = 'scoped memory for tpu_custom_call.1']
    #allocation7 [shape = 'u8[16384]{0}', space=vmem, size = 0x4000, scoped, tag = 'input window, operand 2, single buffered']
    #allocation8 [shape = 'u8[327680]{0}', space=vmem, size = 0x50000, scoped, tag = 'input window, operand 3, single buffered']
    #allocation9 [shape = 's32[1]{0}', space=sflag, size = 0x4, scoped, tag = 'scoped memory for tpu_custom_call.1']
    #allocation10 [shape = 'u8[327680]{0}', space=vmem, size = 0x50000, scoped, tag = 'input window, operand 5, single buffered']
    #allocation11 [shape = 'u8[5120]{0}', space=vmem, size = 0x1400, scoped, tag = 'input window, operand 6, single buffered']
    #allocation12 [shape = 's32[1]{0}', space=sflag, size = 0x4, scoped, tag = 'scoped memory for tpu_custom_call.1']
    #allocation13 [shape = 'u8[163840]{0}', space=vmem, size = 0x28000, scoped, tag = 'input window, operand 7, single buffered']
    #allocation14 [shape = 'u8[2560]{0}', space=vmem, size = 0xc00, scoped, tag = 'input window, operand 8, single buffered']
    #allocation15 [shape = 's32[1]{0}', space=sflag, size = 0x4, scoped, tag = 'scoped memory for tpu_custom_call.1']
    #allocation16 [shape = 'u8[512]{0}', space=vmem, size = 0x400, scoped, tag = 'input window, operand 10, single buffered']
    #allocation17 [shape = 'u8[512]{0}', space=vmem, size = 0x400, scoped, tag = 'input window, operand 12, single buffered']
    #allocation18 [shape = 's32[1]{0}', space=sflag, size = 0x4, scoped, tag = 'scoped memory for tpu_custom_call.1']
    #allocation19 [shape = 'u8[8192]{0}', space=vmem, size = 0x2000, scoped, tag = 'output window, operand 0, single buffered']
    #allocation20 [shape = 'u8[8192]{0}', space=vmem, size = 0x2000, scoped, tag = 'output window, operand 1, single buffered']
    #allocation21 [shape = 's32[1]{0}', space=sflag, size = 0x4, scoped, tag = 'scoped memory for tpu_custom_call.1']
    #allocation22 [shape = 'u8[16384]{0}', space=vmem, size = 0x4000, scoped, tag = 'output window, operand 2, single buffered']
    #allocation23 [shape = 'u8[16384]{0}', space=vmem, size = 0x4000, scoped, tag = 'output window, operand 3, single buffered']
    #allocation24 [shape = 's32[1]{0}', space=sflag, size = 0x4, scoped, tag = 'scoped memory for tpu_custom_call.1']
    %22 = vsyncpa [#allocation3], 0
    %23 = vsyncpa [#allocation6], 0
    %24 = vsyncpa [#allocation9], 0
    %25 = vsyncpa [#allocation12], 0
    %26 = vsyncpa [#allocation15], 0
    %27 = vsyncpa [#allocation18], 0
    %28 = vsyncpa [#allocation4], 0
    %29 = vsyncpa [#allocation21], 0
    %30 = vsyncpa [#allocation24], 0
    // Predicated region
    $region2: #{tpu_custom_call.1} parent=1 // pred_check
      _
    $region3: #{tpu_custom_call.1} parent=1 // pred_check_branch
      %32 = sbr.rel (0) target = $region5
    $region4: #{tpu_custom_call.1} parent=1 // pred_region
      %s34 = ssub.s32 256, 256
      %35 = vsyncadd [#allocation3], %s34
      %s36 = sshll.u32 [#allocation2], 4
      %s37 = int_to_ptr.vmem [resolvable:$true] %s36
      %42 = dma.hbm_to_vmem [thread:$0]  %s0, 256, %s37, [#allocation3], 128, 128, 8
    $region5: #{tpu_custom_call.1} parent=1 // pred_fallthru
      _
    // Predicated region
    $region6: #{tpu_custom_call.1} parent=1 // pred_check
      _
    $region7: #{tpu_custom_call.1} parent=1 // pred_check_branch
      %44 = sbr.rel (0) target = $region9
    $region8: #{tpu_custom_call.1} parent=1 // pred_region
      %s46 = ssub.s32 512, 512
      %47 = vsyncadd [#allocation6], %s46
      %s48 = sshll.u32 [#allocation5], 4
      %s49 = int_to_ptr.vmem [resolvable:$true] %s48
      %54 = dma.hbm_to_vmem [thread:$0]  %s1, 512, %s49, [#allocation6], 128, 128, 8
    $region9: #{tpu_custom_call.1} parent=1 // pred_fallthru
      _
    // Predicated region
    $region10: #{tpu_custom_call.1} parent=1 // pred_check
      _
    $region11: #{tpu_custom_call.1} parent=1 // pred_check_branch
      %56 = sbr.rel (0) target = $region13
    $region12: #{tpu_custom_call.1} parent=1 // pred_region
      %s58 = ssub.s32 512, 512
      %59 = vsyncadd [#allocation6], %s58
      %s60 = sshll.u32 [#allocation7], 4
      %s61 = int_to_ptr.vmem [resolvable:$true] %s60
      %66 = dma.hbm_to_vmem [thread:$0]  %s2, 512, %s61, [#allocation6], 128, 128, 8
    $region13: #{tpu_custom_call.1} parent=1 // pred_fallthru
      _
    // Predicated region
    $region14: #{tpu_custom_call.1} parent=1 // pred_check
      _
    $region15: #{tpu_custom_call.1} parent=1 // pred_check_branch
      %68 = sbr.rel (0) target = $region17
    $region16: #{tpu_custom_call.1} parent=1 // pred_region
      %s70 = ssub.s32 10240, 10240
      %71 = vsyncadd [#allocation9], %s70
      %s72 = sshll.u32 [#allocation8], 4
      %s73 = int_to_ptr.vmem [resolvable:$true] %s72
      %78 = dma.hbm_to_vmem [thread:$0]  %s3, 10240, %s73, [#allocation9], 320, 320, 20
    $region17: #{tpu_custom_call.1} parent=1 // pred_fallthru
      _
    // Predicated region
    $region18: #{tpu_custom_call.1} parent=1 // pred_check
      _
    $region19: #{tpu_custom_call.1} parent=1 // pred_check_branch
      %80 = sbr.rel (0) target = $region21
    $region20: #{tpu_custom_call.1} parent=1 // pred_region
      _
    $region21: #{tpu_custom_call.1} parent=1 // pred_fallthru
      _
    // Predicated region
    $region22: #{tpu_custom_call.1} parent=1 // pred_check
      _
    $region23: #{tpu_custom_call.1} parent=1 // pred_check_branch
      %82 = sbr.rel (0) target = $region25
    $region24: #{tpu_custom_call.1} parent=1 // pred_region
      %s84 = ssub.s32 10240, 10240
      %85 = vsyncadd [#allocation9], %s84
      %s86 = sshll.u32 [#allocation10], 4
      %s87 = int_to_ptr.vmem [resolvable:$true] %s86
      %92 = dma.hbm_to_vmem [thread:$0]  %s5, 10240, %s87, [#allocation9], 320, 320, 20
    $region25: #{tpu_custom_call.1} parent=1 // pred_fallthru
      _
    // Predicated region
    $region26: #{tpu_custom_call.1} parent=1 // pred_check
      _
    $region27: #{tpu_custom_call.1} parent=1 // pred_check_branch
      %94 = sbr.rel (0) target = $region29
    $region28: #{tpu_custom_call.1} parent=1 // pred_region
      %s96 = ssub.s32 160, 160
      %97 = vsyncadd [#allocation12], %s96
      %s98 = sshll.u32 [#allocation11], 4
      %s99 = int_to_ptr.vmem [resolvable:$true] %s98
      %104 = dma.hbm_to_vmem [thread:$0]  %s6, 160, %s99, [#allocation12], 80, 80, 5
    $region29: #{tpu_custom_call.1} parent=1 // pred_fallthru
      _
    // Predicated region
    $region30: #{tpu_custom_call.1} parent=1 // pred_check
      _
    $region31: #{tpu_custom_call.1} parent=1 // pred_check_branch
      %106 = sbr.rel (0) target = $region33
    $region32: #{tpu_custom_call.1} parent=1 // pred_region
      %s108 = ssub.s32 5120, 5120
      %109 = vsyncadd [#allocation12], %s108
      %s110 = sshll.u32 [#allocation13], 4
      %s111 = int_to_ptr.vmem [resolvable:$true] %s110
      %116 = dma.hbm_to_vmem [thread:$0]  %s7, 5120, %s111, [#allocation12], 320, 320, 20
    $region33: #{tpu_custom_call.1} parent=1 // pred_fallthru
      _
    // Predicated region
    $region34: #{tpu_custom_call.1} parent=1 // pred_check
      _
    $region35: #{tpu_custom_call.1} parent=1 // pred_check_branch
      %118 = sbr.rel (0) target = $region37
    $region36: #{tpu_custom_call.1} parent=1 // pred_region
      %s120 = ssub.s32 80, 80
      %121 = vsyncadd [#allocation15], %s120
      %s123 = sshll.u32 [#allocation14], 4
      %s124 = int_to_ptr.vmem [resolvable:$true] %s123
      %126 = dma.hbm_to_vmem [thread:$0]  %s8, 80, %s124, [#allocation15]
    $region37: #{tpu_custom_call.1} parent=1 // pred_fallthru
      _
    // Predicated region
    $region38: #{tpu_custom_call.1} parent=1 // pred_check
      _
    $region39: #{tpu_custom_call.1} parent=1 // pred_check_branch
      %128 = sbr.rel (0) target = $region41
    $region40: #{tpu_custom_call.1} parent=1 // pred_region
      _
    $region41: #{tpu_custom_call.1} parent=1 // pred_fallthru
      _
    // Predicated region
    $region42: #{tpu_custom_call.1} parent=1 // pred_check
      _
    $region43: #{tpu_custom_call.1} parent=1 // pred_check_branch
      %130 = sbr.rel (0) target = $region45
    $region44: #{tpu_custom_call.1} parent=1 // pred_region
      %s132 = ssub.s32 16, 16
      %133 = vsyncadd [#allocation15], %s132
      %s135 = sshll.u32 [#allocation16], 4
      %s136 = int_to_ptr.vmem [resolvable:$true] %s135
      %138 = dma.hbm_to_vmem [thread:$0]  %s10, 16, %s136, [#allocation15]
    $region45: #{tpu_custom_call.1} parent=1 // pred_fallthru
      _
    // Predicated region
    $region46: #{tpu_custom_call.1} parent=1 // pred_check
      _
    $region47: #{tpu_custom_call.1} parent=1 // pred_check_branch
      %140 = sbr.rel (0) target = $region49
    $region48: #{tpu_custom_call.1} parent=1 // pred_region
      _
    $region49: #{tpu_custom_call.1} parent=1 // pred_fallthru
      _
    // Predicated region
    $region50: #{tpu_custom_call.1} parent=1 // pred_check
      _
    $region51: #{tpu_custom_call.1} parent=1 // pred_check_branch
      %142 = sbr.rel (0) target = $region53
    $region52: #{tpu_custom_call.1} parent=1 // pred_region
      %s144 = ssub.s32 16, 16
      %145 = vsyncadd [#allocation18], %s144
      %s147 = sshll.u32 [#allocation17], 4
      %s148 = int_to_ptr.vmem [resolvable:$true] %s147
      %150 = dma.hbm_to_vmem [thread:$0]  %s12, 16, %s148, [#allocation18]
    $region53: #{tpu_custom_call.1} parent=1 // pred_fallthru
      _
    // Predicated region
    $region54: #{tpu_custom_call.1} parent=1 // pred_check
      _
    $region55: #{tpu_custom_call.1} parent=1 // pred_check_branch
      %152 = sbr.rel (0) target = $region57
    $region56: #{tpu_custom_call.1} parent=1 // pred_region
      %153 = dma.done [#allocation3], 256
    $region57: #{tpu_custom_call.1} parent=1 // pred_fallthru
      _
    // Predicated region
    $region58: #{tpu_custom_call.1} parent=1 // pred_check
      _
    $region59: #{tpu_custom_call.1} parent=1 // pred_check_branch
      %155 = sbr.rel (0) target = $region61
    $region60: #{tpu_custom_call.1} parent=1 // pred_region
      %156 = dma.done [#allocation6], 512
    $region61: #{tpu_custom_call.1} parent=1 // pred_fallthru
      _
    // Predicated region
    $region62: #{tpu_custom_call.1} parent=1 // pred_check
      _
    $region63: #{tpu_custom_call.1} parent=1 // pred_check_branch
      %158 = sbr.rel (0) target = $region65
    $region64: #{tpu_custom_call.1} parent=1 // pred_region
      %159 = dma.done [#allocation6], 512
    $region65: #{tpu_custom_call.1} parent=1 // pred_fallthru
      _
    // Predicated region
    $region66: #{tpu_custom_call.1} parent=1 // pred_check
      _
    $region67: #{tpu_custom_call.1} parent=1 // pred_check_branch
      %161 = sbr.rel (0) target = $region69
    $region68: #{tpu_custom_call.1} parent=1 // pred_region
      %162 = dma.done [#allocation9], 10240
    $region69: #{tpu_custom_call.1} parent=1 // pred_fallthru
      _
    // Predicated region
    $region70: #{tpu_custom_call.1} parent=1 // pred_check
      _
    $region71: #{tpu_custom_call.1} parent=1 // pred_check_branch
      %164 = sbr.rel (0) target = $region73
    $region72: #{tpu_custom_call.1} parent=1 // pred_region
      %165 = dma.done [#allocation9], 10240
    $region73: #{tpu_custom_call.1} parent=1 // pred_fallthru
      _
    // Predicated region
    $region74: #{tpu_custom_call.1} parent=1 // pred_check
      _
    $region75: #{tpu_custom_call.1} parent=1 // pred_check_branch
      %167 = sbr.rel (0) target = $region77
    $region76: #{tpu_custom_call.1} parent=1 // pred_region
      %168 = dma.done [#allocation12], 160
    $region77: #{tpu_custom_call.1} parent=1 // pred_fallthru
      _
    // Predicated region
    $region78: #{tpu_custom_call.1} parent=1 // pred_check
      _
    $region79: #{tpu_custom_call.1} parent=1 // pred_check_branch
      %170 = sbr.rel (0) target = $region81
    $region80: #{tpu_custom_call.1} parent=1 // pred_region
      %171 = dma.done [#allocation12], 5120
    $region81: #{tpu_custom_call.1} parent=1 // pred_fallthru
      _
    // Predicated region
    $region82: #{tpu_custom_call.1} parent=1 // pred_check
      _
    $region83: #{tpu_custom_call.1} parent=1 // pred_check_branch
      %173 = sbr.rel (0) target = $region85
    $region84: #{tpu_custom_call.1} parent=1 // pred_region
      %174 = dma.done [#allocation15], 80
    $region85: #{tpu_custom_call.1} parent=1 // pred_fallthru
      _
    // Predicated region
    $region86: #{tpu_custom_call.1} parent=1 // pred_check
      _
    $region87: #{tpu_custom_call.1} parent=1 // pred_check_branch
      %176 = sbr.rel (0) target = $region89
    $region88: #{tpu_custom_call.1} parent=1 // pred_region
      %177 = dma.done [#allocation15], 16
    $region89: #{tpu_custom_call.1} parent=1 // pred_fallthru
      _
    // Predicated region
    $region90: #{tpu_custom_call.1} parent=1 // pred_check
      _
    $region91: #{tpu_custom_call.1} parent=1 // pred_check_branch
      %179 = sbr.rel (0) target = $region93
    $region92: #{tpu_custom_call.1} parent=1 // pred_region
      %180 = dma.done [#allocation18], 16
    $region93: #{tpu_custom_call.1} parent=1 // pred_fallthru
      _
    %v182 = vld [vmem:[#allocation2] sm:$0xff]
    %v183 = vld [vmem:[#allocation2 + $0x8] sm:$0xff]
    %v184 = vld [vmem:[#allocation5] sm:$0xff]
    %v185 = vld [vmem:[#allocation5 + $0x8] sm:$0xff]
    %v186 = vld [vmem:[#allocation7] sm:$0xff]
    %v187 = vld [vmem:[#allocation7 + $0x8] sm:$0xff]
    %v188 = vpack.c.bf16 %v185, %v184
    %v189 = vld [vmem:[#allocation8] sm:$0xff]
    %v190 = vld [vmem:[#allocation8 + $0x8] sm:$0xff]
    %v191 = vld [vmem:[#allocation8 + $0x10] sm:$0xf]
    %v192 = vld [vmem:[#allocation8 + $0x14] sm:$0xff]
    %v193 = vld [vmem:[#allocation8 + $0x1c] sm:$0xff]
    %v194 = vld [vmem:[#allocation8 + $0x24] sm:$0xf]
    %v195 = vld [vmem:[#allocation8 + $0x28] sm:$0xff]
    %v196 = vld [vmem:[#allocation8 + $0x30] sm:$0xff]
    %v197 = vld [vmem:[#allocation8 + $0x38] sm:$0xf]
    %v198 = vld [vmem:[#allocation8 + $0x3c] sm:$0xff]
    %v199 = vld [vmem:[#allocation8 + $0x44] sm:$0xff]
    %v200 = vld [vmem:[#allocation8 + $0x4c] sm:$0xf]
    %v201 = vld [vmem:[#allocation8 + $0x50] sm:$0xff]
    %v202 = vld [vmem:[#allocation8 + $0x58] sm:$0xff]
    %v203 = vld [vmem:[#allocation8 + $0x60] sm:$0xf]
    %v204 = vld [vmem:[#allocation8 + $0x64] sm:$0xff]
    %v205 = vld [vmem:[#allocation8 + $0x6c] sm:$0xff]
    %v206 = vld [vmem:[#allocation8 + $0x74] sm:$0xf]
    %v207 = vld [vmem:[#allocation8 + $0x78] sm:$0xff]
    %v208 = vld [vmem:[#allocation8 + $0x80] sm:$0xff]
    %v209 = vld [vmem:[#allocation8 + $0x88] sm:$0xf]
    %v210 = vld [vmem:[#allocation8 + $0x8c] sm:$0xff]
    %v211 = vld [vmem:[#allocation8 + $0x94] sm:$0xff]
    %v212 = vld [vmem:[#allocation8 + $0x9c] sm:$0xf]
    %v213 = vld [vmem:[#allocation8 + $0xa0] sm:$0xff]
    %v214 = vld [vmem:[#allocation8 + $0xa8] sm:$0xff]
    %v215 = vld [vmem:[#allocation8 + $0xb0] sm:$0xf]
    %v216 = vld [vmem:[#allocation8 + $0xb4] sm:$0xff]
    %v217 = vld [vmem:[#allocation8 + $0xbc] sm:$0xff]
    %v218 = vld [vmem:[#allocation8 + $0xc4] sm:$0xf]
    %v219 = vld [vmem:[#allocation8 + $0xc8] sm:$0xff]
    %v220 = vld [vmem:[#allocation8 + $0xd0] sm:$0xff]
    %v221 = vld [vmem:[#allocation8 + $0xd8] sm:$0xf]
    %v222 = vld [vmem:[#allocation8 + $0xdc] sm:$0xff]
    %v223 = vld [vmem:[#allocation8 + $0xe4] sm:$0xff]
    %v224 = vld [vmem:[#allocation8 + $0xec] sm:$0xf]
    %v225 = vld [vmem:[#allocation8 + $0xf0] sm:$0xff]
    %v226 = vld [vmem:[#allocation8 + $0xf8] sm:$0xff]
    %v227 = vld [vmem:[#allocation8 + $0x100] sm:$0xf]
    %v228 = vld [vmem:[#allocation8 + $0x104] sm:$0xff]
    %v229 = vld [vmem:[#allocation8 + $0x10c] sm:$0xff]
    %v230 = vld [vmem:[#allocation8 + $0x114] sm:$0xf]
    %v231 = vld [vmem:[#allocation8 + $0x118] sm:$0xff]
    %v232 = vld [vmem:[#allocation8 + $0x120] sm:$0xff]
    %v233 = vld [vmem:[#allocation8 + $0x128] sm:$0xf]
    %v234 = vld [vmem:[#allocation8 + $0x12c] sm:$0xff]
    %v235 = vld [vmem:[#allocation8 + $0x134] sm:$0xff]
    %v236 = vld [vmem:[#allocation8 + $0x13c] sm:$0xf]
    %v237 = vld [vmem:[#allocation8 + $0x140] sm:$0xff]
    %v238 = vld [vmem:[#allocation8 + $0x148] sm:$0xff]
    %v239 = vld [vmem:[#allocation8 + $0x150] sm:$0xf]
    %v240 = vld [vmem:[#allocation8 + $0x154] sm:$0xff]
    %v241 = vld [vmem:[#allocation8 + $0x15c] sm:$0xff]
    %v242 = vld [vmem:[#allocation8 + $0x164] sm:$0xf]
    %v243 = vld [vmem:[#allocation8 + $0x168] sm:$0xff]
    %v244 = vld [vmem:[#allocation8 + $0x170] sm:$0xff]
    %v245 = vld [vmem:[#allocation8 + $0x178] sm:$0xf]
    %v246 = vld [vmem:[#allocation8 + $0x17c] sm:$0xff]
    %v247 = vld [vmem:[#allocation8 + $0x184] sm:$0xff]
    %v248 = vld [vmem:[#allocation8 + $0x18c] sm:$0xf]
    %v249 = vld [vmem:[#allocation8 + $0x190] sm:$0xff]
    %v250 = vld [vmem:[#allocation8 + $0x198] sm:$0xff]
    %v251 = vld [vmem:[#allocation8 + $0x1a0] sm:$0xf]
    %v252 = vld [vmem:[#allocation8 + $0x1a4] sm:$0xff]
    %v253 = vld [vmem:[#allocation8 + $0x1ac] sm:$0xff]
    %v254 = vld [vmem:[#allocation8 + $0x1b4] sm:$0xf]
    %v255 = vld [vmem:[#allocation8 + $0x1b8] sm:$0xff]
    %v256 = vld [vmem:[#allocation8 + $0x1c0] sm:$0xff]
    %v257 = vld [vmem:[#allocation8 + $0x1c8] sm:$0xf]
    %v258 = vld [vmem:[#allocation8 + $0x1cc] sm:$0xff]
    %v259 = vld [vmem:[#allocation8 + $0x1d4] sm:$0xff]
    %v260 = vld [vmem:[#allocation8 + $0x1dc] sm:$0xf]
    %v261 = vld [vmem:[#allocation8 + $0x1e0] sm:$0xff]
    %v262 = vld [vmem:[#allocation8 + $0x1e8] sm:$0xff]
    %v263 = vld [vmem:[#allocation8 + $0x1f0] sm:$0xf]
    %v264 = vld [vmem:[#allocation8 + $0x1f4] sm:$0xff]
    %v265 = vld [vmem:[#allocation8 + $0x1fc] sm:$0xff]
    %v266 = vld [vmem:[#allocation8 + $0x204] sm:$0xf]
    %v267 = vld [vmem:[#allocation8 + $0x208] sm:$0xff]
    %v268 = vld [vmem:[#allocation8 + $0x210] sm:$0xff]
    %v269 = vld [vmem:[#allocation8 + $0x218] sm:$0xf]
    %v270 = vld [vmem:[#allocation8 + $0x21c] sm:$0xff]
    %v271 = vld [vmem:[#allocation8 + $0x224] sm:$0xff]
    %v272 = vld [vmem:[#allocation8 + $0x22c] sm:$0xf]
    %v273 = vld [vmem:[#allocation8 + $0x230] sm:$0xff]
    %v274 = vld [vmem:[#allocation8 + $0x238] sm:$0xff]
    %v275 = vld [vmem:[#allocation8 + $0x240] sm:$0xf]
    %v276 = vld [vmem:[#allocation8 + $0x244] sm:$0xff]
    %v277 = vld [vmem:[#allocation8 + $0x24c] sm:$0xff]
    %v278 = vld [vmem:[#allocation8 + $0x254] sm:$0xf]
    %v279 = vld [vmem:[#allocation8 + $0x258] sm:$0xff]
    %v280 = vld [vmem:[#allocation8 + $0x260] sm:$0xff]
    %v281 = vld [vmem:[#allocation8 + $0x268] sm:$0xf]
    %v282 = vld [vmem:[#allocation8 + $0x26c] sm:$0xff]
    %v283 = vld [vmem:[#allocation8 + $0x274] sm:$0xff]
    %v284 = vld [vmem:[#allocation8 + $0x27c] sm:$0xf]
    %v285 = vld [vmem:[%s4] sm:$0x1f]
    %v287 = vlaneseq
    %v288 = vshrl.u32 %v287, 7
    %v289 = vsub.s32 0, %v288
    %v290 = vrot.slane %v285, %v289
    %v291 = vlaneseq
    %v292 = vshrl.u32 %v291, 7
    %v293 = vsub.s32 1, %v292
    %v294 = vrot.slane %v285, %v293
    %v295 = vlaneseq
    %v296 = vshrl.u32 %v295, 7
    %v297 = vsub.s32 2, %v296
    %v298 = vrot.slane %v285, %v297
    %v299 = vlaneseq
    %v300 = vshrl.u32 %v299, 7
    %v301 = vsub.s32 3, %v300
    %v302 = vrot.slane %v285, %v301
    %v303 = vlaneseq
    %v304 = vshrl.u32 %v303, 7
    %v305 = vsub.s32 4, %v304
    %v306 = vrot.slane %v285, %v305
    %v314 = vunpack.c.l.b16 %v182
    %v315 = vunpack.c.h.b16 %v182
    %v316 = vunpack.c.l.b16 %v183
    %v317 = vunpack.c.h.b16 %v183
    %v318 = vpack.c.b16 %v316, %v314
    %v319 = vpack.c.b16 %v317, %v315
    %v418 = vunpack.c.l.b16 %v189
    %v419 = vunpack.c.h.b16 %v189
    %v420 = vunpack.c.l.b16 %v190
    %v421 = vunpack.c.h.b16 %v190
    %v422 = vunpack.c.l.b16 %v191
    %v423 = vunpack.c.l.b16 %v192
    %v424 = vunpack.c.h.b16 %v192
    %v425 = vunpack.c.l.b16 %v193
    %v426 = vunpack.c.h.b16 %v193
    %v427 = vunpack.c.l.b16 %v194
    %v428 = vunpack.c.l.b16 %v195
    %v429 = vunpack.c.h.b16 %v195
    %v430 = vunpack.c.l.b16 %v196
    %v431 = vunpack.c.h.b16 %v196
    %v432 = vunpack.c.l.b16 %v197
    %v433 = vunpack.c.l.b16 %v198
    %v434 = vunpack.c.h.b16 %v198
    %v435 = vunpack.c.l.b16 %v199
    %v436 = vunpack.c.h.b16 %v199
    %v437 = vunpack.c.l.b16 %v200
    %v438 = vunpack.c.l.b16 %v201
    %v439 = vunpack.c.h.b16 %v201
    %v440 = vunpack.c.l.b16 %v202
    %v441 = vunpack.c.h.b16 %v202
    %v442 = vunpack.c.l.b16 %v203
    %v443 = vunpack.c.l.b16 %v204
    %v444 = vunpack.c.h.b16 %v204
    %v445 = vunpack.c.l.b16 %v205
    %v446 = vunpack.c.h.b16 %v205
    %v447 = vunpack.c.l.b16 %v206
    %v448 = vunpack.c.l.b16 %v207
    %v449 = vunpack.c.h.b16 %v207
    %v450 = vunpack.c.l.b16 %v208
    %v451 = vunpack.c.h.b16 %v208
    %v452 = vunpack.c.l.b16 %v209
    %v453 = vunpack.c.l.b16 %v210
    %v454 = vunpack.c.h.b16 %v210
    %v455 = vunpack.c.l.b16 %v211
    %v456 = vunpack.c.h.b16 %v211
    %v457 = vunpack.c.l.b16 %v212
    %v458 = vunpack.c.l.b16 %v213
    %v459 = vunpack.c.h.b16 %v213
    %v460 = vunpack.c.l.b16 %v214
    %v461 = vunpack.c.h.b16 %v214
    %v462 = vunpack.c.l.b16 %v215
    %v463 = vunpack.c.l.b16 %v216
    %v464 = vunpack.c.h.b16 %v216
    %v465 = vunpack.c.l.b16 %v217
    %v466 = vunpack.c.h.b16 %v217
    %v467 = vunpack.c.l.b16 %v218
    %v468 = vunpack.c.l.b16 %v219
    %v469 = vunpack.c.h.b16 %v219
    %v470 = vunpack.c.l.b16 %v220
    %v471 = vunpack.c.h.b16 %v220
    %v472 = vunpack.c.l.b16 %v221
    %v473 = vunpack.c.l.b16 %v222
    %v474 = vunpack.c.h.b16 %v222
    %v475 = vunpack.c.l.b16 %v223
    %v476 = vunpack.c.h.b16 %v223
    %v477 = vunpack.c.l.b16 %v224
    %v478 = vunpack.c.l.b16 %v225
    %v479 = vunpack.c.h.b16 %v225
    %v480 = vunpack.c.l.b16 %v226
    %v481 = vunpack.c.h.b16 %v226
    %v482 = vunpack.c.l.b16 %v227
    %v483 = vunpack.c.l.b16 %v228
    %v484 = vunpack.c.h.b16 %v228
    %v485 = vunpack.c.l.b16 %v229
    %v486 = vunpack.c.h.b16 %v229
    %v487 = vunpack.c.l.b16 %v230
    %v488 = vunpack.c.l.b16 %v231
    %v489 = vunpack.c.h.b16 %v231
    %v490 = vunpack.c.l.b16 %v232
    %v491 = vunpack.c.h.b16 %v232
    %v492 = vunpack.c.l.b16 %v233
    %v493 = vunpack.c.l.b16 %v234
    %v494 = vunpack.c.h.b16 %v234
    %v495 = vunpack.c.l.b16 %v235
    %v496 = vunpack.c.h.b16 %v235
    %v497 = vunpack.c.l.b16 %v236
    %v498 = vunpack.c.l.b16 %v237
    %v499 = vunpack.c.h.b16 %v237
    %v500 = vunpack.c.l.b16 %v238
    %v501 = vunpack.c.h.b16 %v238
    %v502 = vunpack.c.l.b16 %v239
    %v503 = vunpack.c.l.b16 %v240
    %v504 = vunpack.c.h.b16 %v240
    %v505 = vunpack.c.l.b16 %v241
    %v506 = vunpack.c.h.b16 %v241
    %v507 = vunpack.c.l.b16 %v242
    %v508 = vunpack.c.l.b16 %v243
    %v509 = vunpack.c.h.b16 %v243
    %v510 = vunpack.c.l.b16 %v244
    %v511 = vunpack.c.h.b16 %v244
    %v512 = vunpack.c.l.b16 %v245
    %v513 = vunpack.c.l.b16 %v246
    %v514 = vunpack.c.h.b16 %v246
    %v515 = vunpack.c.l.b16 %v247
    %v516 = vunpack.c.h.b16 %v247
    %v517 = vunpack.c.l.b16 %v248
    %v518 = vunpack.c.l.b16 %v249
    %v519 = vunpack.c.h.b16 %v249
    %v520 = vunpack.c.l.b16 %v250
    %v521 = vunpack.c.h.b16 %v250
    %v522 = vunpack.c.l.b16 %v251
    %v523 = vunpack.c.l.b16 %v252
    %v524 = vunpack.c.h.b16 %v252
    %v525 = vunpack.c.l.b16 %v253
    %v526 = vunpack.c.h.b16 %v253
    %v527 = vunpack.c.l.b16 %v254
    %v528 = vunpack.c.l.b16 %v255
    %v529 = vunpack.c.h.b16 %v255
    %v530 = vunpack.c.l.b16 %v256
    %v531 = vunpack.c.h.b16 %v256
    %v532 = vunpack.c.l.b16 %v257
    %v533 = vunpack.c.l.b16 %v258
    %v534 = vunpack.c.h.b16 %v258
    %v535 = vunpack.c.l.b16 %v259
    %v536 = vunpack.c.h.b16 %v259
    %v537 = vunpack.c.l.b16 %v260
    %v538 = vunpack.c.l.b16 %v261
    %v539 = vunpack.c.h.b16 %v261
    %v540 = vunpack.c.l.b16 %v262
    %v541 = vunpack.c.h.b16 %v262
    %v542 = vunpack.c.l.b16 %v263
    %v543 = vunpack.c.l.b16 %v264
    %v544 = vunpack.c.h.b16 %v264
    %v545 = vunpack.c.l.b16 %v265
    %v546 = vunpack.c.h.b16 %v265
    %v547 = vunpack.c.l.b16 %v266
    %v548 = vunpack.c.l.b16 %v267
    %v549 = vunpack.c.h.b16 %v267
    %v550 = vunpack.c.l.b16 %v268
    %v551 = vunpack.c.h.b16 %v268
    %v552 = vunpack.c.l.b16 %v269
    %v553 = vunpack.c.l.b16 %v270
    %v554 = vunpack.c.h.b16 %v270
    %v555 = vunpack.c.l.b16 %v271
    %v556 = vunpack.c.h.b16 %v271
    %v557 = vunpack.c.l.b16 %v272
    %v558 = vunpack.c.l.b16 %v273
    %v559 = vunpack.c.h.b16 %v273
    %v560 = vunpack.c.l.b16 %v274
    %v561 = vunpack.c.h.b16 %v274
    %v562 = vunpack.c.l.b16 %v275
    %v563 = vunpack.c.l.b16 %v276
    %v564 = vunpack.c.h.b16 %v276
    %v565 = vunpack.c.l.b16 %v277
    %v566 = vunpack.c.h.b16 %v277
    %v567 = vunpack.c.l.b16 %v278
    %v568 = vunpack.c.l.b16 %v279
    %v569 = vunpack.c.h.b16 %v279
    %v570 = vunpack.c.l.b16 %v280
    %v571 = vunpack.c.h.b16 %v280
    %v572 = vunpack.c.l.b16 %v281
    %v573 = vunpack.c.l.b16 %v282
    %v574 = vunpack.c.h.b16 %v282
    %v575 = vunpack.c.l.b16 %v283
    %v576 = vunpack.c.h.b16 %v283
    %v577 = vunpack.c.l.b16 %v284
    %v578 = vpack.c.b16 %v423, %v418
    %v579 = vpack.c.b16 %v424, %v419
    %v580 = vpack.c.b16 %v425, %v420
    %v581 = vpack.c.b16 %v426, %v421
    %v582 = vpack.c.b16 %v427, %v422
    %v583 = vpack.c.b16 %v433, %v428
    %v584 = vpack.c.b16 %v434, %v429
    %v585 = vpack.c.b16 %v435, %v430
    %v586 = vpack.c.b16 %v436, %v431
    %v587 = vpack.c.b16 %v437, %v432
    %v588 = vpack.c.b16 %v443, %v438
    %v589 = vpack.c.b16 %v444, %v439
    %v590 = vpack.c.b16 %v445, %v440
    %v591 = vpack.c.b16 %v446, %v441
    %v592 = vpack.c.b16 %v447, %v442
    %v593 = vpack.c.b16 %v453, %v448
    %v594 = vpack.c.b16 %v454, %v449
    %v595 = vpack.c.b16 %v455, %v450
    %v596 = vpack.c.b16 %v456, %v451
    %v597 = vpack.c.b16 %v457, %v452
    %v598 = vpack.c.b16 %v463, %v458
    %v599 = vpack.c.b16 %v464, %v459
    %v600 = vpack.c.b16 %v465, %v460
    %v601 = vpack.c.b16 %v466, %v461
    %v602 = vpack.c.b16 %v467, %v462
    %v603 = vpack.c.b16 %v473, %v468
    %v604 = vpack.c.b16 %v474, %v469
    %v605 = vpack.c.b16 %v475, %v470
    %v606 = vpack.c.b16 %v476, %v471
    %v607 = vpack.c.b16 %v477, %v472
    %v608 = vpack.c.b16 %v483, %v478
    %v609 = vpack.c.b16 %v484, %v479
    %v610 = vpack.c.b16 %v485, %v480
    %v611 = vpack.c.b16 %v486, %v481
    %v612 = vpack.c.b16 %v487, %v482
    %v613 = vpack.c.b16 %v493, %v488
    %v614 = vpack.c.b16 %v494, %v489
    %v615 = vpack.c.b16 %v495, %v490
    %v616 = vpack.c.b16 %v496, %v491
    %v617 = vpack.c.b16 %v497, %v492
    %v618 = vpack.c.b16 %v503, %v498
    %v619 = vpack.c.b16 %v504, %v499
    %v620 = vpack.c.b16 %v505, %v500
    %v621 = vpack.c.b16 %v506, %v501
    %v622 = vpack.c.b16 %v507, %v502
    %v623 = vpack.c.b16 %v513, %v508
    %v624 = vpack.c.b16 %v514, %v509
    %v625 = vpack.c.b16 %v515, %v510
    %v626 = vpack.c.b16 %v516, %v511
    %v627 = vpack.c.b16 %v517, %v512
    %v628 = vpack.c.b16 %v523, %v518
    %v629 = vpack.c.b16 %v524, %v519
    %v630 = vpack.c.b16 %v525, %v520
    %v631 = vpack.c.b16 %v526, %v521
    %v632 = vpack.c.b16 %v527, %v522
    %v633 = vpack.c.b16 %v533, %v528
    %v634 = vpack.c.b16 %v534, %v529
    %v635 = vpack.c.b16 %v535, %v530
    %v636 = vpack.c.b16 %v536, %v531
    %v637 = vpack.c.b16 %v537, %v532
    %v638 = vpack.c.b16 %v543, %v538
    %v639 = vpack.c.b16 %v544, %v539
    %v640 = vpack.c.b16 %v545, %v540
    %v641 = vpack.c.b16 %v546, %v541
    %v642 = vpack.c.b16 %v547, %v542
    %v643 = vpack.c.b16 %v553, %v548
    %v644 = vpack.c.b16 %v554, %v549
    %v645 = vpack.c.b16 %v555, %v550
    %v646 = vpack.c.b16 %v556, %v551
    %v647 = vpack.c.b16 %v557, %v552
    %v648 = vpack.c.b16 %v563, %v558
    %v649 = vpack.c.b16 %v564, %v559
    %v650 = vpack.c.b16 %v565, %v560
    %v651 = vpack.c.b16 %v566, %v561
    %v652 = vpack.c.b16 %v567, %v562
    %v653 = vpack.c.b16 %v573, %v568
    %v654 = vpack.c.b16 %v574, %v569
    %v655 = vpack.c.b16 %v575, %v570
    %v656 = vpack.c.b16 %v576, %v571
    %v657 = vpack.c.b16 %v577, %v572
    %738 = vmatprep.subr.bf16.mxu0 %v579
    %739 = vmatpush1.bf16.msra.mxu0 %v578
    %740 = vmatprep.subr.bf16.mxu0 %v584
    %741 = vmatpush1.bf16.msra.mxu0 %v583
    %742 = vmatprep.subr.bf16.mxu0 %v589
    %743 = vmatpush1.bf16.msra.mxu0 %v588
    %744 = vmatprep.subr.bf16.mxu0 %v594
    %745 = vmatpush1.bf16.msra.mxu0 %v593
    %746 = vmatprep.subr.bf16.mxu0 %v599
    %747 = vmatpush1.bf16.msra.mxu0 %v598
    %748 = vmatprep.subr.bf16.mxu0 %v604
    %749 = vmatpush1.bf16.msra.mxu0 %v603
    %750 = vmatprep.subr.bf16.mxu0 %v609
    %751 = vmatpush1.bf16.msra.mxu0 %v608
    %752 = vmatprep.subr.bf16.mxu0 %v614
    %753 = vmatpush1.bf16.msra.mxu0 %v613
    %754 = vmatprep.subr.bf16.mxu0 %v619
    %755 = vmatpush1.bf16.msra.mxu0 %v618
    %756 = vmatprep.subr.bf16.mxu0 %v624
    %757 = vmatpush1.bf16.msra.mxu0 %v623
    %758 = vmatprep.subr.bf16.mxu0 %v629
    %759 = vmatpush1.bf16.msra.mxu0 %v628
    %760 = vmatprep.subr.bf16.mxu0 %v634
    %761 = vmatpush1.bf16.msra.mxu0 %v633
    %762 = vmatprep.subr.bf16.mxu0 %v639
    %763 = vmatpush1.bf16.msra.mxu0 %v638
    %764 = vmatprep.subr.bf16.mxu0 %v644
    %765 = vmatpush1.bf16.msra.mxu0 %v643
    %766 = vmatprep.subr.bf16.mxu0 %v649
    %767 = vmatpush1.bf16.msra.mxu0 %v648
    %768 = vmatprep.subr.bf16.mxu0 %v654
    %769 = vmatpush1.bf16.msra.mxu0 %v653
    %770 = vmatprep.mubr.bf16.mxu0 %v319
    %771 = vmatmul.mubr.bf16.gmra.mrb[0].mxu0 %v318
    %v772 = vpop.f32.mrb[0].mxu0
    %v773 = vadd.f32 %v290, %v772
    %v774 = vpop.f32.mrb[0].mxu0
    %v775 = vadd.f32 %v294, %v774
    %v776 = vpop.f32.mrb[0].mxu0
    %v777 = vadd.f32 %v290, %v776
    %v778 = vpop.f32.mrb[0].mxu0
    %v779 = vadd.f32 %v294, %v778
    %780 = vdwg.mxu0
    %781 = vmatprep.subr.bf16.mxu0 %v581
    %782 = vmatpush1.bf16.msra.mxu0 %v580
    %783 = vmatprep.subr.bf16.mxu0 %v586
    %784 = vmatpush1.bf16.msra.mxu0 %v585
    %785 = vmatprep.subr.bf16.mxu0 %v591
    %786 = vmatpush1.bf16.msra.mxu0 %v590
    %787 = vmatprep.subr.bf16.mxu0 %v596
    %788 = vmatpush1.bf16.msra.mxu0 %v595
    %789 = vmatprep.subr.bf16.mxu0 %v601
    %790 = vmatpush1.bf16.msra.mxu0 %v600
    %791 = vmatprep.subr.bf16.mxu0 %v606
    %792 = vmatpush1.bf16.msra.mxu0 %v605
    %793 = vmatprep.subr.bf16.mxu0 %v611
    %794 = vmatpush1.bf16.msra.mxu0 %v610
    %795 = vmatprep.subr.bf16.mxu0 %v616
    %796 = vmatpush1.bf16.msra.mxu0 %v615
    %797 = vmatprep.subr.bf16.mxu0 %v621
    %798 = vmatpush1.bf16.msra.mxu0 %v620
    %799 = vmatprep.subr.bf16.mxu0 %v626
    %800 = vmatpush1.bf16.msra.mxu0 %v625
    %801 = vmatprep.subr.bf16.mxu0 %v631
    %802 = vmatpush1.bf16.msra.mxu0 %v630
    %803 = vmatprep.subr.bf16.mxu0 %v636
    %804 = vmatpush1.bf16.msra.mxu0 %v635
    %805 = vmatprep.subr.bf16.mxu0 %v641
    %806 = vmatpush1.bf16.msra.mxu0 %v640
    %807 = vmatprep.subr.bf16.mxu0 %v646
    %808 = vmatpush1.bf16.msra.mxu0 %v645
    %809 = vmatprep.subr.bf16.mxu0 %v651
    %810 = vmatpush1.bf16.msra.mxu0 %v650
    %811 = vmatprep.subr.bf16.mxu0 %v656
    %812 = vmatpush1.bf16.msra.mxu0 %v655
    %813 = vmatprep.mubr.bf16.mxu0 %v319
    %814 = vmatmul.mubr.bf16.gmra.mrb[0].mxu0 %v318
    %v815 = vpop.f32.mrb[0].mxu0
    %v816 = vadd.f32 %v298, %v815
    %v817 = vpop.f32.mrb[0].mxu0
    %v818 = vadd.f32 %v302, %v817
    %v819 = vpop.f32.mrb[0].mxu0
    %v820 = vadd.f32 %v298, %v819
    %v821 = vpop.f32.mrb[0].mxu0
    %v822 = vadd.f32 %v302, %v821
    %823 = vdwg.mxu0
    %824 = vmatprep.subr.bf16.mxu0 0
    %825 = vmatpush1.bf16.msra.mxu0 %v582
    %826 = vmatprep.subr.bf16.mxu0 0
    %827 = vmatpush1.bf16.msra.mxu0 %v587
    %828 = vmatprep.subr.bf16.mxu0 0
    %829 = vmatpush1.bf16.msra.mxu0 %v592
    %830 = vmatprep.subr.bf16.mxu0 0
    %831 = vmatpush1.bf16.msra.mxu0 %v597
    %832 = vmatprep.subr.bf16.mxu0 0
    %833 = vmatpush1.bf16.msra.mxu0 %v602
    %834 = vmatprep.subr.bf16.mxu0 0
    %835 = vmatpush1.bf16.msra.mxu0 %v607
    %836 = vmatprep.subr.bf16.mxu0 0
    %837 = vmatpush1.bf16.msra.mxu0 %v612
    %838 = vmatprep.subr.bf16.mxu0 0
    %839 = vmatpush1.bf16.msra.mxu0 %v617
    %840 = vmatprep.subr.bf16.mxu0 0
    %841 = vmatpush1.bf16.msra.mxu0 %v622
    %842 = vmatprep.subr.bf16.mxu0 0
    %843 = vmatpush1.bf16.msra.mxu0 %v627
    %844 = vmatprep.subr.bf16.mxu0 0
    %845 = vmatpush1.bf16.msra.mxu0 %v632
    %846 = vmatprep.subr.bf16.mxu0 0
    %847 = vmatpush1.bf16.msra.mxu0 %v637
    %848 = vmatprep.subr.bf16.mxu0 0
    %849 = vmatpush1.bf16.msra.mxu0 %v642
    %850 = vmatprep.subr.bf16.mxu0 0
    %851 = vmatpush1.bf16.msra.mxu0 %v647
    %852 = vmatprep.subr.bf16.mxu0 0
    %853 = vmatpush1.bf16.msra.mxu0 %v652
    %854 = vmatprep.subr.bf16.mxu0 0
    %855 = vmatpush1.bf16.msra.mxu0 %v657
    %856 = vmatprep.mubr.bf16.mxu0 %v319
    %857 = vmatmul.mubr.bf16.gmra.mrb[0].mxu0 %v318
    %v858 = vpop.f32.mrb[0].mxu0
    %v859 = vadd.f32 %v306, %v858
    %v860 = vpop.f32.mrb[0].mxu0
    %v861 = vpop.f32.mrb[0].mxu0
    %v862 = vadd.f32 %v306, %v861
    %v863 = vpop.f32.mrb[0].mxu0
    %864 = vdwg.mxu0
    %v865 = vld [vmem:[#allocation10] sm:$0xff]
    %v866 = vld [vmem:[#allocation10 + $0x8] sm:$0xff]
    %v867 = vld [vmem:[#allocation10 + $0x10] sm:$0xf]
    %v868 = vld [vmem:[#allocation10 + $0x14] sm:$0xff]
    %v869 = vld [vmem:[#allocation10 + $0x1c] sm:$0xff]
    %v870 = vld [vmem:[#allocation10 + $0x24] sm:$0xf]
    %v871 = vld [vmem:[#allocation10 + $0x28] sm:$0xff]
    %v872 = vld [vmem:[#allocation10 + $0x30] sm:$0xff]
    %v873 = vld [vmem:[#allocation10 + $0x38] sm:$0xf]
    %v874 = vld [vmem:[#allocation10 + $0x3c] sm:$0xff]
    %v875 = vld [vmem:[#allocation10 + $0x44] sm:$0xff]
    %v876 = vld [vmem:[#allocation10 + $0x4c] sm:$0xf]
    %v877 = vld [vmem:[#allocation10 + $0x50] sm:$0xff]
    %v878 = vld [vmem:[#allocation10 + $0x58] sm:$0xff]
    %v879 = vld [vmem:[#allocation10 + $0x60] sm:$0xf]
    %v880 = vld [vmem:[#allocation10 + $0x64] sm:$0xff]
    %v881 = vld [vmem:[#allocation10 + $0x6c] sm:$0xff]
    %v882 = vld [vmem:[#allocation10 + $0x74] sm:$0xf]
    %v883 = vld [vmem:[#allocation10 + $0x78] sm:$0xff]
    %v884 = vld [vmem:[#allocation10 + $0x80] sm:$0xff]
    %v885 = vld [vmem:[#allocation10 + $0x88] sm:$0xf]
    %v886 = vld [vmem:[#allocation10 + $0x8c] sm:$0xff]
    %v887 = vld [vmem:[#allocation10 + $0x94] sm:$0xff]
    %v888 = vld [vmem:[#allocation10 + $0x9c] sm:$0xf]
    %v889 = vld [vmem:[#allocation10 + $0xa0] sm:$0xff]
    %v890 = vld [vmem:[#allocation10 + $0xa8] sm:$0xff]
    %v891 = vld [vmem:[#allocation10 + $0xb0] sm:$0xf]
    %v892 = vld [vmem:[#allocation10 + $0xb4] sm:$0xff]
    %v893 = vld [vmem:[#allocation10 + $0xbc] sm:$0xff]
    %v894 = vld [vmem:[#allocation10 + $0xc4] sm:$0xf]
    %v895 = vld [vmem:[#allocation10 + $0xc8] sm:$0xff]
    %v896 = vld [vmem:[#allocation10 + $0xd0] sm:$0xff]
    %v897 = vld [vmem:[#allocation10 + $0xd8] sm:$0xf]
    %v898 = vld [vmem:[#allocation10 + $0xdc] sm:$0xff]
    %v899 = vld [vmem:[#allocation10 + $0xe4] sm:$0xff]
    %v900 = vld [vmem:[#allocation10 + $0xec] sm:$0xf]
    %v901 = vld [vmem:[#allocation10 + $0xf0] sm:$0xff]
    %v902 = vld [vmem:[#allocation10 + $0xf8] sm:$0xff]
    %v903 = vld [vmem:[#allocation10 + $0x100] sm:$0xf]
    %v904 = vld [vmem:[#allocation10 + $0x104] sm:$0xff]
    %v905 = vld [vmem:[#allocation10 + $0x10c] sm:$0xff]
    %v906 = vld [vmem:[#allocation10 + $0x114] sm:$0xf]
    %v907 = vld [vmem:[#allocation10 + $0x118] sm:$0xff]
    %v908 = vld [vmem:[#allocation10 + $0x120] sm:$0xff]
    %v909 = vld [vmem:[#allocation10 + $0x128] sm:$0xf]
    %v910 = vld [vmem:[#allocation10 + $0x12c] sm:$0xff]
    %v911 = vld [vmem:[#allocation10 + $0x134] sm:$0xff]
    %v912 = vld [vmem:[#allocation10 + $0x13c] sm:$0xf]
    %v961 = vunpack.c.l.b16 %v865
    %v962 = vunpack.c.h.b16 %v865
    %v963 = vunpack.c.l.b16 %v866
    %v964 = vunpack.c.h.b16 %v866
    %v965 = vunpack.c.l.b16 %v867
    %v966 = vunpack.c.l.b16 %v868
    %v967 = vunpack.c.h.b16 %v868
    %v968 = vunpack.c.l.b16 %v869
    %v969 = vunpack.c.h.b16 %v869
    %v970 = vunpack.c.l.b16 %v870
    %v971 = vunpack.c.l.b16 %v871
    %v972 = vunpack.c.h.b16 %v871
    %v973 = vunpack.c.l.b16 %v872
    %v974 = vunpack.c.h.b16 %v872
    %v975 = vunpack.c.l.b16 %v873
    %v976 = vunpack.c.l.b16 %v874
    %v977 = vunpack.c.h.b16 %v874
    %v978 = vunpack.c.l.b16 %v875
    %v979 = vunpack.c.h.b16 %v875
    %v980 = vunpack.c.l.b16 %v876
    %v981 = vunpack.c.l.b16 %v877
    %v982 = vunpack.c.h.b16 %v877
    %v983 = vunpack.c.l.b16 %v878
    %v984 = vunpack.c.h.b16 %v878
    %v985 = vunpack.c.l.b16 %v879
    %v986 = vunpack.c.l.b16 %v880
    %v987 = vunpack.c.h.b16 %v880
    %v988 = vunpack.c.l.b16 %v881
    %v989 = vunpack.c.h.b16 %v881
    %v990 = vunpack.c.l.b16 %v882
    %v991 = vunpack.c.l.b16 %v883
    %v992 = vunpack.c.h.b16 %v883
    %v993 = vunpack.c.l.b16 %v884
    %v994 = vunpack.c.h.b16 %v884
    %v995 = vunpack.c.l.b16 %v885
    %v996 = vunpack.c.l.b16 %v886
    %v997 = vunpack.c.h.b16 %v886
    %v998 = vunpack.c.l.b16 %v887
    %v999 = vunpack.c.h.b16 %v887
    %v1000 = vunpack.c.l.b16 %v888
    %v1001 = vunpack.c.l.b16 %v889
    %v1002 = vunpack.c.h.b16 %v889
    %v1003 = vunpack.c.l.b16 %v890
    %v1004 = vunpack.c.h.b16 %v890
    %v1005 = vunpack.c.l.b16 %v891
    %v1006 = vunpack.c.l.b16 %v892
    %v1007 = vunpack.c.h.b16 %v892
    %v1008 = vunpack.c.l.b16 %v893
    %v1009 = vunpack.c.h.b16 %v893
    %v1010 = vunpack.c.l.b16 %v894
    %v1011 = vunpack.c.l.b16 %v895
    %v1012 = vunpack.c.h.b16 %v895
    %v1013 = vunpack.c.l.b16 %v896
    %v1014 = vunpack.c.h.b16 %v896
    %v1015 = vunpack.c.l.b16 %v897
    %v1016 = vunpack.c.l.b16 %v898
    %v1017 = vunpack.c.h.b16 %v898
    %v1018 = vunpack.c.l.b16 %v899
    %v1019 = vunpack.c.h.b16 %v899
    %v1020 = vunpack.c.l.b16 %v900
    %v1021 = vunpack.c.l.b16 %v901
    %v1022 = vunpack.c.h.b16 %v901
    %v1023 = vunpack.c.l.b16 %v902
    %v1024 = vunpack.c.h.b16 %v902
    %v1025 = vunpack.c.l.b16 %v903
    %v1026 = vunpack.c.l.b16 %v904
    %v1027 = vunpack.c.h.b16 %v904
    %v1028 = vunpack.c.l.b16 %v905
    %v1029 = vunpack.c.h.b16 %v905
    %v1030 = vunpack.c.l.b16 %v906
    %v1031 = vunpack.c.l.b16 %v907
    %v1032 = vunpack.c.h.b16 %v907
    %v1033 = vunpack.c.l.b16 %v908
    %v1034 = vunpack.c.h.b16 %v908
    %v1035 = vunpack.c.l.b16 %v909
    %v1036 = vunpack.c.l.b16 %v910
    %v1037 = vunpack.c.h.b16 %v910
    %v1038 = vunpack.c.l.b16 %v911
    %v1039 = vunpack.c.h.b16 %v911
    %v1040 = vunpack.c.l.b16 %v912
    %v1041 = vpack.c.b16 %v966, %v961
    %v1042 = vpack.c.b16 %v967, %v962
    %v1043 = vpack.c.b16 %v968, %v963
    %v1044 = vpack.c.b16 %v969, %v964
    %v1045 = vpack.c.b16 %v970, %v965
    %v1046 = vpack.c.b16 %v976, %v971
    %v1047 = vpack.c.b16 %v977, %v972
    %v1048 = vpack.c.b16 %v978, %v973
    %v1049 = vpack.c.b16 %v979, %v974
    %v1050 = vpack.c.b16 %v980, %v975
    %v1051 = vpack.c.b16 %v986, %v981
    %v1052 = vpack.c.b16 %v987, %v982
    %v1053 = vpack.c.b16 %v988, %v983
    %v1054 = vpack.c.b16 %v989, %v984
    %v1055 = vpack.c.b16 %v990, %v985
    %v1056 = vpack.c.b16 %v996, %v991
    %v1057 = vpack.c.b16 %v997, %v992
    %v1058 = vpack.c.b16 %v998, %v993
    %v1059 = vpack.c.b16 %v999, %v994
    %v1060 = vpack.c.b16 %v1000, %v995
    %v1061 = vpack.c.b16 %v1006, %v1001
    %v1062 = vpack.c.b16 %v1007, %v1002
    %v1063 = vpack.c.b16 %v1008, %v1003
    %v1064 = vpack.c.b16 %v1009, %v1004
    %v1065 = vpack.c.b16 %v1010, %v1005
    %v1066 = vpack.c.b16 %v1016, %v1011
    %v1067 = vpack.c.b16 %v1017, %v1012
    %v1068 = vpack.c.b16 %v1018, %v1013
    %v1069 = vpack.c.b16 %v1019, %v1014
    %v1070 = vpack.c.b16 %v1020, %v1015
    %v1071 = vpack.c.b16 %v1026, %v1021
    %v1072 = vpack.c.b16 %v1027, %v1022
    %v1073 = vpack.c.b16 %v1028, %v1023
    %v1074 = vpack.c.b16 %v1029, %v1024
    %v1075 = vpack.c.b16 %v1030, %v1025
    %v1076 = vpack.c.b16 %v1036, %v1031
    %v1077 = vpack.c.b16 %v1037, %v1032
    %v1078 = vpack.c.b16 %v1038, %v1033
    %v1079 = vpack.c.b16 %v1039, %v1034
    %v1080 = vpack.c.b16 %v1040, %v1035
    %1121 = vmatprep.subr.bf16.mxu0 %v1042
    %1122 = vmatpush1.bf16.msra.mxu0 %v1041
    %1123 = vmatprep.subr.bf16.mxu0 %v1047
    %1124 = vmatpush1.bf16.msra.mxu0 %v1046
    %1125 = vmatprep.subr.bf16.mxu0 %v1052
    %1126 = vmatpush1.bf16.msra.mxu0 %v1051
    %1127 = vmatprep.subr.bf16.mxu0 %v1057
    %1128 = vmatpush1.bf16.msra.mxu0 %v1056
    %1129 = vmatprep.subr.bf16.mxu0 %v1062
    %1130 = vmatpush1.bf16.msra.mxu0 %v1061
    %1131 = vmatprep.subr.bf16.mxu0 %v1067
    %1132 = vmatpush1.bf16.msra.mxu0 %v1066
    %1133 = vmatprep.subr.bf16.mxu0 %v1072
    %1134 = vmatpush1.bf16.msra.mxu0 %v1071
    %1135 = vmatprep.subr.bf16.mxu0 %v1077
    %1136 = vmatpush1.bf16.msra.mxu0 %v1076
    %1137 = vmatprep.subr.bf16.mxu0 0
    %1138 = vmatpush1.bf16.msra.mxu0 0
    %1139 = vmatprep.subr.bf16.mxu0 0
    %1140 = vmatpush1.bf16.msra.mxu0 0
    %1141 = vmatprep.subr.bf16.mxu0 0
    %1142 = vmatpush1.bf16.msra.mxu0 0
    %1143 = vmatprep.subr.bf16.mxu0 0
    %1144 = vmatpush1.bf16.msra.mxu0 0
    %1145 = vmatprep.subr.bf16.mxu0 0
    %1146 = vmatpush1.bf16.msra.mxu0 0
    %1147 = vmatprep.subr.bf16.mxu0 0
    %1148 = vmatpush1.bf16.msra.mxu0 0
    %1149 = vmatprep.subr.bf16.mxu0 0
    %1150 = vmatpush1.bf16.msra.mxu0 0
    %1151 = vmatprep.subr.bf16.mxu0 0
    %1152 = vmatpush1.bf16.msra.mxu0 0
    %1153 = vmatprep.mubr.bf16.mxu0 0
    %1154 = vmatmul.mubr.bf16.gmra.mrb[0].mxu0 %v188
    %v1155 = vpop.f32.mrb[0].mxu0
    %v1156 = vadd.f32 0.0, %v1155
    %v1157 = vpop.f32.mrb[0].mxu0
    %v1158 = vadd.f32 0.0, %v1157
    %v1159 = vpop.f32.mrb[0].mxu0
    %v1160 = vadd.f32 0.0, %v1159
    %v1161 = vpop.f32.mrb[0].mxu0
    %v1162 = vadd.f32 0.0, %v1161
    %1163 = vdwg.mxu0
    %1164 = vmatprep.subr.bf16.mxu0 %v1044
    %1165 = vmatpush1.bf16.msra.mxu0 %v1043
    %1166 = vmatprep.subr.bf16.mxu0 %v1049
    %1167 = vmatpush1.bf16.msra.mxu0 %v1048
    %1168 = vmatprep.subr.bf16.mxu0 %v1054
    %1169 = vmatpush1.bf16.msra.mxu0 %v1053
    %1170 = vmatprep.subr.bf16.mxu0 %v1059
    %1171 = vmatpush1.bf16.msra.mxu0 %v1058
    %1172 = vmatprep.subr.bf16.mxu0 %v1064
    %1173 = vmatpush1.bf16.msra.mxu0 %v1063
    %1174 = vmatprep.subr.bf16.mxu0 %v1069
    %1175 = vmatpush1.bf16.msra.mxu0 %v1068
    %1176 = vmatprep.subr.bf16.mxu0 %v1074
    %1177 = vmatpush1.bf16.msra.mxu0 %v1073
    %1178 = vmatprep.subr.bf16.mxu0 %v1079
    %1179 = vmatpush1.bf16.msra.mxu0 %v1078
    %1180 = vmatprep.subr.bf16.mxu0 0
    %1181 = vmatpush1.bf16.msra.mxu0 0
    %1182 = vmatprep.subr.bf16.mxu0 0
    %1183 = vmatpush1.bf16.msra.mxu0 0
    %1184 = vmatprep.subr.bf16.mxu0 0
    %1185 = vmatpush1.bf16.msra.mxu0 0
    %1186 = vmatprep.subr.bf16.mxu0 0
    %1187 = vmatpush1.bf16.msra.mxu0 0
    %1188 = vmatprep.subr.bf16.mxu0 0
    %1189 = vmatpush1.bf16.msra.mxu0 0
    %1190 = vmatprep.subr.bf16.mxu0 0
    %1191 = vmatpush1.bf16.msra.mxu0 0
    %1192 = vmatprep.subr.bf16.mxu0 0
    %1193 = vmatpush1.bf16.msra.mxu0 0
    %1194 = vmatprep.subr.bf16.mxu0 0
    %1195 = vmatpush1.bf16.msra.mxu0 0
    %1196 = vmatprep.mubr.bf16.mxu0 0
    %1197 = vmatmul.mubr.bf16.gmra.mrb[0].mxu0 %v188
    %v1198 = vpop.f32.mrb[0].mxu0
    %v1199 = vadd.f32 0.0, %v1198
    %v1200 = vpop.f32.mrb[0].mxu0
    %v1201 = vadd.f32 0.0, %v1200
    %v1202 = vpop.f32.mrb[0].mxu0
    %v1203 = vadd.f32 0.0, %v1202
    %v1204 = vpop.f32.mrb[0].mxu0
    %v1205 = vadd.f32 0.0, %v1204
    %1206 = vdwg.mxu0
    %1207 = vmatprep.subr.bf16.mxu0 0
    %1208 = vmatpush1.bf16.msra.mxu0 %v1045
    %1209 = vmatprep.subr.bf16.mxu0 0
    %1210 = vmatpush1.bf16.msra.mxu0 %v1050
    %1211 = vmatprep.subr.bf16.mxu0 0
    %1212 = vmatpush1.bf16.msra.mxu0 %v1055
    %1213 = vmatprep.subr.bf16.mxu0 0
    %1214 = vmatpush1.bf16.msra.mxu0 %v1060
    %1215 = vmatprep.subr.bf16.mxu0 0
    %1216 = vmatpush1.bf16.msra.mxu0 %v1065
    %1217 = vmatprep.subr.bf16.mxu0 0
    %1218 = vmatpush1.bf16.msra.mxu0 %v1070
    %1219 = vmatprep.subr.bf16.mxu0 0
    %1220 = vmatpush1.bf16.msra.mxu0 %v1075
    %1221 = vmatprep.subr.bf16.mxu0 0
    %1222 = vmatpush1.bf16.msra.mxu0 %v1080
    %1223 = vmatprep.subr.bf16.mxu0 0
    %1224 = vmatpush1.bf16.msra.mxu0 0
    %1225 = vmatprep.subr.bf16.mxu0 0
    %1226 = vmatpush1.bf16.msra.mxu0 0
    %1227 = vmatprep.subr.bf16.mxu0 0
    %1228 = vmatpush1.bf16.msra.mxu0 0
    %1229 = vmatprep.subr.bf16.mxu0 0
    %1230 = vmatpush1.bf16.msra.mxu0 0
    %1231 = vmatprep.subr.bf16.mxu0 0
    %1232 = vmatpush1.bf16.msra.mxu0 0
    %1233 = vmatprep.subr.bf16.mxu0 0
    %1234 = vmatpush1.bf16.msra.mxu0 0
    %1235 = vmatprep.subr.bf16.mxu0 0
    %1236 = vmatpush1.bf16.msra.mxu0 0
    %1237 = vmatprep.subr.bf16.mxu0 0
    %1238 = vmatpush1.bf16.msra.mxu0 0
    %1239 = vmatprep.mubr.bf16.mxu0 0
    %1240 = vmatmul.mubr.bf16.gmra.mrb[0].mxu0 %v188
    %v1241 = vpop.f32.mrb[0].mxu0
    %v1242 = vadd.f32 0.0, %v1241
    %v1243 = vpop.f32.mrb[0].mxu0
    %v1244 = vpop.f32.mrb[0].mxu0
    %v1245 = vadd.f32 0.0, %v1244
    %v1246 = vpop.f32.mrb[0].mxu0
    %1247 = vdwg.mxu0
    %v1248 = vadd.f32 %v773, %v1156
    %v1249 = vadd.f32 %v775, %v1158
    %v1250 = vadd.f32 %v816, %v1199
    %v1251 = vadd.f32 %v818, %v1201
    %v1252 = vadd.f32 %v859, %v1242
    %v1253 = vadd.f32 %v777, %v1160
    %v1254 = vadd.f32 %v779, %v1162
    %v1255 = vadd.f32 %v820, %v1203
    %v1256 = vadd.f32 %v822, %v1205
    %v1257 = vadd.f32 %v862, %v1245
    %v1258 = vld [vmem:[#allocation11] sm:$0x1f]
    %v1260 = vlaneseq
    %v1261 = vshrl.u32 %v1260, 7
    %v1262 = vsub.s32 0, %v1261
    %v1263 = vrot.slane %v1258, %v1262
    %v1264 = vlaneseq
    %v1265 = vshrl.u32 %v1264, 7
    %v1266 = vsub.s32 1, %v1265
    %v1267 = vrot.slane %v1258, %v1266
    %v1268 = vlaneseq
    %v1269 = vshrl.u32 %v1268, 7
    %v1270 = vsub.s32 2, %v1269
    %v1271 = vrot.slane %v1258, %v1270
    %v1272 = vlaneseq
    %v1273 = vshrl.u32 %v1272, 7
    %v1274 = vsub.s32 3, %v1273
    %v1275 = vrot.slane %v1258, %v1274
    %v1276 = vlaneseq
    %v1277 = vshrl.u32 %v1276, 7
    %v1278 = vsub.s32 4, %v1277
    %v1279 = vrot.slane %v1258, %v1278
    %v1285 = vadd.f32 %v1248, %v1263
    %v1286 = vadd.f32 %v1249, %v1267
    %v1287 = vadd.f32 %v1250, %v1271
    %v1288 = vadd.f32 %v1251, %v1275
    %v1289 = vadd.f32 %v1252, %v1279
    %v1290 = vadd.f32 %v1253, %v1263
    %v1291 = vadd.f32 %v1254, %v1267
    %v1292 = vadd.f32 %v1255, %v1271
    %v1293 = vadd.f32 %v1256, %v1275
    %v1294 = vadd.f32 %v1257, %v1279
    %v1295 = vmul.f32 %v1285, 0.5
    %v1296 = vmul.f32 %v1290, 0.5
    %v1297 = vtanh.pop %v1295
    %v1298 = vtanh.pop %v1296
    %v1299 = vmul.f32 %v1297, 0.5
    %v1300 = vmul.f32 %v1298, 0.5
    %v1301 = vadd.f32 %v1299, 0.5
    %v1302 = vadd.f32 %v1300, 0.5
    %v1303 = vmul.f32 %v1286, 0.5
    %v1304 = vmul.f32 %v1291, 0.5
    %v1305 = vtanh.pop %v1303
    %v1306 = vtanh.pop %v1304
    %v1307 = vmul.f32 %v1305, 0.5
    %v1308 = vmul.f32 %v1306, 0.5
    %v1309 = vadd.f32 %v1307, 0.5
    %v1310 = vadd.f32 %v1308, 0.5
    %v1311 = vmul.f32 %v1287, 0.5
    %v1312 = vmul.f32 %v1292, 0.5
    %v1313 = vtanh.pop %v1311
    %v1314 = vtanh.pop %v1312
    %v1315 = vmul.f32 %v1313, 0.5
    %v1316 = vmul.f32 %v1314, 0.5
    %v1317 = vadd.f32 %v1315, 0.5
    %v1318 = vadd.f32 %v1316, 0.5
    %v1319 = vmax.f32 %v1288, %v1289
    %v1320 = vmax.f32 %v1293, %v1294
    %v1321 = vmul.f32 %v1309, %v186
    %v1322 = vmul.f32 %v1310, %v187
    %v1323 = vmul.f32 %v1301, %v1319
    %v1324 = vmul.f32 %v1302, %v1320
    %v1325 = vadd.f32 %v1321, %v1323
    %v1326 = vadd.f32 %v1322, %v1324
    %v1327 = vtanh.pop %v1325
    %v1328 = vtanh.pop %v1326
    %v1329 = vmul.f32 %v1317, %v1327
    %v1330 = vmul.f32 %v1318, %v1328
    %1331 = vst [vmem:[#allocation22] sm:$0xff] %v1329
    %1332 = vst [vmem:[#allocation22 + $0x8] sm:$0xff] %v1330
    %1333 = vst [vmem:[#allocation23] sm:$0xff] %v1325
    %1334 = vst [vmem:[#allocation23 + $0x8] sm:$0xff] %v1326
    %v1335 = vpack.c.bf16 %v1330, %v1329
    %s1336 = scalar_lea.vmem [#allocation5], 16
    %v1337 = vld [vmem:[%s1336] sm:$0xff]
    %v1338 = vld [vmem:[%s1336 + $0x8] sm:$0xff]
    %s1339 = scalar_lea.vmem [#allocation7], 16
    %v1340 = vld [vmem:[%s1339] sm:$0xff]
    %v1341 = vld [vmem:[%s1339 + $0x8] sm:$0xff]
    %v1342 = vpack.c.bf16 %v1338, %v1337
    %v1343 = vld [vmem:[#allocation13] sm:$0xff]
    %v1344 = vld [vmem:[#allocation13 + $0x8] sm:$0xff]
    %v1345 = vld [vmem:[#allocation13 + $0x10] sm:$0xf]
    %v1346 = vld [vmem:[#allocation13 + $0x14] sm:$0xff]
    %v1347 = vld [vmem:[#allocation13 + $0x1c] sm:$0xff]
    %v1348 = vld [vmem:[#allocation13 + $0x24] sm:$0xf]
    %v1349 = vld [vmem:[#allocation13 + $0x28] sm:$0xff]
    %v1350 = vld [vmem:[#allocation13 + $0x30] sm:$0xff]
    %v1351 = vld [vmem:[#allocation13 + $0x38] sm:$0xf]
    %v1352 = vld [vmem:[#allocation13 + $0x3c] sm:$0xff]
    %v1353 = vld [vmem:[#allocation13 + $0x44] sm:$0xff]
    %v1354 = vld [vmem:[#allocation13 + $0x4c] sm:$0xf]
    %v1355 = vld [vmem:[#allocation13 + $0x50] sm:$0xff]
    %v1356 = vld [vmem:[#allocation13 + $0x58] sm:$0xff]
    %v1357 = vld [vmem:[#allocation13 + $0x60] sm:$0xf]
    %v1358 = vld [vmem:[#allocation13 + $0x64] sm:$0xff]
    %v1359 = vld [vmem:[#allocation13 + $0x6c] sm:$0xff]
    %v1360 = vld [vmem:[#allocation13 + $0x74] sm:$0xf]
    %v1361 = vld [vmem:[#allocation13 + $0x78] sm:$0xff]
    %v1362 = vld [vmem:[#allocation13 + $0x80] sm:$0xff]
    %v1363 = vld [vmem:[#allocation13 + $0x88] sm:$0xf]
    %v1364 = vld [vmem:[#allocation13 + $0x8c] sm:$0xff]
    %v1365 = vld [vmem:[#allocation13 + $0x94] sm:$0xff]
    %v1366 = vld [vmem:[#allocation13 + $0x9c] sm:$0xf]
    %v1367 = vld [vmem:[#allocation13 + $0xa0] sm:$0xff]
    %v1368 = vld [vmem:[#allocation13 + $0xa8] sm:$0xff]
    %v1369 = vld [vmem:[#allocation13 + $0xb0] sm:$0xf]
    %v1370 = vld [vmem:[#allocation13 + $0xb4] sm:$0xff]
    %v1371 = vld [vmem:[#allocation13 + $0xbc] sm:$0xff]
    %v1372 = vld [vmem:[#allocation13 + $0xc4] sm:$0xf]
    %v1373 = vld [vmem:[#allocation13 + $0xc8] sm:$0xff]
    %v1374 = vld [vmem:[#allocation13 + $0xd0] sm:$0xff]
    %v1375 = vld [vmem:[#allocation13 + $0xd8] sm:$0xf]
    %v1376 = vld [vmem:[#allocation13 + $0xdc] sm:$0xff]
    %v1377 = vld [vmem:[#allocation13 + $0xe4] sm:$0xff]
    %v1378 = vld [vmem:[#allocation13 + $0xec] sm:$0xf]
    %v1379 = vld [vmem:[#allocation13 + $0xf0] sm:$0xff]
    %v1380 = vld [vmem:[#allocation13 + $0xf8] sm:$0xff]
    %v1381 = vld [vmem:[#allocation13 + $0x100] sm:$0xf]
    %v1382 = vld [vmem:[#allocation13 + $0x104] sm:$0xff]
    %v1383 = vld [vmem:[#allocation13 + $0x10c] sm:$0xff]
    %v1384 = vld [vmem:[#allocation13 + $0x114] sm:$0xf]
    %v1385 = vld [vmem:[#allocation13 + $0x118] sm:$0xff]
    %v1386 = vld [vmem:[#allocation13 + $0x120] sm:$0xff]
    %v1387 = vld [vmem:[#allocation13 + $0x128] sm:$0xf]
    %v1388 = vld [vmem:[#allocation13 + $0x12c] sm:$0xff]
    %v1389 = vld [vmem:[#allocation13 + $0x134] sm:$0xff]
    %v1390 = vld [vmem:[#allocation13 + $0x13c] sm:$0xf]
    %v1391 = vld [vmem:[#allocation14] sm:$0x1f]
    %v1393 = vlaneseq
    %v1394 = vshrl.u32 %v1393, 7
    %v1395 = vsub.s32 0, %v1394
    %v1396 = vrot.slane %v1391, %v1395
    %v1397 = vlaneseq
    %v1398 = vshrl.u32 %v1397, 7
    %v1399 = vsub.s32 1, %v1398
    %v1400 = vrot.slane %v1391, %v1399
    %v1401 = vlaneseq
    %v1402 = vshrl.u32 %v1401, 7
    %v1403 = vsub.s32 2, %v1402
    %v1404 = vrot.slane %v1391, %v1403
    %v1405 = vlaneseq
    %v1406 = vshrl.u32 %v1405, 7
    %v1407 = vsub.s32 3, %v1406
    %v1408 = vrot.slane %v1391, %v1407
    %v1409 = vlaneseq
    %v1410 = vshrl.u32 %v1409, 7
    %v1411 = vsub.s32 4, %v1410
    %v1412 = vrot.slane %v1391, %v1411
    %v1466 = vunpack.c.l.b16 %v1343
    %v1467 = vunpack.c.h.b16 %v1343
    %v1468 = vunpack.c.l.b16 %v1344
    %v1469 = vunpack.c.h.b16 %v1344
    %v1470 = vunpack.c.l.b16 %v1345
    %v1471 = vunpack.c.l.b16 %v1346
    %v1472 = vunpack.c.h.b16 %v1346
    %v1473 = vunpack.c.l.b16 %v1347
    %v1474 = vunpack.c.h.b16 %v1347
    %v1475 = vunpack.c.l.b16 %v1348
    %v1476 = vunpack.c.l.b16 %v1349
    %v1477 = vunpack.c.h.b16 %v1349
    %v1478 = vunpack.c.l.b16 %v1350
    %v1479 = vunpack.c.h.b16 %v1350
    %v1480 = vunpack.c.l.b16 %v1351
    %v1481 = vunpack.c.l.b16 %v1352
    %v1482 = vunpack.c.h.b16 %v1352
    %v1483 = vunpack.c.l.b16 %v1353
    %v1484 = vunpack.c.h.b16 %v1353
    %v1485 = vunpack.c.l.b16 %v1354
    %v1486 = vunpack.c.l.b16 %v1355
    %v1487 = vunpack.c.h.b16 %v1355
    %v1488 = vunpack.c.l.b16 %v1356
    %v1489 = vunpack.c.h.b16 %v1356
    %v1490 = vunpack.c.l.b16 %v1357
    %v1491 = vunpack.c.l.b16 %v1358
    %v1492 = vunpack.c.h.b16 %v1358
    %v1493 = vunpack.c.l.b16 %v1359
    %v1494 = vunpack.c.h.b16 %v1359
    %v1495 = vunpack.c.l.b16 %v1360
    %v1496 = vunpack.c.l.b16 %v1361
    %v1497 = vunpack.c.h.b16 %v1361
    %v1498 = vunpack.c.l.b16 %v1362
    %v1499 = vunpack.c.h.b16 %v1362
    %v1500 = vunpack.c.l.b16 %v1363
    %v1501 = vunpack.c.l.b16 %v1364
    %v1502 = vunpack.c.h.b16 %v1364
    %v1503 = vunpack.c.l.b16 %v1365
    %v1504 = vunpack.c.h.b16 %v1365
    %v1505 = vunpack.c.l.b16 %v1366
    %v1506 = vunpack.c.l.b16 %v1367
    %v1507 = vunpack.c.h.b16 %v1367
    %v1508 = vunpack.c.l.b16 %v1368
    %v1509 = vunpack.c.h.b16 %v1368
    %v1510 = vunpack.c.l.b16 %v1369
    %v1511 = vunpack.c.l.b16 %v1370
    %v1512 = vunpack.c.h.b16 %v1370
    %v1513 = vunpack.c.l.b16 %v1371
    %v1514 = vunpack.c.h.b16 %v1371
    %v1515 = vunpack.c.l.b16 %v1372
    %v1516 = vunpack.c.l.b16 %v1373
    %v1517 = vunpack.c.h.b16 %v1373
    %v1518 = vunpack.c.l.b16 %v1374
    %v1519 = vunpack.c.h.b16 %v1374
    %v1520 = vunpack.c.l.b16 %v1375
    %v1521 = vunpack.c.l.b16 %v1376
    %v1522 = vunpack.c.h.b16 %v1376
    %v1523 = vunpack.c.l.b16 %v1377
    %v1524 = vunpack.c.h.b16 %v1377
    %v1525 = vunpack.c.l.b16 %v1378
    %v1526 = vunpack.c.l.b16 %v1379
    %v1527 = vunpack.c.h.b16 %v1379
    %v1528 = vunpack.c.l.b16 %v1380
    %v1529 = vunpack.c.h.b16 %v1380
    %v1530 = vunpack.c.l.b16 %v1381
    %v1531 = vunpack.c.l.b16 %v1382
    %v1532 = vunpack.c.h.b16 %v1382
    %v1533 = vunpack.c.l.b16 %v1383
    %v1534 = vunpack.c.h.b16 %v1383
    %v1535 = vunpack.c.l.b16 %v1384
    %v1536 = vunpack.c.l.b16 %v1385
    %v1537 = vunpack.c.h.b16 %v1385
    %v1538 = vunpack.c.l.b16 %v1386
    %v1539 = vunpack.c.h.b16 %v1386
    %v1540 = vunpack.c.l.b16 %v1387
    %v1541 = vunpack.c.l.b16 %v1388
    %v1542 = vunpack.c.h.b16 %v1388
    %v1543 = vunpack.c.l.b16 %v1389
    %v1544 = vunpack.c.h.b16 %v1389
    %v1545 = vunpack.c.l.b16 %v1390
    %v1546 = vpack.c.b16 %v1471, %v1466
    %v1547 = vpack.c.b16 %v1472, %v1467
    %v1548 = vpack.c.b16 %v1473, %v1468
    %v1549 = vpack.c.b16 %v1474, %v1469
    %v1550 = vpack.c.b16 %v1475, %v1470
    %v1551 = vpack.c.b16 %v1481, %v1476
    %v1552 = vpack.c.b16 %v1482, %v1477
    %v1553 = vpack.c.b16 %v1483, %v1478
    %v1554 = vpack.c.b16 %v1484, %v1479
    %v1555 = vpack.c.b16 %v1485, %v1480
    %v1556 = vpack.c.b16 %v1491, %v1486
    %v1557 = vpack.c.b16 %v1492, %v1487
    %v1558 = vpack.c.b16 %v1493, %v1488
    %v1559 = vpack.c.b16 %v1494, %v1489
    %v1560 = vpack.c.b16 %v1495, %v1490
    %v1561 = vpack.c.b16 %v1501, %v1496
    %v1562 = vpack.c.b16 %v1502, %v1497
    %v1563 = vpack.c.b16 %v1503, %v1498
    %v1564 = vpack.c.b16 %v1504, %v1499
    %v1565 = vpack.c.b16 %v1505, %v1500
    %v1566 = vpack.c.b16 %v1511, %v1506
    %v1567 = vpack.c.b16 %v1512, %v1507
    %v1568 = vpack.c.b16 %v1513, %v1508
    %v1569 = vpack.c.b16 %v1514, %v1509
    %v1570 = vpack.c.b16 %v1515, %v1510
    %v1571 = vpack.c.b16 %v1521, %v1516
    %v1572 = vpack.c.b16 %v1522, %v1517
    %v1573 = vpack.c.b16 %v1523, %v1518
    %v1574 = vpack.c.b16 %v1524, %v1519
    %v1575 = vpack.c.b16 %v1525, %v1520
    %v1576 = vpack.c.b16 %v1531, %v1526
    %v1577 = vpack.c.b16 %v1532, %v1527
    %v1578 = vpack.c.b16 %v1533, %v1528
    %v1579 = vpack.c.b16 %v1534, %v1529
    %v1580 = vpack.c.b16 %v1535, %v1530
    %v1581 = vpack.c.b16 %v1541, %v1536
    %v1582 = vpack.c.b16 %v1542, %v1537
    %v1583 = vpack.c.b16 %v1543, %v1538
    %v1584 = vpack.c.b16 %v1544, %v1539
    %v1585 = vpack.c.b16 %v1545, %v1540
    %1626 = vmatprep.subr.bf16.mxu0 %v1547
    %1627 = vmatpush1.bf16.msra.mxu0 %v1546
    %1628 = vmatprep.subr.bf16.mxu0 %v1552
    %1629 = vmatpush1.bf16.msra.mxu0 %v1551
    %1630 = vmatprep.subr.bf16.mxu0 %v1557
    %1631 = vmatpush1.bf16.msra.mxu0 %v1556
    %1632 = vmatprep.subr.bf16.mxu0 %v1562
    %1633 = vmatpush1.bf16.msra.mxu0 %v1561
    %1634 = vmatprep.subr.bf16.mxu0 %v1567
    %1635 = vmatpush1.bf16.msra.mxu0 %v1566
    %1636 = vmatprep.subr.bf16.mxu0 %v1572
    %1637 = vmatpush1.bf16.msra.mxu0 %v1571
    %1638 = vmatprep.subr.bf16.mxu0 %v1577
    %1639 = vmatpush1.bf16.msra.mxu0 %v1576
    %1640 = vmatprep.subr.bf16.mxu0 %v1582
    %1641 = vmatpush1.bf16.msra.mxu0 %v1581
    %1642 = vmatprep.subr.bf16.mxu0 0
    %1643 = vmatpush1.bf16.msra.mxu0 0
    %1644 = vmatprep.subr.bf16.mxu0 0
    %1645 = vmatpush1.bf16.msra.mxu0 0
    %1646 = vmatprep.subr.bf16.mxu0 0
    %1647 = vmatpush1.bf16.msra.mxu0 0
    %1648 = vmatprep.subr.bf16.mxu0 0
    %1649 = vmatpush1.bf16.msra.mxu0 0
    %1650 = vmatprep.subr.bf16.mxu0 0
    %1651 = vmatpush1.bf16.msra.mxu0 0
    %1652 = vmatprep.subr.bf16.mxu0 0
    %1653 = vmatpush1.bf16.msra.mxu0 0
    %1654 = vmatprep.subr.bf16.mxu0 0
    %1655 = vmatpush1.bf16.msra.mxu0 0
    %1656 = vmatprep.subr.bf16.mxu0 0
    %1657 = vmatpush1.bf16.msra.mxu0 0
    %1658 = vmatprep.mubr.bf16.mxu0 0
    %1659 = vmatmul.mubr.bf16.gmra.mrb[0].mxu0 %v1335
    %v1660 = vpop.f32.mrb[0].mxu0
    %v1661 = vadd.f32 %v1396, %v1660
    %v1662 = vpop.f32.mrb[0].mxu0
    %v1663 = vadd.f32 %v1400, %v1662
    %v1664 = vpop.f32.mrb[0].mxu0
    %v1665 = vadd.f32 %v1396, %v1664
    %v1666 = vpop.f32.mrb[0].mxu0
    %v1667 = vadd.f32 %v1400, %v1666
    %1668 = vdwg.mxu0
    %1669 = vmatprep.subr.bf16.mxu0 %v1549
    %1670 = vmatpush1.bf16.msra.mxu0 %v1548
    %1671 = vmatprep.subr.bf16.mxu0 %v1554
    %1672 = vmatpush1.bf16.msra.mxu0 %v1553
    %1673 = vmatprep.subr.bf16.mxu0 %v1559
    %1674 = vmatpush1.bf16.msra.mxu0 %v1558
    %1675 = vmatprep.subr.bf16.mxu0 %v1564
    %1676 = vmatpush1.bf16.msra.mxu0 %v1563
    %1677 = vmatprep.subr.bf16.mxu0 %v1569
    %1678 = vmatpush1.bf16.msra.mxu0 %v1568
    %1679 = vmatprep.subr.bf16.mxu0 %v1574
    %1680 = vmatpush1.bf16.msra.mxu0 %v1573
    %1681 = vmatprep.subr.bf16.mxu0 %v1579
    %1682 = vmatpush1.bf16.msra.mxu0 %v1578
    %1683 = vmatprep.subr.bf16.mxu0 %v1584
    %1684 = vmatpush1.bf16.msra.mxu0 %v1583
    %1685 = vmatprep.subr.bf16.mxu0 0
    %1686 = vmatpush1.bf16.msra.mxu0 0
    %1687 = vmatprep.subr.bf16.mxu0 0
    %1688 = vmatpush1.bf16.msra.mxu0 0
    %1689 = vmatprep.subr.bf16.mxu0 0
    %1690 = vmatpush1.bf16.msra.mxu0 0
    %1691 = vmatprep.subr.bf16.mxu0 0
    %1692 = vmatpush1.bf16.msra.mxu0 0
    %1693 = vmatprep.subr.bf16.mxu0 0
    %1694 = vmatpush1.bf16.msra.mxu0 0
    %1695 = vmatprep.subr.bf16.mxu0 0
    %1696 = vmatpush1.bf16.msra.mxu0 0
    %1697 = vmatprep.subr.bf16.mxu0 0
    %1698 = vmatpush1.bf16.msra.mxu0 0
    %1699 = vmatprep.subr.bf16.mxu0 0
    %1700 = vmatpush1.bf16.msra.mxu0 0
    %1701 = vmatprep.mubr.bf16.mxu0 0
    %1702 = vmatmul.mubr.bf16.gmra.mrb[0].mxu0 %v1335
    %v1703 = vpop.f32.mrb[0].mxu0
    %v1704 = vadd.f32 %v1404, %v1703
    %v1705 = vpop.f32.mrb[0].mxu0
    %v1706 = vadd.f32 %v1408, %v1705
    %v1707 = vpop.f32.mrb[0].mxu0
    %v1708 = vadd.f32 %v1404, %v1707
    %v1709 = vpop.f32.mrb[0].mxu0
    %v1710 = vadd.f32 %v1408, %v1709
    %1711 = vdwg.mxu0
    %1712 = vmatprep.subr.bf16.mxu0 0
    %1713 = vmatpush1.bf16.msra.mxu0 %v1550
    %1714 = vmatprep.subr.bf16.mxu0 0
    %1715 = vmatpush1.bf16.msra.mxu0 %v1555
    %1716 = vmatprep.subr.bf16.mxu0 0
    %1717 = vmatpush1.bf16.msra.mxu0 %v1560
    %1718 = vmatprep.subr.bf16.mxu0 0
    %1719 = vmatpush1.bf16.msra.mxu0 %v1565
    %1720 = vmatprep.subr.bf16.mxu0 0
    %1721 = vmatpush1.bf16.msra.mxu0 %v1570
    %1722 = vmatprep.subr.bf16.mxu0 0
    %1723 = vmatpush1.bf16.msra.mxu0 %v1575
    %1724 = vmatprep.subr.bf16.mxu0 0
    %1725 = vmatpush1.bf16.msra.mxu0 %v1580
    %1726 = vmatprep.subr.bf16.mxu0 0
    %1727 = vmatpush1.bf16.msra.mxu0 %v1585
    %1728 = vmatprep.subr.bf16.mxu0 0
    %1729 = vmatpush1.bf16.msra.mxu0 0
    %1730 = vmatprep.subr.bf16.mxu0 0
    %1731 = vmatpush1.bf16.msra.mxu0 0
    %1732 = vmatprep.subr.bf16.mxu0 0
    %1733 = vmatpush1.bf16.msra.mxu0 0
    %1734 = vmatprep.subr.bf16.mxu0 0
    %1735 = vmatpush1.bf16.msra.mxu0 0
    %1736 = vmatprep.subr.bf16.mxu0 0
    %1737 = vmatpush1.bf16.msra.mxu0 0
    %1738 = vmatprep.subr.bf16.mxu0 0
    %1739 = vmatpush1.bf16.msra.mxu0 0
    %1740 = vmatprep.subr.bf16.mxu0 0
    %1741 = vmatpush1.bf16.msra.mxu0 0
    %1742 = vmatprep.subr.bf16.mxu0 0
    %1743 = vmatpush1.bf16.msra.mxu0 0
    %1744 = vmatprep.mubr.bf16.mxu0 0
    %1745 = vmatmul.mubr.bf16.gmra.mrb[0].mxu0 %v1335
    %v1746 = vpop.f32.mrb[0].mxu0
    %v1747 = vadd.f32 %v1412, %v1746
    %v1748 = vpop.f32.mrb[0].mxu0
    %v1749 = vpop.f32.mrb[0].mxu0
    %v1750 = vadd.f32 %v1412, %v1749
    %v1751 = vpop.f32.mrb[0].mxu0
    %1752 = vdwg.mxu0
    %s1753 = scalar_lea.vmem [#allocation10], 320
    %v1754 = vld [vmem:[%s1753] sm:$0xff]
    %v1755 = vld [vmem:[%s1753 + $0x8] sm:$0xff]
    %v1756 = vld [vmem:[%s1753 + $0x10] sm:$0xf]
    %v1757 = vld [vmem:[%s1753 + $0x14] sm:$0xff]
    %v1758 = vld [vmem:[%s1753 + $0x1c] sm:$0xff]
    %v1759 = vld [vmem:[%s1753 + $0x24] sm:$0xf]
    %v1760 = vld [vmem:[%s1753 + $0x28] sm:$0xff]
    %v1761 = vld [vmem:[%s1753 + $0x30] sm:$0xff]
    %v1762 = vld [vmem:[%s1753 + $0x38] sm:$0xf]
    %v1763 = vld [vmem:[%s1753 + $0x3c] sm:$0xff]
    %v1764 = vld [vmem:[%s1753 + $0x44] sm:$0xff]
    %v1765 = vld [vmem:[%s1753 + $0x4c] sm:$0xf]
    %v1766 = vld [vmem:[%s1753 + $0x50] sm:$0xff]
    %v1767 = vld [vmem:[%s1753 + $0x58] sm:$0xff]
    %v1768 = vld [vmem:[%s1753 + $0x60] sm:$0xf]
    %v1769 = vld [vmem:[%s1753 + $0x64] sm:$0xff]
    %v1770 = vld [vmem:[%s1753 + $0x6c] sm:$0xff]
    %v1771 = vld [vmem:[%s1753 + $0x74] sm:$0xf]
    %v1772 = vld [vmem:[%s1753 + $0x78] sm:$0xff]
    %v1773 = vld [vmem:[%s1753 + $0x80] sm:$0xff]
    %v1774 = vld [vmem:[%s1753 + $0x88] sm:$0xf]
    %v1775 = vld [vmem:[%s1753 + $0x8c] sm:$0xff]
    %v1776 = vld [vmem:[%s1753 + $0x94] sm:$0xff]
    %v1777 = vld [vmem:[%s1753 + $0x9c] sm:$0xf]
    %v1778 = vld [vmem:[%s1753 + $0xa0] sm:$0xff]
    %v1779 = vld [vmem:[%s1753 + $0xa8] sm:$0xff]
    %v1780 = vld [vmem:[%s1753 + $0xb0] sm:$0xf]
    %v1781 = vld [vmem:[%s1753 + $0xb4] sm:$0xff]
    %v1782 = vld [vmem:[%s1753 + $0xbc] sm:$0xff]
    %v1783 = vld [vmem:[%s1753 + $0xc4] sm:$0xf]
    %v1784 = vld [vmem:[%s1753 + $0xc8] sm:$0xff]
    %v1785 = vld [vmem:[%s1753 + $0xd0] sm:$0xff]
    %v1786 = vld [vmem:[%s1753 + $0xd8] sm:$0xf]
    %v1787 = vld [vmem:[%s1753 + $0xdc] sm:$0xff]
    %v1788 = vld [vmem:[%s1753 + $0xe4] sm:$0xff]
    %v1789 = vld [vmem:[%s1753 + $0xec] sm:$0xf]
    %v1790 = vld [vmem:[%s1753 + $0xf0] sm:$0xff]
    %v1791 = vld [vmem:[%s1753 + $0xf8] sm:$0xff]
    %v1792 = vld [vmem:[%s1753 + $0x100] sm:$0xf]
    %v1793 = vld [vmem:[%s1753 + $0x104] sm:$0xff]
    %v1794 = vld [vmem:[%s1753 + $0x10c] sm:$0xff]
    %v1795 = vld [vmem:[%s1753 + $0x114] sm:$0xf]
    %v1796 = vld [vmem:[%s1753 + $0x118] sm:$0xff]
    %v1797 = vld [vmem:[%s1753 + $0x120] sm:$0xff]
    %v1798 = vld [vmem:[%s1753 + $0x128] sm:$0xf]
    %v1799 = vld [vmem:[%s1753 + $0x12c] sm:$0xff]
    %v1800 = vld [vmem:[%s1753 + $0x134] sm:$0xff]
    %v1801 = vld [vmem:[%s1753 + $0x13c] sm:$0xf]
    %v1850 = vunpack.c.l.b16 %v1754
    %v1851 = vunpack.c.h.b16 %v1754
    %v1852 = vunpack.c.l.b16 %v1755
    %v1853 = vunpack.c.h.b16 %v1755
    %v1854 = vunpack.c.l.b16 %v1756
    %v1855 = vunpack.c.l.b16 %v1757
    %v1856 = vunpack.c.h.b16 %v1757
    %v1857 = vunpack.c.l.b16 %v1758
    %v1858 = vunpack.c.h.b16 %v1758
    %v1859 = vunpack.c.l.b16 %v1759
    %v1860 = vunpack.c.l.b16 %v1760
    %v1861 = vunpack.c.h.b16 %v1760
    %v1862 = vunpack.c.l.b16 %v1761
    %v1863 = vunpack.c.h.b16 %v1761
    %v1864 = vunpack.c.l.b16 %v1762
    %v1865 = vunpack.c.l.b16 %v1763
    %v1866 = vunpack.c.h.b16 %v1763
    %v1867 = vunpack.c.l.b16 %v1764
    %v1868 = vunpack.c.h.b16 %v1764
    %v1869 = vunpack.c.l.b16 %v1765
    %v1870 = vunpack.c.l.b16 %v1766
    %v1871 = vunpack.c.h.b16 %v1766
    %v1872 = vunpack.c.l.b16 %v1767
    %v1873 = vunpack.c.h.b16 %v1767
    %v1874 = vunpack.c.l.b16 %v1768
    %v1875 = vunpack.c.l.b16 %v1769
    %v1876 = vunpack.c.h.b16 %v1769
    %v1877 = vunpack.c.l.b16 %v1770
    %v1878 = vunpack.c.h.b16 %v1770
    %v1879 = vunpack.c.l.b16 %v1771
    %v1880 = vunpack.c.l.b16 %v1772
    %v1881 = vunpack.c.h.b16 %v1772
    %v1882 = vunpack.c.l.b16 %v1773
    %v1883 = vunpack.c.h.b16 %v1773
    %v1884 = vunpack.c.l.b16 %v1774
    %v1885 = vunpack.c.l.b16 %v1775
    %v1886 = vunpack.c.h.b16 %v1775
    %v1887 = vunpack.c.l.b16 %v1776
    %v1888 = vunpack.c.h.b16 %v1776
    %v1889 = vunpack.c.l.b16 %v1777
    %v1890 = vunpack.c.l.b16 %v1778
    %v1891 = vunpack.c.h.b16 %v1778
    %v1892 = vunpack.c.l.b16 %v1779
    %v1893 = vunpack.c.h.b16 %v1779
    %v1894 = vunpack.c.l.b16 %v1780
    %v1895 = vunpack.c.l.b16 %v1781
    %v1896 = vunpack.c.h.b16 %v1781
    %v1897 = vunpack.c.l.b16 %v1782
    %v1898 = vunpack.c.h.b16 %v1782
    %v1899 = vunpack.c.l.b16 %v1783
    %v1900 = vunpack.c.l.b16 %v1784
    %v1901 = vunpack.c.h.b16 %v1784
    %v1902 = vunpack.c.l.b16 %v1785
    %v1903 = vunpack.c.h.b16 %v1785
    %v1904 = vunpack.c.l.b16 %v1786
    %v1905 = vunpack.c.l.b16 %v1787
    %v1906 = vunpack.c.h.b16 %v1787
    %v1907 = vunpack.c.l.b16 %v1788
    %v1908 = vunpack.c.h.b16 %v1788
    %v1909 = vunpack.c.l.b16 %v1789
    %v1910 = vunpack.c.l.b16 %v1790
    %v1911 = vunpack.c.h.b16 %v1790
    %v1912 = vunpack.c.l.b16 %v1791
    %v1913 = vunpack.c.h.b16 %v1791
    %v1914 = vunpack.c.l.b16 %v1792
    %v1915 = vunpack.c.l.b16 %v1793
    %v1916 = vunpack.c.h.b16 %v1793
    %v1917 = vunpack.c.l.b16 %v1794
    %v1918 = vunpack.c.h.b16 %v1794
    %v1919 = vunpack.c.l.b16 %v1795
    %v1920 = vunpack.c.l.b16 %v1796
    %v1921 = vunpack.c.h.b16 %v1796
    %v1922 = vunpack.c.l.b16 %v1797
    %v1923 = vunpack.c.h.b16 %v1797
    %v1924 = vunpack.c.l.b16 %v1798
    %v1925 = vunpack.c.l.b16 %v1799
    %v1926 = vunpack.c.h.b16 %v1799
    %v1927 = vunpack.c.l.b16 %v1800
    %v1928 = vunpack.c.h.b16 %v1800
    %v1929 = vunpack.c.l.b16 %v1801
    %v1930 = vpack.c.b16 %v1855, %v1850
    %v1931 = vpack.c.b16 %v1856, %v1851
    %v1932 = vpack.c.b16 %v1857, %v1852
    %v1933 = vpack.c.b16 %v1858, %v1853
    %v1934 = vpack.c.b16 %v1859, %v1854
    %v1935 = vpack.c.b16 %v1865, %v1860
    %v1936 = vpack.c.b16 %v1866, %v1861
    %v1937 = vpack.c.b16 %v1867, %v1862
    %v1938 = vpack.c.b16 %v1868, %v1863
    %v1939 = vpack.c.b16 %v1869, %v1864
    %v1940 = vpack.c.b16 %v1875, %v1870
    %v1941 = vpack.c.b16 %v1876, %v1871
    %v1942 = vpack.c.b16 %v1877, %v1872
    %v1943 = vpack.c.b16 %v1878, %v1873
    %v1944 = vpack.c.b16 %v1879, %v1874
    %v1945 = vpack.c.b16 %v1885, %v1880
    %v1946 = vpack.c.b16 %v1886, %v1881
    %v1947 = vpack.c.b16 %v1887, %v1882
    %v1948 = vpack.c.b16 %v1888, %v1883
    %v1949 = vpack.c.b16 %v1889, %v1884
    %v1950 = vpack.c.b16 %v1895, %v1890
    %v1951 = vpack.c.b16 %v1896, %v1891
    %v1952 = vpack.c.b16 %v1897, %v1892
    %v1953 = vpack.c.b16 %v1898, %v1893
    %v1954 = vpack.c.b16 %v1899, %v1894
    %v1955 = vpack.c.b16 %v1905, %v1900
    %v1956 = vpack.c.b16 %v1906, %v1901
    %v1957 = vpack.c.b16 %v1907, %v1902
    %v1958 = vpack.c.b16 %v1908, %v1903
    %v1959 = vpack.c.b16 %v1909, %v1904
    %v1960 = vpack.c.b16 %v1915, %v1910
    %v1961 = vpack.c.b16 %v1916, %v1911
    %v1962 = vpack.c.b16 %v1917, %v1912
    %v1963 = vpack.c.b16 %v1918, %v1913
    %v1964 = vpack.c.b16 %v1919, %v1914
    %v1965 = vpack.c.b16 %v1925, %v1920
    %v1966 = vpack.c.b16 %v1926, %v1921
    %v1967 = vpack.c.b16 %v1927, %v1922
    %v1968 = vpack.c.b16 %v1928, %v1923
    %v1969 = vpack.c.b16 %v1929, %v1924
    %2010 = vmatprep.subr.bf16.mxu0 %v1931
    %2011 = vmatpush1.bf16.msra.mxu0 %v1930
    %2012 = vmatprep.subr.bf16.mxu0 %v1936
    %2013 = vmatpush1.bf16.msra.mxu0 %v1935
    %2014 = vmatprep.subr.bf16.mxu0 %v1941
    %2015 = vmatpush1.bf16.msra.mxu0 %v1940
    %2016 = vmatprep.subr.bf16.mxu0 %v1946
    %2017 = vmatpush1.bf16.msra.mxu0 %v1945
    %2018 = vmatprep.subr.bf16.mxu0 %v1951
    %2019 = vmatpush1.bf16.msra.mxu0 %v1950
    %2020 = vmatprep.subr.bf16.mxu0 %v1956
    %2021 = vmatpush1.bf16.msra.mxu0 %v1955
    %2022 = vmatprep.subr.bf16.mxu0 %v1961
    %2023 = vmatpush1.bf16.msra.mxu0 %v1960
    %2024 = vmatprep.subr.bf16.mxu0 %v1966
    %2025 = vmatpush1.bf16.msra.mxu0 %v1965
    %2026 = vmatprep.subr.bf16.mxu0 0
    %2027 = vmatpush1.bf16.msra.mxu0 0
    %2028 = vmatprep.subr.bf16.mxu0 0
    %2029 = vmatpush1.bf16.msra.mxu0 0
    %2030 = vmatprep.subr.bf16.mxu0 0
    %2031 = vmatpush1.bf16.msra.mxu0 0
    %2032 = vmatprep.subr.bf16.mxu0 0
    %2033 = vmatpush1.bf16.msra.mxu0 0
    %2034 = vmatprep.subr.bf16.mxu0 0
    %2035 = vmatpush1.bf16.msra.mxu0 0
    %2036 = vmatprep.subr.bf16.mxu0 0
    %2037 = vmatpush1.bf16.msra.mxu0 0
    %2038 = vmatprep.subr.bf16.mxu0 0
    %2039 = vmatpush1.bf16.msra.mxu0 0
    %2040 = vmatprep.subr.bf16.mxu0 0
    %2041 = vmatpush1.bf16.msra.mxu0 0
    %2042 = vmatprep.mubr.bf16.mxu0 0
    %2043 = vmatmul.mubr.bf16.gmra.mrb[0].mxu0 %v1342
    %v2044 = vpop.f32.mrb[0].mxu0
    %v2045 = vadd.f32 0.0, %v2044
    %v2046 = vpop.f32.mrb[0].mxu0
    %v2047 = vadd.f32 0.0, %v2046
    %v2048 = vpop.f32.mrb[0].mxu0
    %v2049 = vadd.f32 0.0, %v2048
    %v2050 = vpop.f32.mrb[0].mxu0
    %v2051 = vadd.f32 0.0, %v2050
    %2052 = vdwg.mxu0
    %2053 = vmatprep.subr.bf16.mxu0 %v1933
    %2054 = vmatpush1.bf16.msra.mxu0 %v1932
    %2055 = vmatprep.subr.bf16.mxu0 %v1938
    %2056 = vmatpush1.bf16.msra.mxu0 %v1937
    %2057 = vmatprep.subr.bf16.mxu0 %v1943
    %2058 = vmatpush1.bf16.msra.mxu0 %v1942
    %2059 = vmatprep.subr.bf16.mxu0 %v1948
    %2060 = vmatpush1.bf16.msra.mxu0 %v1947
    %2061 = vmatprep.subr.bf16.mxu0 %v1953
    %2062 = vmatpush1.bf16.msra.mxu0 %v1952
    %2063 = vmatprep.subr.bf16.mxu0 %v1958
    %2064 = vmatpush1.bf16.msra.mxu0 %v1957
    %2065 = vmatprep.subr.bf16.mxu0 %v1963
    %2066 = vmatpush1.bf16.msra.mxu0 %v1962
    %2067 = vmatprep.subr.bf16.mxu0 %v1968
    %2068 = vmatpush1.bf16.msra.mxu0 %v1967
    %2069 = vmatprep.subr.bf16.mxu0 0
    %2070 = vmatpush1.bf16.msra.mxu0 0
    %2071 = vmatprep.subr.bf16.mxu0 0
    %2072 = vmatpush1.bf16.msra.mxu0 0
    %2073 = vmatprep.subr.bf16.mxu0 0
    %2074 = vmatpush1.bf16.msra.mxu0 0
    %2075 = vmatprep.subr.bf16.mxu0 0
    %2076 = vmatpush1.bf16.msra.mxu0 0
    %2077 = vmatprep.subr.bf16.mxu0 0
    %2078 = vmatpush1.bf16.msra.mxu0 0
    %2079 = vmatprep.subr.bf16.mxu0 0
    %2080 = vmatpush1.bf16.msra.mxu0 0
    %2081 = vmatprep.subr.bf16.mxu0 0
    %2082 = vmatpush1.bf16.msra.mxu0 0
    %2083 = vmatprep.subr.bf16.mxu0 0
    %2084 = vmatpush1.bf16.msra.mxu0 0
    %2085 = vmatprep.mubr.bf16.mxu0 0
    %2086 = vmatmul.mubr.bf16.gmra.mrb[0].mxu0 %v1342
    %v2087 = vpop.f32.mrb[0].mxu0
    %v2088 = vadd.f32 0.0, %v2087
    %v2089 = vpop.f32.mrb[0].mxu0
    %v2090 = vadd.f32 0.0, %v2089
    %v2091 = vpop.f32.mrb[0].mxu0
    %v2092 = vadd.f32 0.0, %v2091
    %v2093 = vpop.f32.mrb[0].mxu0
    %v2094 = vadd.f32 0.0, %v2093
    %2095 = vdwg.mxu0
    %2096 = vmatprep.subr.bf16.mxu0 0
    %2097 = vmatpush1.bf16.msra.mxu0 %v1934
    %2098 = vmatprep.subr.bf16.mxu0 0
    %2099 = vmatpush1.bf16.msra.mxu0 %v1939
    %2100 = vmatprep.subr.bf16.mxu0 0
    %2101 = vmatpush1.bf16.msra.mxu0 %v1944
    %2102 = vmatprep.subr.bf16.mxu0 0
    %2103 = vmatpush1.bf16.msra.mxu0 %v1949
    %2104 = vmatprep.subr.bf16.mxu0 0
    %2105 = vmatpush1.bf16.msra.mxu0 %v1954
    %2106 = vmatprep.subr.bf16.mxu0 0
    %2107 = vmatpush1.bf16.msra.mxu0 %v1959
    %2108 = vmatprep.subr.bf16.mxu0 0
    %2109 = vmatpush1.bf16.msra.mxu0 %v1964
    %2110 = vmatprep.subr.bf16.mxu0 0
    %2111 = vmatpush1.bf16.msra.mxu0 %v1969
    %2112 = vmatprep.subr.bf16.mxu0 0
    %2113 = vmatpush1.bf16.msra.mxu0 0
    %2114 = vmatprep.subr.bf16.mxu0 0
    %2115 = vmatpush1.bf16.msra.mxu0 0
    %2116 = vmatprep.subr.bf16.mxu0 0
    %2117 = vmatpush1.bf16.msra.mxu0 0
    %2118 = vmatprep.subr.bf16.mxu0 0
    %2119 = vmatpush1.bf16.msra.mxu0 0
    %2120 = vmatprep.subr.bf16.mxu0 0
    %2121 = vmatpush1.bf16.msra.mxu0 0
    %2122 = vmatprep.subr.bf16.mxu0 0
    %2123 = vmatpush1.bf16.msra.mxu0 0
    %2124 = vmatprep.subr.bf16.mxu0 0
    %2125 = vmatpush1.bf16.msra.mxu0 0
    %2126 = vmatprep.subr.bf16.mxu0 0
    %2127 = vmatpush1.bf16.msra.mxu0 0
    %2128 = vmatprep.mubr.bf16.mxu0 0
    %2129 = vmatmul.mubr.bf16.gmra.mrb[0].mxu0 %v1342
    %v2130 = vpop.f32.mrb[0].mxu0
    %v2131 = vadd.f32 0.0, %v2130
    %v2132 = vpop.f32.mrb[0].mxu0
    %v2133 = vpop.f32.mrb[0].mxu0
    %v2134 = vadd.f32 0.0, %v2133
    %v2135 = vpop.f32.mrb[0].mxu0
    %2136 = vdwg.mxu0
    %v2137 = vadd.f32 %v1661, %v2045
    %v2138 = vadd.f32 %v1663, %v2047
    %v2139 = vadd.f32 %v1704, %v2088
    %v2140 = vadd.f32 %v1706, %v2090
    %v2141 = vadd.f32 %v1747, %v2131
    %v2142 = vadd.f32 %v1665, %v2049
    %v2143 = vadd.f32 %v1667, %v2051
    %v2144 = vadd.f32 %v1708, %v2092
    %v2145 = vadd.f32 %v1710, %v2094
    %v2146 = vadd.f32 %v1750, %v2134
    %s2147 = scalar_lea.vmem [#allocation11], 5
    %v2148 = vld [vmem:[%s2147] sm:$0x1f]
    %v2150 = vlaneseq
    %v2151 = vshrl.u32 %v2150, 7
    %v2152 = vsub.s32 0, %v2151
    %v2153 = vrot.slane %v2148, %v2152
    %v2154 = vlaneseq
    %v2155 = vshrl.u32 %v2154, 7
    %v2156 = vsub.s32 1, %v2155
    %v2157 = vrot.slane %v2148, %v2156
    %v2158 = vlaneseq
    %v2159 = vshrl.u32 %v2158, 7
    %v2160 = vsub.s32 2, %v2159
    %v2161 = vrot.slane %v2148, %v2160
    %v2162 = vlaneseq
    %v2163 = vshrl.u32 %v2162, 7
    %v2164 = vsub.s32 3, %v2163
    %v2165 = vrot.slane %v2148, %v2164
    %v2166 = vlaneseq
    %v2167 = vshrl.u32 %v2166, 7
    %v2168 = vsub.s32 4, %v2167
    %v2169 = vrot.slane %v2148, %v2168
    %v2175 = vadd.f32 %v2137, %v2153
    %v2176 = vadd.f32 %v2138, %v2157
    %v2177 = vadd.f32 %v2139, %v2161
    %v2178 = vadd.f32 %v2140, %v2165
    %v2179 = vadd.f32 %v2141, %v2169
    %v2180 = vadd.f32 %v2142, %v2153
    %v2181 = vadd.f32 %v2143, %v2157
    %v2182 = vadd.f32 %v2144, %v2161
    %v2183 = vadd.f32 %v2145, %v2165
    %v2184 = vadd.f32 %v2146, %v2169
    %v2185 = vmul.f32 %v2175, 0.5
    %v2186 = vmul.f32 %v2180, 0.5
    %v2187 = vtanh.pop %v2185
    %v2188 = vtanh.pop %v2186
    %v2189 = vmul.f32 %v2187, 0.5
    %v2190 = vmul.f32 %v2188, 0.5
    %v2191 = vadd.f32 %v2189, 0.5
    %v2192 = vadd.f32 %v2190, 0.5
    %v2193 = vmul.f32 %v2176, 0.5
    %v2194 = vmul.f32 %v2181, 0.5
    %v2195 = vtanh.pop %v2193
    %v2196 = vtanh.pop %v2194
    %v2197 = vmul.f32 %v2195, 0.5
    %v2198 = vmul.f32 %v2196, 0.5
    %v2199 = vadd.f32 %v2197, 0.5
    %v2200 = vadd.f32 %v2198, 0.5
    %v2201 = vmul.f32 %v2177, 0.5
    %v2202 = vmul.f32 %v2182, 0.5
    %v2203 = vtanh.pop %v2201
    %v2204 = vtanh.pop %v2202
    %v2205 = vmul.f32 %v2203, 0.5
    %v2206 = vmul.f32 %v2204, 0.5
    %v2207 = vadd.f32 %v2205, 0.5
    %v2208 = vadd.f32 %v2206, 0.5
    %v2209 = vmax.f32 %v2178, %v2179
    %v2210 = vmax.f32 %v2183, %v2184
    %v2211 = vmul.f32 %v2199, %v1340
    %v2212 = vmul.f32 %v2200, %v1341
    %v2213 = vmul.f32 %v2191, %v2209
    %v2214 = vmul.f32 %v2192, %v2210
    %v2215 = vadd.f32 %v2211, %v2213
    %v2216 = vadd.f32 %v2212, %v2214
    %v2217 = vtanh.pop %v2215
    %v2218 = vtanh.pop %v2216
    %v2219 = vmul.f32 %v2207, %v2217
    %v2220 = vmul.f32 %v2208, %v2218
    %v2221 = vld [vmem:[%s9] sm:$0xf]
    %v2222 = vld [vmem:[%s9 + $0x4] sm:$0xf]
    %v2223 = vld [vmem:[%s9 + $0x8] sm:$0xf]
    %v2224 = vld [vmem:[%s9 + $0xc] sm:$0xf]
    %v2225 = vld [vmem:[%s9 + $0x10] sm:$0xf]
    %v2226 = vld [vmem:[%s9 + $0x14] sm:$0xf]
    %v2227 = vld [vmem:[%s9 + $0x18] sm:$0xf]
    %v2228 = vld [vmem:[%s9 + $0x1c] sm:$0xf]
    %v2229 = vld [vmem:[%s9 + $0x20] sm:$0xf]
    %v2230 = vld [vmem:[%s9 + $0x24] sm:$0xf]
    %v2231 = vld [vmem:[%s9 + $0x28] sm:$0xf]
    %v2232 = vld [vmem:[%s9 + $0x2c] sm:$0xf]
    %v2233 = vld [vmem:[%s9 + $0x30] sm:$0xf]
    %v2234 = vld [vmem:[%s9 + $0x34] sm:$0xf]
    %v2235 = vld [vmem:[%s9 + $0x38] sm:$0xf]
    %v2236 = vld [vmem:[%s9 + $0x3c] sm:$0xf]
    %v2237 = vld [vmem:[#allocation16] sm:$0x1]
    %v2239 = vlaneseq
    %v2240 = vshrl.u32 %v2239, 7
    %v2241 = vsub.s32 0, %v2240
    %v2242 = vrot.slane %v2237, %v2241
    %v2260 = vunpack.c.l.b16 %v2221
    %v2261 = vunpack.c.l.b16 %v2222
    %v2262 = vunpack.c.l.b16 %v2223
    %v2263 = vunpack.c.l.b16 %v2224
    %v2264 = vunpack.c.l.b16 %v2225
    %v2265 = vunpack.c.l.b16 %v2226
    %v2266 = vunpack.c.l.b16 %v2227
    %v2267 = vunpack.c.l.b16 %v2228
    %v2268 = vunpack.c.l.b16 %v2229
    %v2269 = vunpack.c.l.b16 %v2230
    %v2270 = vunpack.c.l.b16 %v2231
    %v2271 = vunpack.c.l.b16 %v2232
    %v2272 = vunpack.c.l.b16 %v2233
    %v2273 = vunpack.c.l.b16 %v2234
    %v2274 = vunpack.c.l.b16 %v2235
    %v2275 = vunpack.c.l.b16 %v2236
    %v2276 = vpack.c.b16 %v2261, %v2260
    %v2277 = vpack.c.b16 %v2263, %v2262
    %v2278 = vpack.c.b16 %v2265, %v2264
    %v2279 = vpack.c.b16 %v2267, %v2266
    %v2280 = vpack.c.b16 %v2269, %v2268
    %v2281 = vpack.c.b16 %v2271, %v2270
    %v2282 = vpack.c.b16 %v2273, %v2272
    %v2283 = vpack.c.b16 %v2275, %v2274
    %2292 = vmatprep.subr.bf16.mxu0 0
    %2293 = vmatpush1.bf16.msra.mxu0 %v2276
    %2294 = vmatprep.subr.bf16.mxu0 0
    %2295 = vmatpush1.bf16.msra.mxu0 %v2277
    %2296 = vmatprep.subr.bf16.mxu0 0
    %2297 = vmatpush1.bf16.msra.mxu0 %v2278
    %2298 = vmatprep.subr.bf16.mxu0 0
    %2299 = vmatpush1.bf16.msra.mxu0 %v2279
    %2300 = vmatprep.subr.bf16.mxu0 0
    %2301 = vmatpush1.bf16.msra.mxu0 %v2280
    %2302 = vmatprep.subr.bf16.mxu0 0
    %2303 = vmatpush1.bf16.msra.mxu0 %v2281
    %2304 = vmatprep.subr.bf16.mxu0 0
    %2305 = vmatpush1.bf16.msra.mxu0 %v2282
    %2306 = vmatprep.subr.bf16.mxu0 0
    %2307 = vmatpush1.bf16.msra.mxu0 %v2283
    %2308 = vmatprep.subr.bf16.mxu0 0
    %2309 = vmatpush1.bf16.msra.mxu0 0
    %2310 = vmatprep.subr.bf16.mxu0 0
    %2311 = vmatpush1.bf16.msra.mxu0 0
    %2312 = vmatprep.subr.bf16.mxu0 0
    %2313 = vmatpush1.bf16.msra.mxu0 0
    %2314 = vmatprep.subr.bf16.mxu0 0
    %2315 = vmatpush1.bf16.msra.mxu0 0
    %2316 = vmatprep.subr.bf16.mxu0 0
    %2317 = vmatpush1.bf16.msra.mxu0 0
    %2318 = vmatprep.subr.bf16.mxu0 0
    %2319 = vmatpush1.bf16.msra.mxu0 0
    %2320 = vmatprep.subr.bf16.mxu0 0
    %2321 = vmatpush1.bf16.msra.mxu0 0
    %2322 = vmatprep.subr.bf16.mxu0 0
    %2323 = vmatpush1.bf16.msra.mxu0 0
    %2324 = vmatprep.mubr.bf16.mxu0 0
    %2325 = vmatmul.mubr.bf16.gmra.mrb[0].mxu0 %v1335
    %v2326 = vpop.f32.mrb[0].mxu0
    %v2327 = vadd.f32 %v2242, %v2326
    %v2328 = vpop.f32.mrb[0].mxu0
    %v2329 = vpop.f32.mrb[0].mxu0
    %v2330 = vadd.f32 %v2242, %v2329
    %v2331 = vpop.f32.mrb[0].mxu0
    %2332 = vdwg.mxu0
    %v2333 = vld [vmem:[%s11] sm:$0xf]
    %v2334 = vld [vmem:[%s11 + $0x4] sm:$0xf]
    %v2335 = vld [vmem:[%s11 + $0x8] sm:$0xf]
    %v2336 = vld [vmem:[%s11 + $0xc] sm:$0xf]
    %v2337 = vld [vmem:[%s11 + $0x10] sm:$0xf]
    %v2338 = vld [vmem:[%s11 + $0x14] sm:$0xf]
    %v2339 = vld [vmem:[%s11 + $0x18] sm:$0xf]
    %v2340 = vld [vmem:[%s11 + $0x1c] sm:$0xf]
    %v2341 = vld [vmem:[%s11 + $0x20] sm:$0xf]
    %v2342 = vld [vmem:[%s11 + $0x24] sm:$0xf]
    %v2343 = vld [vmem:[%s11 + $0x28] sm:$0xf]
    %v2344 = vld [vmem:[%s11 + $0x2c] sm:$0xf]
    %v2345 = vld [vmem:[%s11 + $0x30] sm:$0xf]
    %v2346 = vld [vmem:[%s11 + $0x34] sm:$0xf]
    %v2347 = vld [vmem:[%s11 + $0x38] sm:$0xf]
    %v2348 = vld [vmem:[%s11 + $0x3c] sm:$0xf]
    %v2365 = vunpack.c.l.b16 %v2333
    %v2366 = vunpack.c.l.b16 %v2334
    %v2367 = vunpack.c.l.b16 %v2335
    %v2368 = vunpack.c.l.b16 %v2336
    %v2369 = vunpack.c.l.b16 %v2337
    %v2370 = vunpack.c.l.b16 %v2338
    %v2371 = vunpack.c.l.b16 %v2339
    %v2372 = vunpack.c.l.b16 %v2340
    %v2373 = vunpack.c.l.b16 %v2341
    %v2374 = vunpack.c.l.b16 %v2342
    %v2375 = vunpack.c.l.b16 %v2343
    %v2376 = vunpack.c.l.b16 %v2344
    %v2377 = vunpack.c.l.b16 %v2345
    %v2378 = vunpack.c.l.b16 %v2346
    %v2379 = vunpack.c.l.b16 %v2347
    %v2380 = vunpack.c.l.b16 %v2348
    %v2381 = vpack.c.b16 %v2366, %v2365
    %v2382 = vpack.c.b16 %v2368, %v2367
    %v2383 = vpack.c.b16 %v2370, %v2369
    %v2384 = vpack.c.b16 %v2372, %v2371
    %v2385 = vpack.c.b16 %v2374, %v2373
    %v2386 = vpack.c.b16 %v2376, %v2375
    %v2387 = vpack.c.b16 %v2378, %v2377
    %v2388 = vpack.c.b16 %v2380, %v2379
    %2397 = vmatprep.subr.bf16.mxu0 0
    %2398 = vmatpush1.bf16.msra.mxu0 %v2381
    %2399 = vmatprep.subr.bf16.mxu0 0
    %2400 = vmatpush1.bf16.msra.mxu0 %v2382
    %2401 = vmatprep.subr.bf16.mxu0 0
    %2402 = vmatpush1.bf16.msra.mxu0 %v2383
    %2403 = vmatprep.subr.bf16.mxu0 0
    %2404 = vmatpush1.bf16.msra.mxu0 %v2384
    %2405 = vmatprep.subr.bf16.mxu0 0
    %2406 = vmatpush1.bf16.msra.mxu0 %v2385
    %2407 = vmatprep.subr.bf16.mxu0 0
    %2408 = vmatpush1.bf16.msra.mxu0 %v2386
    %2409 = vmatprep.subr.bf16.mxu0 0
    %2410 = vmatpush1.bf16.msra.mxu0 %v2387
    %2411 = vmatprep.subr.bf16.mxu0 0
    %2412 = vmatpush1.bf16.msra.mxu0 %v2388
    %2413 = vmatprep.subr.bf16.mxu0 0
    %2414 = vmatpush1.bf16.msra.mxu0 0
    %2415 = vmatprep.subr.bf16.mxu0 0
    %2416 = vmatpush1.bf16.msra.mxu0 0
    %2417 = vmatprep.subr.bf16.mxu0 0
    %2418 = vmatpush1.bf16.msra.mxu0 0
    %2419 = vmatprep.subr.bf16.mxu0 0
    %2420 = vmatpush1.bf16.msra.mxu0 0
    %2421 = vmatprep.subr.bf16.mxu0 0
    %2422 = vmatpush1.bf16.msra.mxu0 0
    %2423 = vmatprep.subr.bf16.mxu0 0
    %2424 = vmatpush1.bf16.msra.mxu0 0
    %2425 = vmatprep.subr.bf16.mxu0 0
    %2426 = vmatpush1.bf16.msra.mxu0 0
    %2427 = vmatprep.subr.bf16.mxu0 0
    %2428 = vmatpush1.bf16.msra.mxu0 0
    %2429 = vmatprep.mubr.bf16.mxu0 0
    %2430 = vmatmul.mubr.bf16.gmra.mrb[0].mxu0 %v1342
    %v2431 = vpop.f32.mrb[0].mxu0
    %v2432 = vadd.f32 0.0, %v2431
    %v2433 = vpop.f32.mrb[0].mxu0
    %v2434 = vpop.f32.mrb[0].mxu0
    %v2435 = vadd.f32 0.0, %v2434
    %v2436 = vpop.f32.mrb[0].mxu0
    %2437 = vdwg.mxu0
    %v2438 = vadd.f32 %v2327, %v2432
    %v2439 = vadd.f32 %v2330, %v2435
    %v2440 = vld [vmem:[#allocation17] sm:$0x1]
    %v2442 = vlaneseq
    %v2443 = vshrl.u32 %v2442, 7
    %v2444 = vsub.s32 0, %v2443
    %v2445 = vrot.slane %v2440, %v2444
    %v2447 = vadd.f32 %v2438, %v2445
    %v2448 = vadd.f32 %v2439, %v2445
    %v2449 = vmul.f32 %v2447, 0.5
    %v2450 = vmul.f32 %v2448, 0.5
    %v2451 = vtanh.pop %v2449
    %v2452 = vtanh.pop %v2450
    %v2453 = vmul.f32 %v2451, 0.5
    %v2454 = vmul.f32 %v2452, 0.5
    %v2455 = vadd.f32 %v2453, 0.5
    %v2456 = vadd.f32 %v2454, 0.5
    %v2457 = vmul.f32 %v2455, %v2217
    %v2458 = vmul.f32 %v2456, %v2218
    %s2459 = scalar_lea.vmem [#allocation22], 16
    %2460 = vst [vmem:[%s2459] sm:$0xff] %v2219
    %2461 = vst [vmem:[%s2459 + $0x8] sm:$0xff] %v2220
    %s2462 = scalar_lea.vmem [#allocation23], 16
    %2463 = vst [vmem:[%s2462] sm:$0xff] %v2215
    %2464 = vst [vmem:[%s2462 + $0x8] sm:$0xff] %v2216
    %2465 = vst [vmem:[#allocation19] sm:$0xff] %v2219
    %2466 = vst [vmem:[#allocation19 + $0x8] sm:$0xff] %v2220
    %2467 = vst [vmem:[#allocation20] sm:$0xff] %v2457
    %2468 = vst [vmem:[#allocation20 + $0x8] sm:$0xff] %v2458
    // Predicated region
    $region94: #{tpu_custom_call.1} parent=1 // pred_check
      _
    $region95: #{tpu_custom_call.1} parent=1 // pred_check_branch
      %2470 = sbr.rel (0) target = $region97
    $region96: #{tpu_custom_call.1} parent=1 // pred_region
      %s2472 = ssub.s32 256, 256
      %2473 = vsyncadd [#allocation4], %s2472
      %s2474 = sshll.u32 [#allocation19], 4
      %s2475 = int_to_ptr.vmem [resolvable:$true] %s2474
      %2480 = dma.vmem_to_hbm [thread:$0]  %s2475, 256, %s13, [#allocation4], 128, 128, 8
    $region97: #{tpu_custom_call.1} parent=1 // pred_fallthru
      _
    // Predicated region
    $region98: #{tpu_custom_call.1} parent=1 // pred_check
      _
    $region99: #{tpu_custom_call.1} parent=1 // pred_check_branch
      %2482 = sbr.rel (0) target = $region101
    $region100: #{tpu_custom_call.1} parent=1 // pred_region
      %s2484 = ssub.s32 256, 256
      %2485 = vsyncadd [#allocation21], %s2484
      %s2486 = sshll.u32 [#allocation20], 4
      %s2487 = int_to_ptr.vmem [resolvable:$true] %s2486
      %2492 = dma.vmem_to_hbm [thread:$0]  %s2487, 256, %s14, [#allocation21], 128, 128, 8
    $region101: #{tpu_custom_call.1} parent=1 // pred_fallthru
      _
    // Predicated region
    $region102: #{tpu_custom_call.1} parent=1 // pred_check
      _
    $region103: #{tpu_custom_call.1} parent=1 // pred_check_branch
      %2494 = sbr.rel (0) target = $region105
    $region104: #{tpu_custom_call.1} parent=1 // pred_region
      %s2496 = ssub.s32 512, 512
      %2497 = vsyncadd [#allocation21], %s2496
      %s2498 = sshll.u32 [#allocation22], 4
      %s2499 = int_to_ptr.vmem [resolvable:$true] %s2498
      %2504 = dma.vmem_to_hbm [thread:$0]  %s2499, 512, %s15, [#allocation21], 128, 128, 8
    $region105: #{tpu_custom_call.1} parent=1 // pred_fallthru
      _
    // Predicated region
    $region106: #{tpu_custom_call.1} parent=1 // pred_check
      _
    $region107: #{tpu_custom_call.1} parent=1 // pred_check_branch
      %2506 = sbr.rel (0) target = $region109
    $region108: #{tpu_custom_call.1} parent=1 // pred_region
      %s2508 = ssub.s32 512, 512
      %2509 = vsyncadd [#allocation24], %s2508
      %s2510 = sshll.u32 [#allocation23], 4
      %s2511 = int_to_ptr.vmem [resolvable:$true] %s2510
      %2516 = dma.vmem_to_hbm [thread:$0]  %s2511, 512, %s16, [#allocation24], 128, 128, 8
    $region109: #{tpu_custom_call.1} parent=1 // pred_fallthru
      _
    // Predicated region
    $region110: #{tpu_custom_call.1} parent=1 // pred_check
      _
    $region111: #{tpu_custom_call.1} parent=1 // pred_check_branch
      %2518 = sbr.rel (0) target = $region113
    $region112: #{tpu_custom_call.1} parent=1 // pred_region
      %2519 = dma.done [#allocation4], 256
    $region113: #{tpu_custom_call.1} parent=1 // pred_fallthru
      _
    // Predicated region
    $region114: #{tpu_custom_call.1} parent=1 // pred_check
      _
    $region115: #{tpu_custom_call.1} parent=1 // pred_check_branch
      %2521 = sbr.rel (0) target = $region117
    $region116: #{tpu_custom_call.1} parent=1 // pred_region
      %2522 = dma.done [#allocation21], 256
    $region117: #{tpu_custom_call.1} parent=1 // pred_fallthru
      _
    // Predicated region
    $region118: #{tpu_custom_call.1} parent=1 // pred_check
      _
    $region119: #{tpu_custom_call.1} parent=1 // pred_check_branch
      %2524 = sbr.rel (0) target = $region121
    $region120: #{tpu_custom_call.1} parent=1 // pred_region
      %2525 = dma.done [#allocation21], 512
    $region121: #{tpu_custom_call.1} parent=1 // pred_fallthru
      _
    // Predicated region
    $region122: #{tpu_custom_call.1} parent=1 // pred_check
      _
    $region123: #{tpu_custom_call.1} parent=1 // pred_check_branch
      %2527 = sbr.rel (0) target = $region125
    $region124: #{tpu_custom_call.1} parent=1 // pred_region
      %2528 = dma.done [#allocation24], 512
    $region125: #{tpu_custom_call.1} parent=1 // pred_fallthru
      _
    %2529 = vsyncpa [#allocation3], 1
    %2530 = vsyncpa [#allocation6], 1
    %2531 = vsyncpa [#allocation9], 1
    %2532 = vsyncpa [#allocation12], 1
    %2533 = vsyncpa [#allocation15], 1
    %2534 = vsyncpa [#allocation18], 1
    %2535 = vsyncpa [#allocation4], 1
    %2536 = vsyncpa [#allocation21], 1
    %2537 = vsyncpa [#allocation24], 1

</llo_original>
